<compile_context>
chip_gen: v6e
topology: v6e:2x2x1
jax: 0.10.0
libtpu: 0.0.40
codegen_flags: <defaults>
</compile_context>

<pallas_src>
import functools

import jax
import jax.numpy as jnp
from jax import lax
from jax.experimental import pallas as pl
from jax.experimental.pallas import tpu as pltpu


# ----------------------------- kernel ---------------------------------------


def _layernorm(x, w, b, eps=1e-5):
    # LayerNorm over last dim, biased variance (matches torch.nn.LayerNorm).
    mean = jnp.mean(x, axis=-1, keepdims=True)
    var = jnp.mean((x - mean) ** 2, axis=-1, keepdims=True)
    return (x - mean) * lax.rsqrt(var + eps) * w + b


def encoder_layer_kernel(
    x_ref,
    wqkv_ref, bqkv_ref,              # fused QKV projection (D, 3*H*dk), (1, 3*H*dk)
    wo_ref, bo_ref,                  # attention output linear
    ln1w_ref, ln1b_ref,              # LayerNorm 1
    w1_ref, b1_ref, w2_ref, b2_ref,  # feed-forward
    ln2w_ref, ln2b_ref,              # LayerNorm 2
    o_ref,
    ctx_ref,                         # VMEM scratch (block_b*S, H*dv) f32
    *, num_heads, dim_k, dim_v, block_b, seq_len,
):
    H, dk, dv = num_heads, dim_k, dim_v
    Bt, S = block_b, seq_len
    R = Bt * S
    Hk, Hv = H * dk, H * dv
    scale = 1.0 / (dk ** 0.5)
    cdt = wqkv_ref.dtype             # matmul compute dtype (bf16 or f32)

    D = x_ref.shape[-1]
    x_f32 = x_ref[...].reshape(R, D).astype(jnp.float32)   # residual copy (f32)

    # ---- fused QKV projection: one wide MXU matmul, f32 accumulation --------
    qkv = jnp.dot(x_f32.astype(cdt), wqkv_ref[...],
                  preferred_element_type=jnp.float32) + bqkv_ref[...]
    q_all = qkv[:, :Hk]
    k_all = qkv[:, Hk:2 * Hk]
    v_all = qkv[:, 2 * Hk:2 * Hk + Hv]

    # ---- attention: per (batch, head) scores + softmax; head contexts written
    #      to VMEM scratch at static lane offsets (no lane-dim concatenate) ----
    for b in range(Bt):
        r0 = b * S
        for h in range(H):
            qh = q_all[r0:r0 + S, h * dk:(h + 1) * dk].astype(cdt)
            kh = k_all[r0:r0 + S, h * dk:(h + 1) * dk].astype(cdt)
            vh = v_all[r0:r0 + S, h * dv:(h + 1) * dv].astype(cdt)
            # q @ k^T without materializing a transpose.
            s = lax.dot_general(qh, kh, (((1,), (1,)), ((), ())),
                                preferred_element_type=jnp.float32) * scale
            s = s - jnp.max(s, axis=-1, keepdims=True)
            p = jnp.exp(s)
            p = p * pl.reciprocal(jnp.sum(p, axis=-1, keepdims=True), approx=True)
            ctx_ref[r0:r0 + S, h * dv:(h + 1) * dv] = jnp.dot(
                p.astype(cdt), vh, preferred_element_type=jnp.float32)

    # ---- attention output projection + residual + LayerNorm 1 ----------------
    attn = jnp.dot(ctx_ref[...].astype(cdt), wo_ref[...],
                   preferred_element_type=jnp.float32) + bo_ref[...]
    y = _layernorm(x_f32 + attn, ln1w_ref[...], ln1b_ref[...])

    # ---- feed-forward: Linear -> ReLU -> Linear (dropout == identity) --------
    # TODO(synk): for production dim_ff (e.g. 4096) add an 'arbitrary' grid axis
    # over the ff dimension with a VMEM f32 accumulator (pl.when init/finalize)
    # instead of holding the full (rows, dim_ff) activation + both FFN weights.
    h1 = jnp.dot(y.astype(cdt), w1_ref[...],
                 preferred_element_type=jnp.float32) + b1_ref[...]
    h1 = jnp.maximum(h1, 0.0)
    ff = jnp.dot(h1.astype(cdt), w2_ref[...],
                 preferred_element_type=jnp.float32) + b2_ref[...]

    # ---- residual + LayerNorm 2 -----------------------------------------------
    out = _layernorm(y + ff, ln2w_ref[...], ln2b_ref[...])
    o_ref[...] = out.reshape(Bt, S, D).astype(o_ref.dtype)


# ----------------------------- wrapper ---------------------------------------


def transformer_encoder_layer(x, params, *, num_heads, dim_k, dim_v,
                              block_b=2, compute_dtype=jnp.bfloat16):
    B, S, D = x.shape
    H = num_heads
    assert B % block_b == 0, "batch must be divisible by block_b"

    # Fuse per-head (H, D, d) projection weights into (D, H*d), h-major columns,
    # and concatenate Q/K/V so the kernel does a single x @ Wqkv matmul.
    def fuse_w(w):
        return jnp.transpose(w, (1, 0, 2)).reshape(D, -1)

    def fuse_b(b):
        return b.reshape(1, -1)

    wqkv = jnp.concatenate(
        [fuse_w(params["wq"]), fuse_w(params["wk"]), fuse_w(params["wv"])],
        axis=1).astype(compute_dtype)
    bqkv = jnp.concatenate(
        [fuse_b(params["bq"]), fuse_b(params["bk"]), fuse_b(params["bv"])],
        axis=1).astype(jnp.float32)

    param_list = [
        wqkv, bqkv,
        params["wo"].astype(compute_dtype), params["bo"],
        params["ln1_w"], params["ln1_b"],
        params["w1"].astype(compute_dtype), params["b1"],
        params["w2"].astype(compute_dtype), params["b2"],
        params["ln2_w"], params["ln2_b"],
    ]

    # Weights use a constant index_map (resident across the whole grid).
    # For production weight sizes on v7x (64 MiB VMEM) also pass
    # pipeline_mode=pl.Buffered(1) so they are not needlessly double-buffered.
    def full_spec(a):
        nd = a.ndim
        return pl.BlockSpec(a.shape, lambda b, _nd=nd: (0,) * _nd)

    kernel = functools.partial(
        encoder_layer_kernel,
        num_heads=num_heads, dim_k=dim_k, dim_v=dim_v,
        block_b=block_b, seq_len=S)

    return pl.pallas_call(
        kernel,
        out_shape=jax.ShapeDtypeStruct((B, S, D), x.dtype),
        grid_spec=pltpu.PrefetchScalarGridSpec(
            num_scalar_prefetch=0,
            grid=(B // block_b,),
            in_specs=[pl.BlockSpec((block_b, S, D), lambda b: (b, 0, 0))]
            + [full_spec(p) for p in param_list],
            out_specs=pl.BlockSpec((block_b, S, D), lambda b: (b, 0, 0)),
            scratch_shapes=[pltpu.VMEM((block_b * S, H * dim_v), jnp.float32)],
        ),
        compiler_params=pltpu.CompilerParams(
            dimension_semantics=("parallel",),
            vmem_limit_bytes=32 * 1024 * 1024,
        ),
    )(x, *param_list)


# ----------------------------- reference (plain JAX, f32) ---------------------


def reference_forward(x, params, *, num_heads, dim_k):
    def ln(v, w, b, eps=1e-5):
        m = jnp.mean(v, axis=-1, keepdims=True)
        s = jnp.mean((v - m) ** 2, axis=-1, keepdims=True)
        return (v - m) / jnp.sqrt(s + eps) * w + b

    heads = []
    for h in range(num_heads):
        q = x @ params["wq"][h] + params["bq"][h]
        k = x @ params["wk"][h] + params["bk"][h]
        v = x @ params["wv"][h] + params["bv"][h]
        s = jnp.einsum("bqd,bkd->bqk", q, k) / (dim_k ** 0.5)
        p = jax.nn.softmax(s, axis=-1)
        heads.append(jnp.einsum("bqk,bkd->bqd", p, v))
    attn = jnp.concatenate(heads, axis=-1) @ params["wo"] + params["bo"]
    y = ln(x + attn, params["ln1_w"], params["ln1_b"])
    ff = jnp.maximum(y @ params["w1"] + params["b1"], 0.0) @ params["w2"] + params["b2"]
    return ln(y + ff, params["ln2_w"], params["ln2_b"])


# ----------------------------- setup / main -----------------------------------


def init_params(key, dim_model, num_heads, dim_k, dim_v, dim_ff):
    # Deterministic init mimicking torch.nn.Linear: U(-1/sqrt(fan_in), 1/sqrt(fan_in)).
    def linear(key, fan_in, shape):
        bound = 1.0 / (fan_in ** 0.5)
        return jax.random.uniform(key, shape, jnp.float32, -bound, bound)

    ks = jax.random.split(key, 12)
    return {
        "wq": linear(ks[0], dim_model, (num_heads, dim_model, dim_k)),
        "bq": linear(ks[1], dim_model, (num_heads, 1, dim_k)),
        "wk": linear(ks[2], dim_model, (num_heads, dim_model, dim_k)),
        "bk": linear(ks[3], dim_model, (num_heads, 1, dim_k)),
        "wv": linear(ks[4], dim_model, (num_heads, dim_model, dim_v)),
        "bv": linear(ks[5], dim_model, (num_heads, 1, dim_v)),
        "wo": linear(ks[6], num_heads * dim_v, (num_heads * dim_v, dim_model)),
        "bo": linear(ks[7], num_heads * dim_v, (1, dim_model)),
        "ln1_w": jnp.ones((1, dim_model), jnp.float32),
        "ln1_b": jnp.zeros((1, dim_model), jnp.float32),
        "w1": linear(ks[8], dim_model, (dim_model, dim_ff)),
        "b1": linear(ks[9], dim_model, (1, dim_ff)),
        "w2": linear(ks[10], dim_ff, (dim_ff, dim_model)),
        "b2": linear(ks[11], dim_ff, (1, dim_model)),
        "ln2_w": jnp.ones((1, dim_model), jnp.float32),
        "ln2_b": jnp.zeros((1, dim_model), jnp.float32),
    }


if __name__ == "__main__":
    # Small but lane-dense shapes: D and H*dk are multiples of 128 so every
    # matmul output / final store is unmasked; 2 grid steps (block_b=2).
    B, S = 4, 16
    dim_model, num_heads, dim_ff = 128, 4, 256
    dim_k = dim_v = dim_model // num_heads

    key = jax.random.PRNGKey(0)
    kx, kp = jax.random.split(key)
    x = jax.random.normal(kx, (B, S, dim_model), jnp.float32)
    params = init_params(kp, dim_model, num_heads, dim_k, dim_v, dim_ff)

    ref = reference_forward(x, params, num_heads=num_heads, dim_k=dim_k)

    # f32 MXU-operand path: tight check (only approx-reciprocal softmax drift).
    out_f32 = transformer_encoder_layer(
        x, params, num_heads=num_heads, dim_k=dim_k, dim_v=dim_v,
        block_b=2, compute_dtype=jnp.float32)
    out_f32 = jax.block_until_ready(out_f32)
    assert out_f32.shape == (B, S, dim_model)
    assert jnp.allclose(out_f32, ref, atol=5e-3, rtol=5e-3), "f32 mismatch vs reference"

    # bf16 MXU-operand path (v5e/v6e/v7x throughput): looser tolerance.
    out_bf16 = transformer_encoder_layer(
        x, params, num_heads=num_heads, dim_k=dim_k, dim_v=dim_v,
        block_b=2, compute_dtype=jnp.bfloat16)
    out_bf16 = jax.block_until_ready(out_bf16)
    assert out_bf16.shape == (B, S, dim_model)
    assert jnp.allclose(out_bf16, ref, atol=5e-2, rtol=5e-2), "bf16 mismatch vs reference"

    print("KERNEL_OK")
</pallas_src>

<mosaic_0001>
module attributes {stable_mosaic.version = 11 : i64} {
  func.func @encoder_layer_kernel(%arg0: i32, %arg1: memref<2x16x128xf32, #tpu.memory_space<vmem>>, %arg2: memref<128x384xf32, #tpu.memory_space<vmem>>, %arg3: memref<1x384xf32, #tpu.memory_space<vmem>>, %arg4: memref<128x128xf32, #tpu.memory_space<vmem>>, %arg5: memref<1x128xf32, #tpu.memory_space<vmem>>, %arg6: memref<1x128xf32, #tpu.memory_space<vmem>>, %arg7: memref<1x128xf32, #tpu.memory_space<vmem>>, %arg8: memref<128x256xf32, #tpu.memory_space<vmem>>, %arg9: memref<1x256xf32, #tpu.memory_space<vmem>>, %arg10: memref<256x128xf32, #tpu.memory_space<vmem>>, %arg11: memref<1x128xf32, #tpu.memory_space<vmem>>, %arg12: memref<1x128xf32, #tpu.memory_space<vmem>>, %arg13: memref<1x128xf32, #tpu.memory_space<vmem>>, %arg14: memref<2x16x128xf32, #tpu.memory_space<vmem>>, %arg15: memref<32x128xf32, #tpu.memory_space<vmem>>) attributes {dimension_semantics = [#tpu.dimension_semantics<parallel>], iteration_bounds = array<i64: 2>, scalar_prefetch = 0 : i64, scratch_operands = 1 : i64, tpu.core_type = #tpu.core_type<tc>, window_params = [{transform_indices = @transform_0, window_bounds = array<i64: 2, 16, 128>}, {pipeline_mode = #tpu.pipeline_mode<synchronous>, transform_indices = @transform_1, window_bounds = array<i64: 128, 384>}, {pipeline_mode = #tpu.pipeline_mode<synchronous>, transform_indices = @transform_2, window_bounds = array<i64: 1, 384>}, {pipeline_mode = #tpu.pipeline_mode<synchronous>, transform_indices = @transform_3, window_bounds = array<i64: 128, 128>}, {pipeline_mode = #tpu.pipeline_mode<synchronous>, transform_indices = @transform_4, window_bounds = array<i64: 1, 128>}, {pipeline_mode = #tpu.pipeline_mode<synchronous>, transform_indices = @transform_5, window_bounds = array<i64: 1, 128>}, {pipeline_mode = #tpu.pipeline_mode<synchronous>, transform_indices = @transform_6, window_bounds = array<i64: 1, 128>}, {pipeline_mode = #tpu.pipeline_mode<synchronous>, transform_indices = @transform_7, window_bounds = array<i64: 128, 256>}, {pipeline_mode = #tpu.pipeline_mode<synchronous>, transform_indices = @transform_8, window_bounds = array<i64: 1, 256>}, {pipeline_mode = #tpu.pipeline_mode<synchronous>, transform_indices = @transform_9, window_bounds = array<i64: 256, 128>}, {pipeline_mode = #tpu.pipeline_mode<synchronous>, transform_indices = @transform_10, window_bounds = array<i64: 1, 128>}, {pipeline_mode = #tpu.pipeline_mode<synchronous>, transform_indices = @transform_11, window_bounds = array<i64: 1, 128>}, {pipeline_mode = #tpu.pipeline_mode<synchronous>, transform_indices = @transform_12, window_bounds = array<i64: 1, 128>}, {transform_indices = @transform_13, window_bounds = array<i64: 2, 16, 128>}]} {
    %c0 = arith.constant 0 : index
    %c0_0 = arith.constant 0 : index
    %c0_1 = arith.constant 0 : index
    %0 = vector.load %arg1[%c0, %c0_0, %c0_1] : memref<2x16x128xf32, #tpu.memory_space<vmem>>, vector<2x16x128xf32>
    %1 = vector.shape_cast %0 : vector<2x16x128xf32> to vector<32x128xf32>
    %c0_2 = arith.constant 0 : index
    %c0_3 = arith.constant 0 : index
    %2 = vector.load %arg2[%c0_2, %c0_3] : memref<128x384xf32, #tpu.memory_space<vmem>>, vector<128x384xf32>
    %cst = arith.constant dense<0.000000e+00> : vector<32x384xf32>
    %3 = tpu.matmul %1, %2, %cst {dimension_numbers = #tpu.dot_dimension_numbers<[1], [0], [0], [1], [0, 0, 1, 1], [], []>} : vector<32x128xf32>, vector<128x384xf32>, vector<32x384xf32> -> vector<32x384xf32>
    %c0_4 = arith.constant 0 : index
    %c0_5 = arith.constant 0 : index
    %4 = vector.load %arg3[%c0_4, %c0_5] : memref<1x384xf32, #tpu.memory_space<vmem>>, vector<1x384xf32>
    %5 = vector.broadcast %4 : vector<1x384xf32> to vector<32x384xf32>
    %6 = arith.addf %3, %5 : vector<32x384xf32>
    %7 = vector.extract_strided_slice %6 {offsets = [0, 0], sizes = [32, 128], strides = [1, 1]} : vector<32x384xf32> to vector<32x128xf32>
    %8 = vector.extract_strided_slice %6 {offsets = [0, 128], sizes = [32, 128], strides = [1, 1]} : vector<32x384xf32> to vector<32x128xf32>
    %9 = vector.extract_strided_slice %6 {offsets = [0, 256], sizes = [32, 128], strides = [1, 1]} : vector<32x384xf32> to vector<32x128xf32>
    %10 = vector.extract_strided_slice %7 {offsets = [0, 0], sizes = [16, 32], strides = [1, 1]} : vector<32x128xf32> to vector<16x32xf32>
    %11 = vector.extract_strided_slice %8 {offsets = [0, 0], sizes = [16, 32], strides = [1, 1]} : vector<32x128xf32> to vector<16x32xf32>
    %12 = vector.extract_strided_slice %9 {offsets = [0, 0], sizes = [16, 32], strides = [1, 1]} : vector<32x128xf32> to vector<16x32xf32>
    %cst_6 = arith.constant dense<0.000000e+00> : vector<16x16xf32>
    %13 = tpu.matmul %10, %11, %cst_6 {dimension_numbers = #tpu.dot_dimension_numbers<[1], [1], [0], [0], [0, 0, 1, 0], [], []>} : vector<16x32xf32>, vector<16x32xf32>, vector<16x16xf32> -> vector<16x16xf32>
    %cst_7 = arith.constant 0.176776692 : f32
    %14 = vector.broadcast %cst_7 : f32 to vector<16x16xf32>
    %15 = arith.mulf %13, %14 : vector<16x16xf32>
    %cst_8 = arith.constant dense<0xFF800000> : vector<16xf32>
    %16 = vector.multi_reduction <maximumf>, %15, %cst_8 [1] : vector<16x16xf32> to vector<16xf32>
    %17 = vector.shape_cast %16 : vector<16xf32> to vector<16x1xf32>
    %18 = vector.broadcast %17 : vector<16x1xf32> to vector<16x16xf32>
    %19 = arith.subf %15, %18 : vector<16x16xf32>
    %20 = math.exp %19 : vector<16x16xf32>
    %cst_9 = arith.constant dense<0.000000e+00> : vector<16xf32>
    %21 = vector.multi_reduction <add>, %20, %cst_9 [1] : vector<16x16xf32> to vector<16xf32>
    %22 = vector.shape_cast %21 : vector<16xf32> to vector<16x1xf32>
    %23 = tpu.reciprocal %22 {approx = true} : vector<16x1xf32> -> vector<16x1xf32>
    %24 = vector.broadcast %23 : vector<16x1xf32> to vector<16x16xf32>
    %25 = arith.mulf %20, %24 : vector<16x16xf32>
    %cst_10 = arith.constant dense<0.000000e+00> : vector<16x32xf32>
    %26 = tpu.matmul %25, %12, %cst_10 {dimension_numbers = #tpu.dot_dimension_numbers<[1], [0], [0], [1], [0, 0, 1, 1], [], []>} : vector<16x16xf32>, vector<16x32xf32>, vector<16x32xf32> -> vector<16x32xf32>
    %c0_11 = arith.constant 0 : index
    %c0_12 = arith.constant 0 : index
    %27 = vector.load %arg15[%c0_11, %c0_12] : memref<32x128xf32, #tpu.memory_space<vmem>>, vector<16x32xf32>
    tpu.vector_store %arg15[%c0_11, %c0_12], %26 {strides = array<i32>} : memref<32x128xf32, #tpu.memory_space<vmem>>, vector<16x32xf32>,
    %28 = vector.extract_strided_slice %7 {offsets = [0, 32], sizes = [16, 32], strides = [1, 1]} : vector<32x128xf32> to vector<16x32xf32>
    %29 = vector.extract_strided_slice %8 {offsets = [0, 32], sizes = [16, 32], strides = [1, 1]} : vector<32x128xf32> to vector<16x32xf32>
    %30 = vector.extract_strided_slice %9 {offsets = [0, 32], sizes = [16, 32], strides = [1, 1]} : vector<32x128xf32> to vector<16x32xf32>
    %cst_13 = arith.constant dense<0.000000e+00> : vector<16x16xf32>
    %31 = tpu.matmul %28, %29, %cst_13 {dimension_numbers = #tpu.dot_dimension_numbers<[1], [1], [0], [0], [0, 0, 1, 0], [], []>} : vector<16x32xf32>, vector<16x32xf32>, vector<16x16xf32> -> vector<16x16xf32>
    %cst_14 = arith.constant 0.176776692 : f32
    %32 = vector.broadcast %cst_14 : f32 to vector<16x16xf32>
    %33 = arith.mulf %31, %32 : vector<16x16xf32>
    %cst_15 = arith.constant dense<0xFF800000> : vector<16xf32>
    %34 = vector.multi_reduction <maximumf>, %33, %cst_15 [1] : vector<16x16xf32> to vector<16xf32>
    %35 = vector.shape_cast %34 : vector<16xf32> to vector<16x1xf32>
    %36 = vector.broadcast %35 : vector<16x1xf32> to vector<16x16xf32>
    %37 = arith.subf %33, %36 : vector<16x16xf32>
    %38 = math.exp %37 : vector<16x16xf32>
    %cst_16 = arith.constant dense<0.000000e+00> : vector<16xf32>
    %39 = vector.multi_reduction <add>, %38, %cst_16 [1] : vector<16x16xf32> to vector<16xf32>
    %40 = vector.shape_cast %39 : vector<16xf32> to vector<16x1xf32>
    %41 = tpu.reciprocal %40 {approx = true} : vector<16x1xf32> -> vector<16x1xf32>
    %42 = vector.broadcast %41 : vector<16x1xf32> to vector<16x16xf32>
    %43 = arith.mulf %38, %42 : vector<16x16xf32>
    %cst_17 = arith.constant dense<0.000000e+00> : vector<16x32xf32>
    %44 = tpu.matmul %43, %30, %cst_17 {dimension_numbers = #tpu.dot_dimension_numbers<[1], [0], [0], [1], [0, 0, 1, 1], [], []>} : vector<16x16xf32>, vector<16x32xf32>, vector<16x32xf32> -> vector<16x32xf32>
    %c0_18 = arith.constant 0 : index
    %c32 = arith.constant 32 : index
    %45 = vector.load %arg15[%c0_18, %c32] : memref<32x128xf32, #tpu.memory_space<vmem>>, vector<16x32xf32>
    tpu.vector_store %arg15[%c0_18, %c32], %44 {strides = array<i32>} : memref<32x128xf32, #tpu.memory_space<vmem>>, vector<16x32xf32>,
    %46 = vector.extract_strided_slice %7 {offsets = [0, 64], sizes = [16, 32], strides = [1, 1]} : vector<32x128xf32> to vector<16x32xf32>
    %47 = vector.extract_strided_slice %8 {offsets = [0, 64], sizes = [16, 32], strides = [1, 1]} : vector<32x128xf32> to vector<16x32xf32>
    %48 = vector.extract_strided_slice %9 {offsets = [0, 64], sizes = [16, 32], strides = [1, 1]} : vector<32x128xf32> to vector<16x32xf32>
    %cst_19 = arith.constant dense<0.000000e+00> : vector<16x16xf32>
    %49 = tpu.matmul %46, %47, %cst_19 {dimension_numbers = #tpu.dot_dimension_numbers<[1], [1], [0], [0], [0, 0, 1, 0], [], []>} : vector<16x32xf32>, vector<16x32xf32>, vector<16x16xf32> -> vector<16x16xf32>
    %cst_20 = arith.constant 0.176776692 : f32
    %50 = vector.broadcast %cst_20 : f32 to vector<16x16xf32>
    %51 = arith.mulf %49, %50 : vector<16x16xf32>
    %cst_21 = arith.constant dense<0xFF800000> : vector<16xf32>
    %52 = vector.multi_reduction <maximumf>, %51, %cst_21 [1] : vector<16x16xf32> to vector<16xf32>
    %53 = vector.shape_cast %52 : vector<16xf32> to vector<16x1xf32>
    %54 = vector.broadcast %53 : vector<16x1xf32> to vector<16x16xf32>
    %55 = arith.subf %51, %54 : vector<16x16xf32>
    %56 = math.exp %55 : vector<16x16xf32>
    %cst_22 = arith.constant dense<0.000000e+00> : vector<16xf32>
    %57 = vector.multi_reduction <add>, %56, %cst_22 [1] : vector<16x16xf32> to vector<16xf32>
    %58 = vector.shape_cast %57 : vector<16xf32> to vector<16x1xf32>
    %59 = tpu.reciprocal %58 {approx = true} : vector<16x1xf32> -> vector<16x1xf32>
    %60 = vector.broadcast %59 : vector<16x1xf32> to vector<16x16xf32>
    %61 = arith.mulf %56, %60 : vector<16x16xf32>
    %cst_23 = arith.constant dense<0.000000e+00> : vector<16x32xf32>
    %62 = tpu.matmul %61, %48, %cst_23 {dimension_numbers = #tpu.dot_dimension_numbers<[1], [0], [0], [1], [0, 0, 1, 1], [], []>} : vector<16x16xf32>, vector<16x32xf32>, vector<16x32xf32> -> vector<16x32xf32>
    %c0_24 = arith.constant 0 : index
    %c64 = arith.constant 64 : index
    %63 = vector.load %arg15[%c0_24, %c64] : memref<32x128xf32, #tpu.memory_space<vmem>>, vector<16x32xf32>
    tpu.vector_store %arg15[%c0_24, %c64], %62 {strides = array<i32>} : memref<32x128xf32, #tpu.memory_space<vmem>>, vector<16x32xf32>,
    %64 = vector.extract_strided_slice %7 {offsets = [0, 96], sizes = [16, 32], strides = [1, 1]} : vector<32x128xf32> to vector<16x32xf32>
    %65 = vector.extract_strided_slice %8 {offsets = [0, 96], sizes = [16, 32], strides = [1, 1]} : vector<32x128xf32> to vector<16x32xf32>
    %66 = vector.extract_strided_slice %9 {offsets = [0, 96], sizes = [16, 32], strides = [1, 1]} : vector<32x128xf32> to vector<16x32xf32>
    %cst_25 = arith.constant dense<0.000000e+00> : vector<16x16xf32>
    %67 = tpu.matmul %64, %65, %cst_25 {dimension_numbers = #tpu.dot_dimension_numbers<[1], [1], [0], [0], [0, 0, 1, 0], [], []>} : vector<16x32xf32>, vector<16x32xf32>, vector<16x16xf32> -> vector<16x16xf32>
    %cst_26 = arith.constant 0.176776692 : f32
    %68 = vector.broadcast %cst_26 : f32 to vector<16x16xf32>
    %69 = arith.mulf %67, %68 : vector<16x16xf32>
    %cst_27 = arith.constant dense<0xFF800000> : vector<16xf32>
    %70 = vector.multi_reduction <maximumf>, %69, %cst_27 [1] : vector<16x16xf32> to vector<16xf32>
    %71 = vector.shape_cast %70 : vector<16xf32> to vector<16x1xf32>
    %72 = vector.broadcast %71 : vector<16x1xf32> to vector<16x16xf32>
    %73 = arith.subf %69, %72 : vector<16x16xf32>
    %74 = math.exp %73 : vector<16x16xf32>
    %cst_28 = arith.constant dense<0.000000e+00> : vector<16xf32>
    %75 = vector.multi_reduction <add>, %74, %cst_28 [1] : vector<16x16xf32> to vector<16xf32>
    %76 = vector.shape_cast %75 : vector<16xf32> to vector<16x1xf32>
    %77 = tpu.reciprocal %76 {approx = true} : vector<16x1xf32> -> vector<16x1xf32>
    %78 = vector.broadcast %77 : vector<16x1xf32> to vector<16x16xf32>
    %79 = arith.mulf %74, %78 : vector<16x16xf32>
    %cst_29 = arith.constant dense<0.000000e+00> : vector<16x32xf32>
    %80 = tpu.matmul %79, %66, %cst_29 {dimension_numbers = #tpu.dot_dimension_numbers<[1], [0], [0], [1], [0, 0, 1, 1], [], []>} : vector<16x16xf32>, vector<16x32xf32>, vector<16x32xf32> -> vector<16x32xf32>
    %c0_30 = arith.constant 0 : index
    %c96 = arith.constant 96 : index
    %81 = vector.load %arg15[%c0_30, %c96] : memref<32x128xf32, #tpu.memory_space<vmem>>, vector<16x32xf32>
    tpu.vector_store %arg15[%c0_30, %c96], %80 {strides = array<i32>} : memref<32x128xf32, #tpu.memory_space<vmem>>, vector<16x32xf32>,
    %82 = vector.extract_strided_slice %7 {offsets = [16, 0], sizes = [16, 32], strides = [1, 1]} : vector<32x128xf32> to vector<16x32xf32>
    %83 = vector.extract_strided_slice %8 {offsets = [16, 0], sizes = [16, 32], strides = [1, 1]} : vector<32x128xf32> to vector<16x32xf32>
    %84 = vector.extract_strided_slice %9 {offsets = [16, 0], sizes = [16, 32], strides = [1, 1]} : vector<32x128xf32> to vector<16x32xf32>
    %cst_31 = arith.constant dense<0.000000e+00> : vector<16x16xf32>
    %85 = tpu.matmul %82, %83, %cst_31 {dimension_numbers = #tpu.dot_dimension_numbers<[1], [1], [0], [0], [0, 0, 1, 0], [], []>} : vector<16x32xf32>, vector<16x32xf32>, vector<16x16xf32> -> vector<16x16xf32>
    %cst_32 = arith.constant 0.176776692 : f32
    %86 = vector.broadcast %cst_32 : f32 to vector<16x16xf32>
    %87 = arith.mulf %85, %86 : vector<16x16xf32>
    %cst_33 = arith.constant dense<0xFF800000> : vector<16xf32>
    %88 = vector.multi_reduction <maximumf>, %87, %cst_33 [1] : vector<16x16xf32> to vector<16xf32>
    %89 = vector.shape_cast %88 : vector<16xf32> to vector<16x1xf32>
    %90 = vector.broadcast %89 : vector<16x1xf32> to vector<16x16xf32>
    %91 = arith.subf %87, %90 : vector<16x16xf32>
    %92 = math.exp %91 : vector<16x16xf32>
    %cst_34 = arith.constant dense<0.000000e+00> : vector<16xf32>
    %93 = vector.multi_reduction <add>, %92, %cst_34 [1] : vector<16x16xf32> to vector<16xf32>
    %94 = vector.shape_cast %93 : vector<16xf32> to vector<16x1xf32>
    %95 = tpu.reciprocal %94 {approx = true} : vector<16x1xf32> -> vector<16x1xf32>
    %96 = vector.broadcast %95 : vector<16x1xf32> to vector<16x16xf32>
    %97 = arith.mulf %92, %96 : vector<16x16xf32>
    %cst_35 = arith.constant dense<0.000000e+00> : vector<16x32xf32>
    %98 = tpu.matmul %97, %84, %cst_35 {dimension_numbers = #tpu.dot_dimension_numbers<[1], [0], [0], [1], [0, 0, 1, 1], [], []>} : vector<16x16xf32>, vector<16x32xf32>, vector<16x32xf32> -> vector<16x32xf32>
    %c16 = arith.constant 16 : index
    %c0_36 = arith.constant 0 : index
    %99 = vector.load %arg15[%c16, %c0_36] : memref<32x128xf32, #tpu.memory_space<vmem>>, vector<16x32xf32>
    tpu.vector_store %arg15[%c16, %c0_36], %98 {strides = array<i32>} : memref<32x128xf32, #tpu.memory_space<vmem>>, vector<16x32xf32>,
    %100 = vector.extract_strided_slice %7 {offsets = [16, 32], sizes = [16, 32], strides = [1, 1]} : vector<32x128xf32> to vector<16x32xf32>
    %101 = vector.extract_strided_slice %8 {offsets = [16, 32], sizes = [16, 32], strides = [1, 1]} : vector<32x128xf32> to vector<16x32xf32>
    %102 = vector.extract_strided_slice %9 {offsets = [16, 32], sizes = [16, 32], strides = [1, 1]} : vector<32x128xf32> to vector<16x32xf32>
    %cst_37 = arith.constant dense<0.000000e+00> : vector<16x16xf32>
    %103 = tpu.matmul %100, %101, %cst_37 {dimension_numbers = #tpu.dot_dimension_numbers<[1], [1], [0], [0], [0, 0, 1, 0], [], []>} : vector<16x32xf32>, vector<16x32xf32>, vector<16x16xf32> -> vector<16x16xf32>
    %cst_38 = arith.constant 0.176776692 : f32
    %104 = vector.broadcast %cst_38 : f32 to vector<16x16xf32>
    %105 = arith.mulf %103, %104 : vector<16x16xf32>
    %cst_39 = arith.constant dense<0xFF800000> : vector<16xf32>
    %106 = vector.multi_reduction <maximumf>, %105, %cst_39 [1] : vector<16x16xf32> to vector<16xf32>
    %107 = vector.shape_cast %106 : vector<16xf32> to vector<16x1xf32>
    %108 = vector.broadcast %107 : vector<16x1xf32> to vector<16x16xf32>
    %109 = arith.subf %105, %108 : vector<16x16xf32>
    %110 = math.exp %109 : vector<16x16xf32>
    %cst_40 = arith.constant dense<0.000000e+00> : vector<16xf32>
    %111 = vector.multi_reduction <add>, %110, %cst_40 [1] : vector<16x16xf32> to vector<16xf32>
    %112 = vector.shape_cast %111 : vector<16xf32> to vector<16x1xf32>
    %113 = tpu.reciprocal %112 {approx = true} : vector<16x1xf32> -> vector<16x1xf32>
    %114 = vector.broadcast %113 : vector<16x1xf32> to vector<16x16xf32>
    %115 = arith.mulf %110, %114 : vector<16x16xf32>
    %cst_41 = arith.constant dense<0.000000e+00> : vector<16x32xf32>
    %116 = tpu.matmul %115, %102, %cst_41 {dimension_numbers = #tpu.dot_dimension_numbers<[1], [0], [0], [1], [0, 0, 1, 1], [], []>} : vector<16x16xf32>, vector<16x32xf32>, vector<16x32xf32> -> vector<16x32xf32>
    %c16_42 = arith.constant 16 : index
    %c32_43 = arith.constant 32 : index
    %117 = vector.load %arg15[%c16_42, %c32_43] : memref<32x128xf32, #tpu.memory_space<vmem>>, vector<16x32xf32>
    tpu.vector_store %arg15[%c16_42, %c32_43], %116 {strides = array<i32>} : memref<32x128xf32, #tpu.memory_space<vmem>>, vector<16x32xf32>,
    %118 = vector.extract_strided_slice %7 {offsets = [16, 64], sizes = [16, 32], strides = [1, 1]} : vector<32x128xf32> to vector<16x32xf32>
    %119 = vector.extract_strided_slice %8 {offsets = [16, 64], sizes = [16, 32], strides = [1, 1]} : vector<32x128xf32> to vector<16x32xf32>
    %120 = vector.extract_strided_slice %9 {offsets = [16, 64], sizes = [16, 32], strides = [1, 1]} : vector<32x128xf32> to vector<16x32xf32>
    %cst_44 = arith.constant dense<0.000000e+00> : vector<16x16xf32>
    %121 = tpu.matmul %118, %119, %cst_44 {dimension_numbers = #tpu.dot_dimension_numbers<[1], [1], [0], [0], [0, 0, 1, 0], [], []>} : vector<16x32xf32>, vector<16x32xf32>, vector<16x16xf32> -> vector<16x16xf32>
    %cst_45 = arith.constant 0.176776692 : f32
    %122 = vector.broadcast %cst_45 : f32 to vector<16x16xf32>
    %123 = arith.mulf %121, %122 : vector<16x16xf32>
    %cst_46 = arith.constant dense<0xFF800000> : vector<16xf32>
    %124 = vector.multi_reduction <maximumf>, %123, %cst_46 [1] : vector<16x16xf32> to vector<16xf32>
    %125 = vector.shape_cast %124 : vector<16xf32> to vector<16x1xf32>
    %126 = vector.broadcast %125 : vector<16x1xf32> to vector<16x16xf32>
    %127 = arith.subf %123, %126 : vector<16x16xf32>
    %128 = math.exp %127 : vector<16x16xf32>
    %cst_47 = arith.constant dense<0.000000e+00> : vector<16xf32>
    %129 = vector.multi_reduction <add>, %128, %cst_47 [1] : vector<16x16xf32> to vector<16xf32>
    %130 = vector.shape_cast %129 : vector<16xf32> to vector<16x1xf32>
    %131 = tpu.reciprocal %130 {approx = true} : vector<16x1xf32> -> vector<16x1xf32>
    %132 = vector.broadcast %131 : vector<16x1xf32> to vector<16x16xf32>
    %133 = arith.mulf %128, %132 : vector<16x16xf32>
    %cst_48 = arith.constant dense<0.000000e+00> : vector<16x32xf32>
    %134 = tpu.matmul %133, %120, %cst_48 {dimension_numbers = #tpu.dot_dimension_numbers<[1], [0], [0], [1], [0, 0, 1, 1], [], []>} : vector<16x16xf32>, vector<16x32xf32>, vector<16x32xf32> -> vector<16x32xf32>
    %c16_49 = arith.constant 16 : index
    %c64_50 = arith.constant 64 : index
    %135 = vector.load %arg15[%c16_49, %c64_50] : memref<32x128xf32, #tpu.memory_space<vmem>>, vector<16x32xf32>
    tpu.vector_store %arg15[%c16_49, %c64_50], %134 {strides = array<i32>} : memref<32x128xf32, #tpu.memory_space<vmem>>, vector<16x32xf32>,
    %136 = vector.extract_strided_slice %7 {offsets = [16, 96], sizes = [16, 32], strides = [1, 1]} : vector<32x128xf32> to vector<16x32xf32>
    %137 = vector.extract_strided_slice %8 {offsets = [16, 96], sizes = [16, 32], strides = [1, 1]} : vector<32x128xf32> to vector<16x32xf32>
    %138 = vector.extract_strided_slice %9 {offsets = [16, 96], sizes = [16, 32], strides = [1, 1]} : vector<32x128xf32> to vector<16x32xf32>
    %cst_51 = arith.constant dense<0.000000e+00> : vector<16x16xf32>
    %139 = tpu.matmul %136, %137, %cst_51 {dimension_numbers = #tpu.dot_dimension_numbers<[1], [1], [0], [0], [0, 0, 1, 0], [], []>} : vector<16x32xf32>, vector<16x32xf32>, vector<16x16xf32> -> vector<16x16xf32>
    %cst_52 = arith.constant 0.176776692 : f32
    %140 = vector.broadcast %cst_52 : f32 to vector<16x16xf32>
    %141 = arith.mulf %139, %140 : vector<16x16xf32>
    %cst_53 = arith.constant dense<0xFF800000> : vector<16xf32>
    %142 = vector.multi_reduction <maximumf>, %141, %cst_53 [1] : vector<16x16xf32> to vector<16xf32>
    %143 = vector.shape_cast %142 : vector<16xf32> to vector<16x1xf32>
    %144 = vector.broadcast %143 : vector<16x1xf32> to vector<16x16xf32>
    %145 = arith.subf %141, %144 : vector<16x16xf32>
    %146 = math.exp %145 : vector<16x16xf32>
    %cst_54 = arith.constant dense<0.000000e+00> : vector<16xf32>
    %147 = vector.multi_reduction <add>, %146, %cst_54 [1] : vector<16x16xf32> to vector<16xf32>
    %148 = vector.shape_cast %147 : vector<16xf32> to vector<16x1xf32>
    %149 = tpu.reciprocal %148 {approx = true} : vector<16x1xf32> -> vector<16x1xf32>
    %150 = vector.broadcast %149 : vector<16x1xf32> to vector<16x16xf32>
    %151 = arith.mulf %146, %150 : vector<16x16xf32>
    %cst_55 = arith.constant dense<0.000000e+00> : vector<16x32xf32>
    %152 = tpu.matmul %151, %138, %cst_55 {dimension_numbers = #tpu.dot_dimension_numbers<[1], [0], [0], [1], [0, 0, 1, 1], [], []>} : vector<16x16xf32>, vector<16x32xf32>, vector<16x32xf32> -> vector<16x32xf32>
    %c16_56 = arith.constant 16 : index
    %c96_57 = arith.constant 96 : index
    %153 = vector.load %arg15[%c16_56, %c96_57] : memref<32x128xf32, #tpu.memory_space<vmem>>, vector<16x32xf32>
    tpu.vector_store %arg15[%c16_56, %c96_57], %152 {strides = array<i32>} : memref<32x128xf32, #tpu.memory_space<vmem>>, vector<16x32xf32>,
    %c0_58 = arith.constant 0 : index
    %c0_59 = arith.constant 0 : index
    %154 = vector.load %arg15[%c0_58, %c0_59] : memref<32x128xf32, #tpu.memory_space<vmem>>, vector<32x128xf32>
    %c0_60 = arith.constant 0 : index
    %c0_61 = arith.constant 0 : index
    %155 = vector.load %arg4[%c0_60, %c0_61] : memref<128x128xf32, #tpu.memory_space<vmem>>, vector<128x128xf32>
    %cst_62 = arith.constant dense<0.000000e+00> : vector<32x128xf32>
    %156 = tpu.matmul %154, %155, %cst_62 {dimension_numbers = #tpu.dot_dimension_numbers<[1], [0], [0], [1], [0, 0, 1, 1], [], []>} : vector<32x128xf32>, vector<128x128xf32>, vector<32x128xf32> -> vector<32x128xf32>
    %c0_63 = arith.constant 0 : index
    %c0_64 = arith.constant 0 : index
    %157 = vector.load %arg5[%c0_63, %c0_64] : memref<1x128xf32, #tpu.memory_space<vmem>>, vector<1x128xf32>
    %158 = vector.broadcast %157 : vector<1x128xf32> to vector<32x128xf32>
    %159 = arith.addf %156, %158 : vector<32x128xf32>
    %160 = arith.addf %1, %159 : vector<32x128xf32>
    %c0_65 = arith.constant 0 : index
    %c0_66 = arith.constant 0 : index
    %161 = vector.load %arg6[%c0_65, %c0_66] : memref<1x128xf32, #tpu.memory_space<vmem>>, vector<1x128xf32>
    %c0_67 = arith.constant 0 : index
    %c0_68 = arith.constant 0 : index
    %162 = vector.load %arg7[%c0_67, %c0_68] : memref<1x128xf32, #tpu.memory_space<vmem>>, vector<1x128xf32>
    %cst_69 = arith.constant dense<0.000000e+00> : vector<32xf32>
    %163 = vector.multi_reduction <add>, %160, %cst_69 [1] : vector<32x128xf32> to vector<32xf32>
    %164 = vector.shape_cast %163 : vector<32xf32> to vector<32x1xf32>
    %cst_70 = arith.constant 1.280000e+02 : f32
    %165 = vector.broadcast %cst_70 : f32 to vector<32x1xf32>
    %166 = arith.divf %164, %165 : vector<32x1xf32>
    %167 = vector.broadcast %166 : vector<32x1xf32> to vector<32x128xf32>
    %168 = arith.subf %160, %167 : vector<32x128xf32>
    %169 = arith.mulf %168, %168 : vector<32x128xf32>
    %cst_71 = arith.constant dense<0.000000e+00> : vector<32xf32>
    %170 = vector.multi_reduction <add>, %169, %cst_71 [1] : vector<32x128xf32> to vector<32xf32>
    %171 = vector.shape_cast %170 : vector<32xf32> to vector<32x1xf32>
    %cst_72 = arith.constant 1.280000e+02 : f32
    %172 = vector.broadcast %cst_72 : f32 to vector<32x1xf32>
    %173 = arith.divf %171, %172 : vector<32x1xf32>
    %174 = vector.broadcast %166 : vector<32x1xf32> to vector<32x128xf32>
    %175 = arith.subf %160, %174 : vector<32x128xf32>
    %cst_73 = arith.constant 9.99999974E-6 : f32
    %176 = vector.broadcast %cst_73 : f32 to vector<32x1xf32>
    %177 = arith.addf %173, %176 : vector<32x1xf32>
    %178 = math.rsqrt %177 : vector<32x1xf32>
    %179 = vector.broadcast %178 : vector<32x1xf32> to vector<32x128xf32>
    %180 = arith.mulf %175, %179 : vector<32x128xf32>
    %181 = vector.broadcast %161 : vector<1x128xf32> to vector<32x128xf32>
    %182 = arith.mulf %180, %181 : vector<32x128xf32>
    %183 = vector.broadcast %162 : vector<1x128xf32> to vector<32x128xf32>
    %184 = arith.addf %182, %183 : vector<32x128xf32>
    %c0_74 = arith.constant 0 : index
    %c0_75 = arith.constant 0 : index
    %185 = vector.load %arg8[%c0_74, %c0_75] : memref<128x256xf32, #tpu.memory_space<vmem>>, vector<128x256xf32>
    %cst_76 = arith.constant dense<0.000000e+00> : vector<32x256xf32>
    %186 = tpu.matmul %184, %185, %cst_76 {dimension_numbers = #tpu.dot_dimension_numbers<[1], [0], [0], [1], [0, 0, 1, 1], [], []>} : vector<32x128xf32>, vector<128x256xf32>, vector<32x256xf32> -> vector<32x256xf32>
    %c0_77 = arith.constant 0 : index
    %c0_78 = arith.constant 0 : index
    %187 = vector.load %arg9[%c0_77, %c0_78] : memref<1x256xf32, #tpu.memory_space<vmem>>, vector<1x256xf32>
    %188 = vector.broadcast %187 : vector<1x256xf32> to vector<32x256xf32>
    %189 = arith.addf %186, %188 : vector<32x256xf32>
    %cst_79 = arith.constant 0.000000e+00 : f32
    %190 = vector.broadcast %cst_79 : f32 to vector<32x256xf32>
    %191 = arith.maximumf %189, %190 : vector<32x256xf32>
    %c0_80 = arith.constant 0 : index
    %c0_81 = arith.constant 0 : index
    %192 = vector.load %arg10[%c0_80, %c0_81] : memref<256x128xf32, #tpu.memory_space<vmem>>, vector<256x128xf32>
    %cst_82 = arith.constant dense<0.000000e+00> : vector<32x128xf32>
    %193 = tpu.matmul %191, %192, %cst_82 {dimension_numbers = #tpu.dot_dimension_numbers<[1], [0], [0], [1], [0, 0, 1, 1], [], []>} : vector<32x256xf32>, vector<256x128xf32>, vector<32x128xf32> -> vector<32x128xf32>
    %c0_83 = arith.constant 0 : index
    %c0_84 = arith.constant 0 : index
    %194 = vector.load %arg11[%c0_83, %c0_84] : memref<1x128xf32, #tpu.memory_space<vmem>>, vector<1x128xf32>
    %195 = vector.broadcast %194 : vector<1x128xf32> to vector<32x128xf32>
    %196 = arith.addf %193, %195 : vector<32x128xf32>
    %197 = arith.addf %184, %196 : vector<32x128xf32>
    %c0_85 = arith.constant 0 : index
    %c0_86 = arith.constant 0 : index
    %198 = vector.load %arg12[%c0_85, %c0_86] : memref<1x128xf32, #tpu.memory_space<vmem>>, vector<1x128xf32>
    %c0_87 = arith.constant 0 : index
    %c0_88 = arith.constant 0 : index
    %199 = vector.load %arg13[%c0_87, %c0_88] : memref<1x128xf32, #tpu.memory_space<vmem>>, vector<1x128xf32>
    %cst_89 = arith.constant dense<0.000000e+00> : vector<32xf32>
    %200 = vector.multi_reduction <add>, %197, %cst_89 [1] : vector<32x128xf32> to vector<32xf32>
    %201 = vector.shape_cast %200 : vector<32xf32> to vector<32x1xf32>
    %cst_90 = arith.constant 1.280000e+02 : f32
    %202 = vector.broadcast %cst_90 : f32 to vector<32x1xf32>
    %203 = arith.divf %201, %202 : vector<32x1xf32>
    %204 = vector.broadcast %203 : vector<32x1xf32> to vector<32x128xf32>
    %205 = arith.subf %197, %204 : vector<32x128xf32>
    %206 = arith.mulf %205, %205 : vector<32x128xf32>
    %cst_91 = arith.constant dense<0.000000e+00> : vector<32xf32>
    %207 = vector.multi_reduction <add>, %206, %cst_91 [1] : vector<32x128xf32> to vector<32xf32>
    %208 = vector.shape_cast %207 : vector<32xf32> to vector<32x1xf32>
    %cst_92 = arith.constant 1.280000e+02 : f32
    %209 = vector.broadcast %cst_92 : f32 to vector<32x1xf32>
    %210 = arith.divf %208, %209 : vector<32x1xf32>
    %211 = vector.broadcast %203 : vector<32x1xf32> to vector<32x128xf32>
    %212 = arith.subf %197, %211 : vector<32x128xf32>
    %cst_93 = arith.constant 9.99999974E-6 : f32
    %213 = vector.broadcast %cst_93 : f32 to vector<32x1xf32>
    %214 = arith.addf %210, %213 : vector<32x1xf32>
    %215 = math.rsqrt %214 : vector<32x1xf32>
    %216 = vector.broadcast %215 : vector<32x1xf32> to vector<32x128xf32>
    %217 = arith.mulf %212, %216 : vector<32x128xf32>
    %218 = vector.broadcast %198 : vector<1x128xf32> to vector<32x128xf32>
    %219 = arith.mulf %217, %218 : vector<32x128xf32>
    %220 = vector.broadcast %199 : vector<1x128xf32> to vector<32x128xf32>
    %221 = arith.addf %219, %220 : vector<32x128xf32>
    %222 = vector.shape_cast %221 : vector<32x128xf32> to vector<2x16x128xf32>
    %c0_94 = arith.constant 0 : index
    %c0_95 = arith.constant 0 : index
    %c0_96 = arith.constant 0 : index
    %223 = vector.load %arg14[%c0_94, %c0_95, %c0_96] : memref<2x16x128xf32, #tpu.memory_space<vmem>>, vector<2x16x128xf32>
    tpu.vector_store %arg14[%c0_94, %c0_95, %c0_96], %222 {strides = array<i32>} : memref<2x16x128xf32, #tpu.memory_space<vmem>>, vector<2x16x128xf32>,
    return
  }
  func.func @transform_0(%arg0: i32) -> (i32, i32, i32) {
    %c0_i32 = arith.constant 0 : i32
    %c0_i32_0 = arith.constant 0 : i32
    %c0_i32_1 = arith.constant 0 : i32
    return %arg0, %c0_i32, %c0_i32_0 : i32, i32, i32
  }
  func.func @transform_1(%arg0: i32) -> (i32, i32) {
    %c0_i32 = arith.constant 0 : i32
    %c0_i32_0 = arith.constant 0 : i32
    %c0_i32_1 = arith.constant 0 : i32
    return %c0_i32, %c0_i32_0 : i32, i32
  }
  func.func @transform_2(%arg0: i32) -> (i32, i32) {
    %c0_i32 = arith.constant 0 : i32
    %c0_i32_0 = arith.constant 0 : i32
    %c0_i32_1 = arith.constant 0 : i32
    return %c0_i32, %c0_i32_0 : i32, i32
  }
  func.func @transform_3(%arg0: i32) -> (i32, i32) {
    %c0_i32 = arith.constant 0 : i32
    %c0_i32_0 = arith.constant 0 : i32
    %c0_i32_1 = arith.constant 0 : i32
    return %c0_i32, %c0_i32_0 : i32, i32
  }
  func.func @transform_4(%arg0: i32) -> (i32, i32) {
    %c0_i32 = arith.constant 0 : i32
    %c0_i32_0 = arith.constant 0 : i32
    %c0_i32_1 = arith.constant 0 : i32
    return %c0_i32, %c0_i32_0 : i32, i32
  }
  func.func @transform_5(%arg0: i32) -> (i32, i32) {
    %c0_i32 = arith.constant 0 : i32
    %c0_i32_0 = arith.constant 0 : i32
    %c0_i32_1 = arith.constant 0 : i32
    return %c0_i32, %c0_i32_0 : i32, i32
  }
  func.func @transform_6(%arg0: i32) -> (i32, i32) {
    %c0_i32 = arith.constant 0 : i32
    %c0_i32_0 = arith.constant 0 : i32
    %c0_i32_1 = arith.constant 0 : i32
    return %c0_i32, %c0_i32_0 : i32, i32
  }
  func.func @transform_7(%arg0: i32) -> (i32, i32) {
    %c0_i32 = arith.constant 0 : i32
    %c0_i32_0 = arith.constant 0 : i32
    %c0_i32_1 = arith.constant 0 : i32
    return %c0_i32, %c0_i32_0 : i32, i32
  }
  func.func @transform_8(%arg0: i32) -> (i32, i32) {
    %c0_i32 = arith.constant 0 : i32
    %c0_i32_0 = arith.constant 0 : i32
    %c0_i32_1 = arith.constant 0 : i32
    return %c0_i32, %c0_i32_0 : i32, i32
  }
  func.func @transform_9(%arg0: i32) -> (i32, i32) {
    %c0_i32 = arith.constant 0 : i32
    %c0_i32_0 = arith.constant 0 : i32
    %c0_i32_1 = arith.constant 0 : i32
    return %c0_i32, %c0_i32_0 : i32, i32
  }
  func.func @transform_10(%arg0: i32) -> (i32, i32) {
    %c0_i32 = arith.constant 0 : i32
    %c0_i32_0 = arith.constant 0 : i32
    %c0_i32_1 = arith.constant 0 : i32
    return %c0_i32, %c0_i32_0 : i32, i32
  }
  func.func @transform_11(%arg0: i32) -> (i32, i32) {
    %c0_i32 = arith.constant 0 : i32
    %c0_i32_0 = arith.constant 0 : i32
    %c0_i32_1 = arith.constant 0 : i32
    return %c0_i32, %c0_i32_0 : i32, i32
  }
  func.func @transform_12(%arg0: i32) -> (i32, i32) {
    %c0_i32 = arith.constant 0 : i32
    %c0_i32_0 = arith.constant 0 : i32
    %c0_i32_1 = arith.constant 0 : i32
    return %c0_i32, %c0_i32_0 : i32, i32
  }
  func.func @transform_13(%arg0: i32) -> (i32, i32, i32) {
    %c0_i32 = arith.constant 0 : i32
    %c0_i32_0 = arith.constant 0 : i32
    %c0_i32_1 = arith.constant 0 : i32
    return %arg0, %c0_i32, %c0_i32_0 : i32, i32, i32
  }
}

</mosaic_0001>

<llo_original>
// kernel: tpu_custom_call.1
$region0: #{tpu_custom_call.1}
  #allocation0 [shape = 'u32[]', space=smem, size = 0x4, offset = 0x4, fixed_abs, tag = 'smem constant byte address 0x4 - core index']
  #allocation1 [shape = 'u32[144,128]{1,0:T(1,128)}', space=vmem, size = 0x12000, scoped, tag = 'internal scratch']
  #allocation2 [shape = 'f32[32,128]{1,0:T(8,128)}', space=vmem, size = 0x4000, scoped, tag = 'scratch operand']
  %s0 = inlined_call_operand.hbm [shape: f32[4,16,128], index: 0, kind: input, shape index: {}]
  %s1 = inlined_call_operand.hbm [shape: f32[128,384], index: 1, kind: input, shape index: {}]
  %s2 = inlined_call_operand.vmem [shape: f32[1,384], index: 2, kind: input, shape index: {}]
  %s3 = inlined_call_operand.hbm [shape: f32[128,128], index: 3, kind: input, shape index: {}]
  %s4 = inlined_call_operand.vmem [shape: f32[1,128], index: 4, kind: input, shape index: {}]
  %s5 = inlined_call_operand.vmem [shape: f32[1,128], index: 5, kind: input, shape index: {}]
  %s6 = inlined_call_operand.vmem [shape: f32[1,128], index: 6, kind: input, shape index: {}]
  %s7 = inlined_call_operand.hbm [shape: f32[128,256], index: 7, kind: input, shape index: {}]
  %s8 = inlined_call_operand.vmem [shape: f32[1,256], index: 8, kind: input, shape index: {}]
  %s9 = inlined_call_operand.hbm [shape: f32[256,128], index: 9, kind: input, shape index: {}]
  %s10 = inlined_call_operand.vmem [shape: f32[1,128], index: 10, kind: input, shape index: {}]
  %s11 = inlined_call_operand.vmem [shape: f32[1,128], index: 11, kind: input, shape index: {}]
  %s12 = inlined_call_operand.vmem [shape: f32[1,128], index: 12, kind: input, shape index: {}]
  %s13 = inlined_call_operand.hbm [shape: f32[4,16,128], index: 13, kind: output, shape index: {}]
  %s14 = sld [smem:[#allocation0]]
  $region105: #{tpu_custom_call.1} parent=0
    _
  %s16 = ssub.s32 1, %s14
  %s17 = scalar_select 0, %s16, %s14
  $region1: #{tpu_custom_call.1} parent=0
    #allocation3 [shape = 'u8[32768]{0}', space=vmem, size = 0x8000, scoped, tag = 'input window, operand 0']
    #allocation4 [shape = 's32[2]{0}', space=sflag, size = 0x8, scoped, tag = 'scoped memory for tpu_custom_call.1']
    #allocation5 [shape = 's32[2]{0}', space=sflag, size = 0x8, scoped, tag = 'scoped memory for tpu_custom_call.1']
    #allocation6 [shape = 'u8[196608]{0}', space=vmem, size = 0x30000, scoped, tag = 'input window, operand 1, single buffered']
    #allocation7 [shape = 's32[1]{0}', space=sflag, size = 0x4, scoped, tag = 'scoped memory for tpu_custom_call.1']
    #allocation8 [shape = 'u8[65536]{0}', space=vmem, size = 0x10000, scoped, tag = 'input window, operand 3, single buffered']
    #allocation9 [shape = 'u8[131072]{0}', space=vmem, size = 0x20000, scoped, tag = 'input window, operand 7, single buffered']
    #allocation10 [shape = 's32[1]{0}', space=sflag, size = 0x4, scoped, tag = 'scoped memory for tpu_custom_call.1']
    #allocation11 [shape = 'u8[131072]{0}', space=vmem, size = 0x20000, scoped, tag = 'input window, operand 9, single buffered']
    #allocation12 [shape = 'u8[32768]{0}', space=vmem, size = 0x8000, scoped, tag = 'output window, operand 0']
    %18 = vsyncpa [#allocation4], 0
    %s19 = scalar_lea.sflag [#allocation4], 1
    %20 = vsyncpa %s19, 0
    %21 = vsyncpa [#allocation7], 0
    %22 = vsyncpa [#allocation10], 0
    %23 = vsyncpa [#allocation5], 0
    %s24 = scalar_lea.sflag [#allocation5], 1
    %25 = vsyncpa %s24, 0
    loop: start=0, step=1, limit=4
    $region2: #{tpu_custom_call.1} parent=1 // loop_pre_header
      _
    $region3: #{tpu_custom_call.1} parent=1 // loop_header
      %s27 = sphi 0, %s31
      %p28 = scmp.ge.s32.totalorder %s27, 4
      %s37 = sphi 0, %s39
      %s40 = sphi 0, %s37
      %s41 = sphi 0, %s40
      %s57 = sphi 0, %s41
      %s61 = sphi 0, %s61
      %s63 = sphi 0, %s61
      %s64 = sphi 0, %s63
      %s78 = sphi 0, %s64
      %s82 = sphi 0, %s82
      %s84 = sphi 0, %s82
      %s85 = sphi 0, %s84
      %s99 = sphi 0, %s85
      %s103 = sphi 0, %s103
      %s105 = sphi 0, %s103
      %s106 = sphi 0, %s105
      %s120 = sphi 0, %s106
      %s124 = sphi 0, %s124
      %s126 = sphi 0, %s124
      %s127 = sphi 0, %s126
      %s141 = sphi 0, %s127
      %s145 = sphi 0, %s145
      %s147 = sphi 0, %s145
      %s148 = sphi 0, %s147
      %s162 = sphi 0, %s148
      %s166 = sphi 0, %s166
      %s168 = sphi 0, %s166
      %s169 = sphi 0, %s168
      %s183 = sphi 0, %s169
      %s187 = sphi 0, %s187
      %s189 = sphi 0, %s187
      %s190 = sphi 0, %s189
      %s204 = sphi 0, %s190
      %s208 = sphi 0, %s208
      %s210 = sphi 0, %s208
      %s211 = sphi 0, %s210
      %s225 = sphi 0, %s211
      %s229 = sphi 0, %s229
      %s231 = sphi 0, %s229
      %s232 = sphi 0, %s231
      %s246 = sphi 0, %s232
      %s250 = sphi 0, %s250
      %s252 = sphi 0, %s250
      %s253 = sphi 0, %s252
      %s267 = sphi 0, %s253
      %s271 = sphi 0, %s271
      %s273 = sphi 0, %s271
      %s274 = sphi 0, %s273
      %s288 = sphi 0, %s274
      %s292 = sphi 0, %s292
      %s294 = sphi 0, %s292
      %s295 = sphi 0, %s294
      %s309 = sphi 0, %s295
      %s315 = sphi 0, %s317
      %s318 = sphi 0, %s315
      %s319 = sphi 0, %s318
      %s335 = sphi 0, %s319
    $region4: #{tpu_custom_call.1} parent=1 // loop_header_branch
      %30 = sbr.rel (%p28) target = $region8
    $region5: #{tpu_custom_call.1} parent=1 // loop_body
      %s32 = ssub.s32 %s27, 1
      %s33 = ssub.s32 %s27, 2
      %s34 = sadd.s32 %s27, 1
      %s35 = ssub.s32 %s27, %s34
      %p36 = scmp.eq.s32.totalorder %s35, 0
      %s38 = sadd.s32 %s37, 1
      %s39 = scalar_select %p36, %s37, %s38
      %p42 = pneg %p36
      %p43 = scmp.eq.s32.totalorder %s27, 1
      %p44 = por %p42, %p43
      %p45 = scmp.ne.s32.totalorder %s37, %s40
      %p46 = scmp.eq.s32.totalorder %s27, 0
      %p47 = por %p45, %p46
      %p48 = scmp.ne.s32.totalorder %s37, %s40
      %p49 = scmp.eq.s32.totalorder %s32, 1
      %p50 = por %p48, %p49
      %p51 = scmp.ne.s32.totalorder %s40, %s41
      %p52 = scmp.eq.s32.totalorder %s32, 0
      %p53 = por %p51, %p52
      %p54 = scmp.ne.s32.totalorder %s40, %s41
      %p55 = scmp.eq.s32.totalorder %s33, 1
      %p56 = por %p54, %p55
      %p58 = scmp.ne.s32.totalorder %s41, %s57
      %p59 = scmp.eq.s32.totalorder %s33, 0
      %p60 = por %p58, %p59
      %s62 = sadd.s32 %s61, 1
      %p65 = scmp.eq.s32.totalorder %s27, 1
      %p66 = scmp.ne.s32.totalorder %s61, %s63
      %p67 = scmp.eq.s32.totalorder %s27, 0
      %p68 = por %p66, %p67
      %p69 = scmp.ne.s32.totalorder %s61, %s63
      %p70 = scmp.eq.s32.totalorder %s32, 1
      %p71 = por %p69, %p70
      %p72 = scmp.ne.s32.totalorder %s63, %s64
      %p73 = scmp.eq.s32.totalorder %s32, 0
      %p74 = por %p72, %p73
      %p75 = scmp.ne.s32.totalorder %s63, %s64
      %p76 = scmp.eq.s32.totalorder %s33, 1
      %p77 = por %p75, %p76
      %p79 = scmp.ne.s32.totalorder %s64, %s78
      %p80 = scmp.eq.s32.totalorder %s33, 0
      %p81 = por %p79, %p80
      %s83 = sadd.s32 %s82, 1
      %p86 = scmp.eq.s32.totalorder %s27, 1
      %p87 = scmp.ne.s32.totalorder %s82, %s84
      %p88 = scmp.eq.s32.totalorder %s27, 0
      %p89 = por %p87, %p88
      %p90 = scmp.ne.s32.totalorder %s82, %s84
      %p91 = scmp.eq.s32.totalorder %s32, 1
      %p92 = por %p90, %p91
      %p93 = scmp.ne.s32.totalorder %s84, %s85
      %p94 = scmp.eq.s32.totalorder %s32, 0
      %p95 = por %p93, %p94
      %p96 = scmp.ne.s32.totalorder %s84, %s85
      %p97 = scmp.eq.s32.totalorder %s33, 1
      %p98 = por %p96, %p97
      %p100 = scmp.ne.s32.totalorder %s85, %s99
      %p101 = scmp.eq.s32.totalorder %s33, 0
      %p102 = por %p100, %p101
      %s104 = sadd.s32 %s103, 1
      %p107 = scmp.eq.s32.totalorder %s27, 1
      %p108 = scmp.ne.s32.totalorder %s103, %s105
      %p109 = scmp.eq.s32.totalorder %s27, 0
      %p110 = por %p108, %p109
      %p111 = scmp.ne.s32.totalorder %s103, %s105
      %p112 = scmp.eq.s32.totalorder %s32, 1
      %p113 = por %p111, %p112
      %p114 = scmp.ne.s32.totalorder %s105, %s106
      %p115 = scmp.eq.s32.totalorder %s32, 0
      %p116 = por %p114, %p115
      %p117 = scmp.ne.s32.totalorder %s105, %s106
      %p118 = scmp.eq.s32.totalorder %s33, 1
      %p119 = por %p117, %p118
      %p121 = scmp.ne.s32.totalorder %s106, %s120
      %p122 = scmp.eq.s32.totalorder %s33, 0
      %p123 = por %p121, %p122
      %s125 = sadd.s32 %s124, 1
      %p128 = scmp.eq.s32.totalorder %s27, 1
      %p129 = scmp.ne.s32.totalorder %s124, %s126
      %p130 = scmp.eq.s32.totalorder %s27, 0
      %p131 = por %p129, %p130
      %p132 = scmp.ne.s32.totalorder %s124, %s126
      %p133 = scmp.eq.s32.totalorder %s32, 1
      %p134 = por %p132, %p133
      %p135 = scmp.ne.s32.totalorder %s126, %s127
      %p136 = scmp.eq.s32.totalorder %s32, 0
      %p137 = por %p135, %p136
      %p138 = scmp.ne.s32.totalorder %s126, %s127
      %p139 = scmp.eq.s32.totalorder %s33, 1
      %p140 = por %p138, %p139
      %p142 = scmp.ne.s32.totalorder %s127, %s141
      %p143 = scmp.eq.s32.totalorder %s33, 0
      %p144 = por %p142, %p143
      %s146 = sadd.s32 %s145, 1
      %p149 = scmp.eq.s32.totalorder %s27, 1
      %p150 = scmp.ne.s32.totalorder %s145, %s147
      %p151 = scmp.eq.s32.totalorder %s27, 0
      %p152 = por %p150, %p151
      %p153 = scmp.ne.s32.totalorder %s145, %s147
      %p154 = scmp.eq.s32.totalorder %s32, 1
      %p155 = por %p153, %p154
      %p156 = scmp.ne.s32.totalorder %s147, %s148
      %p157 = scmp.eq.s32.totalorder %s32, 0
      %p158 = por %p156, %p157
      %p159 = scmp.ne.s32.totalorder %s147, %s148
      %p160 = scmp.eq.s32.totalorder %s33, 1
      %p161 = por %p159, %p160
      %p163 = scmp.ne.s32.totalorder %s148, %s162
      %p164 = scmp.eq.s32.totalorder %s33, 0
      %p165 = por %p163, %p164
      %s167 = sadd.s32 %s166, 1
      %p170 = scmp.eq.s32.totalorder %s27, 1
      %p171 = scmp.ne.s32.totalorder %s166, %s168
      %p172 = scmp.eq.s32.totalorder %s27, 0
      %p173 = por %p171, %p172
      %p174 = scmp.ne.s32.totalorder %s166, %s168
      %p175 = scmp.eq.s32.totalorder %s32, 1
      %p176 = por %p174, %p175
      %p177 = scmp.ne.s32.totalorder %s168, %s169
      %p178 = scmp.eq.s32.totalorder %s32, 0
      %p179 = por %p177, %p178
      %p180 = scmp.ne.s32.totalorder %s168, %s169
      %p181 = scmp.eq.s32.totalorder %s33, 1
      %p182 = por %p180, %p181
      %p184 = scmp.ne.s32.totalorder %s169, %s183
      %p185 = scmp.eq.s32.totalorder %s33, 0
      %p186 = por %p184, %p185
      %s188 = sadd.s32 %s187, 1
      %p191 = scmp.eq.s32.totalorder %s27, 1
      %p192 = scmp.ne.s32.totalorder %s187, %s189
      %p193 = scmp.eq.s32.totalorder %s27, 0
      %p194 = por %p192, %p193
      %p195 = scmp.ne.s32.totalorder %s187, %s189
      %p196 = scmp.eq.s32.totalorder %s32, 1
      %p197 = por %p195, %p196
      %p198 = scmp.ne.s32.totalorder %s189, %s190
      %p199 = scmp.eq.s32.totalorder %s32, 0
      %p200 = por %p198, %p199
      %p201 = scmp.ne.s32.totalorder %s189, %s190
      %p202 = scmp.eq.s32.totalorder %s33, 1
      %p203 = por %p201, %p202
      %p205 = scmp.ne.s32.totalorder %s190, %s204
      %p206 = scmp.eq.s32.totalorder %s33, 0
      %p207 = por %p205, %p206
      %s209 = sadd.s32 %s208, 1
      %p212 = scmp.eq.s32.totalorder %s27, 1
      %p213 = scmp.ne.s32.totalorder %s208, %s210
      %p214 = scmp.eq.s32.totalorder %s27, 0
      %p215 = por %p213, %p214
      %p216 = scmp.ne.s32.totalorder %s208, %s210
      %p217 = scmp.eq.s32.totalorder %s32, 1
      %p218 = por %p216, %p217
      %p219 = scmp.ne.s32.totalorder %s210, %s211
      %p220 = scmp.eq.s32.totalorder %s32, 0
      %p221 = por %p219, %p220
      %p222 = scmp.ne.s32.totalorder %s210, %s211
      %p223 = scmp.eq.s32.totalorder %s33, 1
      %p224 = por %p222, %p223
      %p226 = scmp.ne.s32.totalorder %s211, %s225
      %p227 = scmp.eq.s32.totalorder %s33, 0
      %p228 = por %p226, %p227
      %s230 = sadd.s32 %s229, 1
      %p233 = scmp.eq.s32.totalorder %s27, 1
      %p234 = scmp.ne.s32.totalorder %s229, %s231
      %p235 = scmp.eq.s32.totalorder %s27, 0
      %p236 = por %p234, %p235
      %p237 = scmp.ne.s32.totalorder %s229, %s231
      %p238 = scmp.eq.s32.totalorder %s32, 1
      %p239 = por %p237, %p238
      %p240 = scmp.ne.s32.totalorder %s231, %s232
      %p241 = scmp.eq.s32.totalorder %s32, 0
      %p242 = por %p240, %p241
      %p243 = scmp.ne.s32.totalorder %s231, %s232
      %p244 = scmp.eq.s32.totalorder %s33, 1
      %p245 = por %p243, %p244
      %p247 = scmp.ne.s32.totalorder %s232, %s246
      %p248 = scmp.eq.s32.totalorder %s33, 0
      %p249 = por %p247, %p248
      %s251 = sadd.s32 %s250, 1
      %p254 = scmp.eq.s32.totalorder %s27, 1
      %p255 = scmp.ne.s32.totalorder %s250, %s252
      %p256 = scmp.eq.s32.totalorder %s27, 0
      %p257 = por %p255, %p256
      %p258 = scmp.ne.s32.totalorder %s250, %s252
      %p259 = scmp.eq.s32.totalorder %s32, 1
      %p260 = por %p258, %p259
      %p261 = scmp.ne.s32.totalorder %s252, %s253
      %p262 = scmp.eq.s32.totalorder %s32, 0
      %p263 = por %p261, %p262
      %p264 = scmp.ne.s32.totalorder %s252, %s253
      %p265 = scmp.eq.s32.totalorder %s33, 1
      %p266 = por %p264, %p265
      %p268 = scmp.ne.s32.totalorder %s253, %s267
      %p269 = scmp.eq.s32.totalorder %s33, 0
      %p270 = por %p268, %p269
      %s272 = sadd.s32 %s271, 1
      %p275 = scmp.eq.s32.totalorder %s27, 1
      %p276 = scmp.ne.s32.totalorder %s271, %s273
      %p277 = scmp.eq.s32.totalorder %s27, 0
      %p278 = por %p276, %p277
      %p279 = scmp.ne.s32.totalorder %s271, %s273
      %p280 = scmp.eq.s32.totalorder %s32, 1
      %p281 = por %p279, %p280
      %p282 = scmp.ne.s32.totalorder %s273, %s274
      %p283 = scmp.eq.s32.totalorder %s32, 0
      %p284 = por %p282, %p283
      %p285 = scmp.ne.s32.totalorder %s273, %s274
      %p286 = scmp.eq.s32.totalorder %s33, 1
      %p287 = por %p285, %p286
      %p289 = scmp.ne.s32.totalorder %s274, %s288
      %p290 = scmp.eq.s32.totalorder %s33, 0
      %p291 = por %p289, %p290
      %s293 = sadd.s32 %s292, 1
      %p296 = scmp.eq.s32.totalorder %s27, 1
      %p297 = scmp.ne.s32.totalorder %s292, %s294
      %p298 = scmp.eq.s32.totalorder %s27, 0
      %p299 = por %p297, %p298
      %p300 = scmp.ne.s32.totalorder %s292, %s294
      %p301 = scmp.eq.s32.totalorder %s32, 1
      %p302 = por %p300, %p301
      %p303 = scmp.ne.s32.totalorder %s294, %s295
      %p304 = scmp.eq.s32.totalorder %s32, 0
      %p305 = por %p303, %p304
      %p306 = scmp.ne.s32.totalorder %s294, %s295
      %p307 = scmp.eq.s32.totalorder %s33, 1
      %p308 = por %p306, %p307
      %p310 = scmp.ne.s32.totalorder %s295, %s309
      %p311 = scmp.eq.s32.totalorder %s33, 0
      %p312 = por %p310, %p311
      %s313 = ssub.s32 %s27, %s34
      %p314 = scmp.eq.s32.totalorder %s313, 0
      %s316 = sadd.s32 %s315, 1
      %s317 = scalar_select %p314, %s315, %s316
      %p320 = pneg %p314
      %p321 = scmp.eq.s32.totalorder %s27, 1
      %p322 = por %p320, %p321
      %p323 = scmp.ne.s32.totalorder %s315, %s318
      %p324 = scmp.eq.s32.totalorder %s27, 0
      %p325 = por %p323, %p324
      %p326 = scmp.ne.s32.totalorder %s315, %s318
      %p327 = scmp.eq.s32.totalorder %s32, 1
      %p328 = por %p326, %p327
      %p329 = scmp.ne.s32.totalorder %s318, %s319
      %p330 = scmp.eq.s32.totalorder %s32, 0
      %p331 = por %p329, %p330
      %p332 = scmp.ne.s32.totalorder %s318, %s319
      %p333 = scmp.eq.s32.totalorder %s33, 1
      %p334 = por %p332, %p333
      %p336 = scmp.ne.s32.totalorder %s319, %s335
      %p337 = scmp.eq.s32.totalorder %s33, 0
      %p338 = por %p336, %p337
      %p339 = scmp.le.s32.totalorder 1, %s27
      %p340 = scmp.lt.s32.totalorder %s27, 3
      %p341 = pnand %p339, %p340
      %p342 = pneg %p341
      // Predicated region
      $region9: #{tpu_custom_call.1} parent=5 // pred_check
        _
      $region10: #{tpu_custom_call.1} parent=5 // pred_check_branch
        %344 = sbr.rel (%p341) target = $region12
      $region11: #{tpu_custom_call.1} parent=5 // pred_region
        %s345 = ssub.s32 %s27, 1
        // Predicated region
        $region13: #{tpu_custom_call.1} parent=11 // pred_check
          %p346 = pneg %p74
        $region14: #{tpu_custom_call.1} parent=11 // pred_check_branch
          %348 = sbr.rel (%p346) target = $region16
        $region15: #{tpu_custom_call.1} parent=11 // pred_region
          %s350 = ssub.s32 6144, 6144
          %351 = vsyncadd [#allocation7], %s350
          %s352 = sshll.u32 [#allocation6], 4
          %s353 = int_to_ptr.vmem [resolvable:$true] %s352
          %358 = dma.hbm_to_vmem [thread:$0]  %s1, 6144, %s353, [#allocation7], 384, 384, 24
        $region16: #{tpu_custom_call.1} parent=11 // pred_fallthru
          _
        // Predicated region
        $region17: #{tpu_custom_call.1} parent=11 // pred_check
          %p359 = pneg %p95
        $region18: #{tpu_custom_call.1} parent=11 // pred_check_branch
          %361 = sbr.rel (%p359) target = $region20
        $region19: #{tpu_custom_call.1} parent=11 // pred_region
          _
        $region20: #{tpu_custom_call.1} parent=11 // pred_fallthru
          _
        // Predicated region
        $region21: #{tpu_custom_call.1} parent=11 // pred_check
          %p362 = pneg %p116
        $region22: #{tpu_custom_call.1} parent=11 // pred_check_branch
          %364 = sbr.rel (%p362) target = $region24
        $region23: #{tpu_custom_call.1} parent=11 // pred_region
          %s366 = ssub.s32 2048, 2048
          %367 = vsyncadd [#allocation7], %s366
          %s368 = sshll.u32 [#allocation8], 4
          %s369 = int_to_ptr.vmem [resolvable:$true] %s368
          %374 = dma.hbm_to_vmem [thread:$0]  %s3, 2048, %s369, [#allocation7], 128, 128, 8
        $region24: #{tpu_custom_call.1} parent=11 // pred_fallthru
          _
        // Predicated region
        $region25: #{tpu_custom_call.1} parent=11 // pred_check
          %p375 = pneg %p137
        $region26: #{tpu_custom_call.1} parent=11 // pred_check_branch
          %377 = sbr.rel (%p375) target = $region28
        $region27: #{tpu_custom_call.1} parent=11 // pred_region
          _
        $region28: #{tpu_custom_call.1} parent=11 // pred_fallthru
          _
        // Predicated region
        $region29: #{tpu_custom_call.1} parent=11 // pred_check
          %p378 = pneg %p158
        $region30: #{tpu_custom_call.1} parent=11 // pred_check_branch
          %380 = sbr.rel (%p378) target = $region32
        $region31: #{tpu_custom_call.1} parent=11 // pred_region
          _
        $region32: #{tpu_custom_call.1} parent=11 // pred_fallthru
          _
        // Predicated region
        $region33: #{tpu_custom_call.1} parent=11 // pred_check
          %p381 = pneg %p179
        $region34: #{tpu_custom_call.1} parent=11 // pred_check_branch
          %383 = sbr.rel (%p381) target = $region36
        $region35: #{tpu_custom_call.1} parent=11 // pred_region
          _
        $region36: #{tpu_custom_call.1} parent=11 // pred_fallthru
          _
        // Predicated region
        $region37: #{tpu_custom_call.1} parent=11 // pred_check
          %p384 = pneg %p200
        $region38: #{tpu_custom_call.1} parent=11 // pred_check_branch
          %386 = sbr.rel (%p384) target = $region40
        $region39: #{tpu_custom_call.1} parent=11 // pred_region
          %s388 = ssub.s32 4096, 4096
          %389 = vsyncadd [#allocation10], %s388
          %s390 = sshll.u32 [#allocation9], 4
          %s391 = int_to_ptr.vmem [resolvable:$true] %s390
          %396 = dma.hbm_to_vmem [thread:$0]  %s7, 4096, %s391, [#allocation10], 256, 256, 16
        $region40: #{tpu_custom_call.1} parent=11 // pred_fallthru
          _
        // Predicated region
        $region41: #{tpu_custom_call.1} parent=11 // pred_check
          %p397 = pneg %p221
        $region42: #{tpu_custom_call.1} parent=11 // pred_check_branch
          %399 = sbr.rel (%p397) target = $region44
        $region43: #{tpu_custom_call.1} parent=11 // pred_region
          _
        $region44: #{tpu_custom_call.1} parent=11 // pred_fallthru
          _
        // Predicated region
        $region45: #{tpu_custom_call.1} parent=11 // pred_check
          %p400 = pneg %p242
        $region46: #{tpu_custom_call.1} parent=11 // pred_check_branch
          %402 = sbr.rel (%p400) target = $region48
        $region47: #{tpu_custom_call.1} parent=11 // pred_region
          %s404 = ssub.s32 4096, 4096
          %405 = vsyncadd [#allocation10], %s404
          %s406 = sshll.u32 [#allocation11], 4
          %s407 = int_to_ptr.vmem [resolvable:$true] %s406
          %412 = dma.hbm_to_vmem [thread:$0]  %s9, 4096, %s407, [#allocation10], 128, 128, 8
        $region48: #{tpu_custom_call.1} parent=11 // pred_fallthru
          _
        // Predicated region
        $region49: #{tpu_custom_call.1} parent=11 // pred_check
          %p413 = pneg %p263
        $region50: #{tpu_custom_call.1} parent=11 // pred_check_branch
          %415 = sbr.rel (%p413) target = $region52
        $region51: #{tpu_custom_call.1} parent=11 // pred_region
          _
        $region52: #{tpu_custom_call.1} parent=11 // pred_fallthru
          _
        // Predicated region
        $region53: #{tpu_custom_call.1} parent=11 // pred_check
          %p416 = pneg %p284
        $region54: #{tpu_custom_call.1} parent=11 // pred_check_branch
          %418 = sbr.rel (%p416) target = $region56
        $region55: #{tpu_custom_call.1} parent=11 // pred_region
          _
        $region56: #{tpu_custom_call.1} parent=11 // pred_fallthru
          _
        // Predicated region
        $region57: #{tpu_custom_call.1} parent=11 // pred_check
          %p419 = pneg %p305
        $region58: #{tpu_custom_call.1} parent=11 // pred_check_branch
          %421 = sbr.rel (%p419) target = $region60
        $region59: #{tpu_custom_call.1} parent=11 // pred_region
          _
        $region60: #{tpu_custom_call.1} parent=11 // pred_fallthru
          _
      $region12: #{tpu_custom_call.1} parent=5 // pred_fallthru
        _
      %p422 = scmp.lt.s32.totalorder %s27, 2
      // Predicated region
      $region61: #{tpu_custom_call.1} parent=5 // pred_check
        %p423 = pneg %p422
      $region62: #{tpu_custom_call.1} parent=5 // pred_check_branch
        %425 = sbr.rel (%p423) target = $region64
      $region63: #{tpu_custom_call.1} parent=5 // pred_region
        // Predicated region
        $region65: #{tpu_custom_call.1} parent=63 // pred_check
          %p426 = pneg %p47
        $region66: #{tpu_custom_call.1} parent=63 // pred_check_branch
          %428 = sbr.rel (%p426) target = $region68
        $region67: #{tpu_custom_call.1} parent=63 // pred_region
          %s429 = sand.u32 %s37, 1
          %s430 = scalar_lea.sflag [#allocation4], %s429
          %s431 = sand.u32 %s37, 1
          %s432 = smul.addr %s431, 32
          %s433 = scalar_lea.vmem [#allocation3], %s432
          %s434 = smul.u32 2, %s27
          %s436 = ssub.s32 512, 512
          %437 = vsyncadd %s430, %s436
          %s438 = smul.addr %s434, 2
          %s439 = smul.addr %s438, 128
          %s440 = scalar_lea.hbm %s0, %s439
          %s441 = sshll.u32 %s433, 4
          %s442 = int_to_ptr.vmem [resolvable:$true] %s441
          %447 = dma.hbm_to_vmem [thread:$0]  %s440, 512, %s442, %s430, 128, 128, 8
        $region68: #{tpu_custom_call.1} parent=63 // pred_fallthru
          _
      $region64: #{tpu_custom_call.1} parent=5 // pred_fallthru
        _
      %p448 = scmp.le.s32.totalorder 1, %s27
      %p449 = scmp.lt.s32.totalorder %s27, 3
      %p450 = pnand %p448, %p449
      %p451 = pneg %p450
      // Predicated region
      $region69: #{tpu_custom_call.1} parent=5 // pred_check
        _
      $region70: #{tpu_custom_call.1} parent=5 // pred_check_branch
        %453 = sbr.rel (%p450) target = $region72
      $region71: #{tpu_custom_call.1} parent=5 // pred_region
        %s454 = ssub.s32 %s27, 1
        %s455 = sand.u32 %s40, 1
        %s456 = scalar_lea.sflag [#allocation4], %s455
        %s457 = sand.u32 %s40, 1
        %s458 = smul.addr %s457, 32
        %s459 = scalar_lea.vmem [#allocation3], %s458
        // Predicated region
        $region73: #{tpu_custom_call.1} parent=71 // pred_check
          %p460 = pneg %p53
        $region74: #{tpu_custom_call.1} parent=71 // pred_check_branch
          %462 = sbr.rel (%p460) target = $region76
        $region75: #{tpu_custom_call.1} parent=71 // pred_region
          %463 = dma.done %s456, 512
        $region76: #{tpu_custom_call.1} parent=71 // pred_fallthru
          _
        // Predicated region
        $region77: #{tpu_custom_call.1} parent=71 // pred_check
          %p464 = pneg %p74
        $region78: #{tpu_custom_call.1} parent=71 // pred_check_branch
          %466 = sbr.rel (%p464) target = $region80
        $region79: #{tpu_custom_call.1} parent=71 // pred_region
          %467 = dma.done [#allocation7], 6144
        $region80: #{tpu_custom_call.1} parent=71 // pred_fallthru
          _
        // Predicated region
        $region81: #{tpu_custom_call.1} parent=71 // pred_check
          %p468 = pneg %p116
        $region82: #{tpu_custom_call.1} parent=71 // pred_check_branch
          %470 = sbr.rel (%p468) target = $region84
        $region83: #{tpu_custom_call.1} parent=71 // pred_region
          %471 = dma.done [#allocation7], 2048
        $region84: #{tpu_custom_call.1} parent=71 // pred_fallthru
          _
        // Predicated region
        $region85: #{tpu_custom_call.1} parent=71 // pred_check
          %p472 = pneg %p200
        $region86: #{tpu_custom_call.1} parent=71 // pred_check_branch
          %474 = sbr.rel (%p472) target = $region88
        $region87: #{tpu_custom_call.1} parent=71 // pred_region
          %475 = dma.done [#allocation10], 4096
        $region88: #{tpu_custom_call.1} parent=71 // pred_fallthru
          _
        // Predicated region
        $region89: #{tpu_custom_call.1} parent=71 // pred_check
          %p476 = pneg %p242
        $region90: #{tpu_custom_call.1} parent=71 // pred_check_branch
          %478 = sbr.rel (%p476) target = $region92
        $region91: #{tpu_custom_call.1} parent=71 // pred_region
          %479 = dma.done [#allocation10], 4096
        $region92: #{tpu_custom_call.1} parent=71 // pred_fallthru
          _
        %s480 = sand.u32 %s40, 1
        %s481 = scalar_lea.sflag [#allocation4], %s480
        %s482 = sand.u32 %s40, 1
        %s483 = smul.addr %s482, 32
        %s484 = scalar_lea.vmem [#allocation3], %s483
        %p485 = pneg %p53
        %p486 = pneg %p50
        %p487 = pneg %p74
        %p488 = pneg %p71
        %p489 = pneg %p95
        %p490 = pneg %p92
        %p491 = pneg %p116
        %p492 = pneg %p113
        %p493 = pneg %p137
        %p494 = pneg %p134
        %p495 = pneg %p158
        %p496 = pneg %p155
        %p497 = pneg %p179
        %p498 = pneg %p176
        %p499 = pneg %p200
        %p500 = pneg %p197
        %p501 = pneg %p221
        %p502 = pneg %p218
        %p503 = pneg %p242
        %p504 = pneg %p239
        %p505 = pneg %p263
        %p506 = pneg %p260
        %p507 = pneg %p284
        %p508 = pneg %p281
        %p509 = pneg %p305
        %p510 = pneg %p302
        %p511 = pneg %p331
        %p512 = pneg %p328
        %s513 = sand.u32 %s318, 1
        %s514 = scalar_lea.sflag [#allocation5], %s513
        %s515 = sand.u32 %s318, 1
        %s516 = smul.addr %s515, 32
        %s517 = scalar_lea.vmem [#allocation12], %s516
        %s518 = smul.u32 2, %s32
        %s519 = smul.u32 2, %s32
        %v520 = vld [vmem:[%s459] sm:$0xff]
        %v521 = vld [vmem:[%s459 + $0x8] sm:$0xff]
        %v522 = vld [vmem:[%s459 + $0x10] sm:$0xff]
        %v523 = vld [vmem:[%s459 + $0x18] sm:$0xff]
        %v524 = vld [vmem:[#allocation6] sm:$0xff]
        %v525 = vld [vmem:[#allocation6 + $0x8] sm:$0xff]
        %v526 = vld [vmem:[#allocation6 + $0x10] sm:$0xff]
        %v527 = vld [vmem:[#allocation6 + $0x18] sm:$0xff]
        %v528 = vld [vmem:[#allocation6 + $0x20] sm:$0xff]
        %v529 = vld [vmem:[#allocation6 + $0x28] sm:$0xff]
        %v530 = vld [vmem:[#allocation6 + $0x30] sm:$0xff]
        %v531 = vld [vmem:[#allocation6 + $0x38] sm:$0xff]
        %v532 = vld [vmem:[#allocation6 + $0x40] sm:$0xff]
        %v533 = vld [vmem:[#allocation6 + $0x48] sm:$0xff]
        %v534 = vld [vmem:[#allocation6 + $0x50] sm:$0xff]
        %v535 = vld [vmem:[#allocation6 + $0x58] sm:$0xff]
        %v536 = vld [vmem:[#allocation6 + $0x60] sm:$0xff]
        %v537 = vld [vmem:[#allocation6 + $0x68] sm:$0xff]
        %v538 = vld [vmem:[#allocation6 + $0x70] sm:$0xff]
        %v539 = vld [vmem:[#allocation6 + $0x78] sm:$0xff]
        %v540 = vld [vmem:[#allocation6 + $0x80] sm:$0xff]
        %v541 = vld [vmem:[#allocation6 + $0x88] sm:$0xff]
        %v542 = vld [vmem:[#allocation6 + $0x90] sm:$0xff]
        %v543 = vld [vmem:[#allocation6 + $0x98] sm:$0xff]
        %v544 = vld [vmem:[#allocation6 + $0xa0] sm:$0xff]
        %v545 = vld [vmem:[#allocation6 + $0xa8] sm:$0xff]
        %v546 = vld [vmem:[#allocation6 + $0xb0] sm:$0xff]
        %v547 = vld [vmem:[#allocation6 + $0xb8] sm:$0xff]
        %v548 = vld [vmem:[#allocation6 + $0xc0] sm:$0xff]
        %v549 = vld [vmem:[#allocation6 + $0xc8] sm:$0xff]
        %v550 = vld [vmem:[#allocation6 + $0xd0] sm:$0xff]
        %v551 = vld [vmem:[#allocation6 + $0xd8] sm:$0xff]
        %v552 = vld [vmem:[#allocation6 + $0xe0] sm:$0xff]
        %v553 = vld [vmem:[#allocation6 + $0xe8] sm:$0xff]
        %v554 = vld [vmem:[#allocation6 + $0xf0] sm:$0xff]
        %v555 = vld [vmem:[#allocation6 + $0xf8] sm:$0xff]
        %v556 = vld [vmem:[#allocation6 + $0x100] sm:$0xff]
        %v557 = vld [vmem:[#allocation6 + $0x108] sm:$0xff]
        %v558 = vld [vmem:[#allocation6 + $0x110] sm:$0xff]
        %v559 = vld [vmem:[#allocation6 + $0x118] sm:$0xff]
        %v560 = vld [vmem:[#allocation6 + $0x120] sm:$0xff]
        %v561 = vld [vmem:[#allocation6 + $0x128] sm:$0xff]
        %v562 = vld [vmem:[#allocation6 + $0x130] sm:$0xff]
        %v563 = vld [vmem:[#allocation6 + $0x138] sm:$0xff]
        %v564 = vld [vmem:[#allocation6 + $0x140] sm:$0xff]
        %v565 = vld [vmem:[#allocation6 + $0x148] sm:$0xff]
        %v566 = vld [vmem:[#allocation6 + $0x150] sm:$0xff]
        %v567 = vld [vmem:[#allocation6 + $0x158] sm:$0xff]
        %v568 = vld [vmem:[#allocation6 + $0x160] sm:$0xff]
        %v569 = vld [vmem:[#allocation6 + $0x168] sm:$0xff]
        %v570 = vld [vmem:[#allocation6 + $0x170] sm:$0xff]
        %v571 = vld [vmem:[#allocation6 + $0x178] sm:$0xff]
        %v572 = vld [vmem:[%s2] sm:$0x7]
        %v574 = vlaneseq
        %v575 = vshrl.u32 %v574, 7
        %v576 = vsub.s32 0, %v575
        %v577 = vrot.slane %v572, %v576
        %v578 = vlaneseq
        %v579 = vshrl.u32 %v578, 7
        %v580 = vsub.s32 1, %v579
        %v581 = vrot.slane %v572, %v580
        %v582 = vlaneseq
        %v583 = vshrl.u32 %v582, 7
        %v584 = vsub.s32 2, %v583
        %v585 = vrot.slane %v572, %v584
        %589 = vmatprep.subr.mxu0 %v570
        %590 = vmatpush1.msra.mxu0 %v569
        %591 = vmatprep.subr.mxu0 %v567
        %592 = vmatpush1.msra.mxu0 %v566
        %593 = vmatprep.subr.mxu0 %v564
        %594 = vmatpush1.msra.mxu0 %v563
        %595 = vmatprep.subr.mxu0 %v561
        %596 = vmatpush1.msra.mxu0 %v560
        %597 = vmatprep.subr.mxu0 %v558
        %598 = vmatpush1.msra.mxu0 %v557
        %599 = vmatprep.subr.mxu0 %v555
        %600 = vmatpush1.msra.mxu0 %v554
        %601 = vmatprep.subr.mxu0 %v552
        %602 = vmatpush1.msra.mxu0 %v551
        %603 = vmatprep.subr.mxu0 %v549
        %604 = vmatpush1.msra.mxu0 %v548
        %605 = vmatprep.subr.mxu0 %v546
        %606 = vmatpush1.msra.mxu0 %v545
        %607 = vmatprep.subr.mxu0 %v543
        %608 = vmatpush1.msra.mxu0 %v542
        %609 = vmatprep.subr.mxu0 %v540
        %610 = vmatpush1.msra.mxu0 %v539
        %611 = vmatprep.subr.mxu0 %v537
        %612 = vmatpush1.msra.mxu0 %v536
        %613 = vmatprep.subr.mxu0 %v534
        %614 = vmatpush1.msra.mxu0 %v533
        %615 = vmatprep.subr.mxu0 %v531
        %616 = vmatpush1.msra.mxu0 %v530
        %617 = vmatprep.subr.mxu0 %v528
        %618 = vmatpush1.msra.mxu0 %v527
        %619 = vmatprep.subr.mxu0 %v525
        %620 = vmatpush1.msra.mxu0 %v524
        %621 = vmatprep.subr.mxu0 0.0
        %622 = vmatpush2.msra.mxu0 0.0
        %623 = vmatprep.subr.mxu0 0.0
        %624 = vmatpush2.msra.mxu0 0.0
        %625 = vmatprep.subr.mxu0 0.0
        %626 = vmatpush2.msra.mxu0 0.0
        %627 = vmatprep.subr.mxu0 0.0
        %628 = vmatpush2.msra.mxu0 0.0
        %629 = vmatprep.subr.mxu0 0.0
        %630 = vmatpush2.msra.mxu0 0.0
        %631 = vmatprep.subr.mxu0 0.0
        %632 = vmatpush2.msra.mxu0 0.0
        %633 = vmatprep.subr.mxu0 0.0
        %634 = vmatpush2.msra.mxu0 0.0
        %635 = vmatprep.subr.mxu0 0.0
        %636 = vmatpush2.msra.mxu0 0.0
        %637 = vmatprep.subr.mxu0 0.0
        %638 = vmatpush2.msra.mxu0 0.0
        %639 = vmatprep.subr.mxu0 0.0
        %640 = vmatpush2.msra.mxu0 0.0
        %641 = vmatprep.subr.mxu0 0.0
        %642 = vmatpush2.msra.mxu0 0.0
        %643 = vmatprep.subr.mxu0 0.0
        %644 = vmatpush2.msra.mxu0 0.0
        %645 = vmatprep.subr.mxu0 0.0
        %646 = vmatpush2.msra.mxu0 0.0
        %647 = vmatprep.subr.mxu0 0.0
        %648 = vmatpush2.msra.mxu0 0.0
        %649 = vmatprep.subr.mxu0 0.0
        %650 = vmatpush2.msra.mxu0 0.0
        %651 = vmatprep.subr.mxu0 0.0
        %652 = vmatpush2.msra.mxu0 0.0
        %653 = vmatprep.mubr.f32.mxu0 0.0
        %654 = vmatmul.mubr.f32.gmra.mxu0 %v520
        %v655 = vpop.f32.mrf.mxu0
        %v656 = vadd.f32 %v577, %v655
        %v657 = vpop.f32.mrf.mxu0
        %v658 = vadd.f32 %v581, %v657
        %659 = vmatprep.mubr.f32.mxu0 0.0
        %660 = vmatmul.mubr.f32.gmra.mxu0 %v521
        %v661 = vpop.f32.mrf.mxu0
        %v662 = vadd.f32 %v577, %v661
        %v663 = vpop.f32.mrf.mxu0
        %v664 = vadd.f32 %v581, %v663
        %665 = vmatprep.mubr.f32.mxu0 0.0
        %666 = vmatmul.mubr.f32.gmra.mxu0 %v522
        %v667 = vpop.f32.mrf.mxu0
        %v668 = vadd.f32 %v577, %v667
        %v669 = vpop.f32.mrf.mxu0
        %v670 = vadd.f32 %v581, %v669
        %671 = vmatprep.mubr.f32.mxu0 0.0
        %672 = vmatmul.mubr.f32.gmra.mxu0 %v523
        %v673 = vpop.f32.mrf.mxu0
        %v674 = vadd.f32 %v577, %v673
        %v675 = vpop.f32.mrf.mxu0
        %v676 = vadd.f32 %v581, %v675
        %677 = vdwg.mxu0
        %678 = vmatprep.subr.mxu0 0.0
        %679 = vmatpush1.msra.mxu0 %v571
        %680 = vmatprep.subr.mxu0 0.0
        %681 = vmatpush1.msra.mxu0 %v568
        %682 = vmatprep.subr.mxu0 0.0
        %683 = vmatpush1.msra.mxu0 %v565
        %684 = vmatprep.subr.mxu0 0.0
        %685 = vmatpush1.msra.mxu0 %v562
        %686 = vmatprep.subr.mxu0 0.0
        %687 = vmatpush1.msra.mxu0 %v559
        %688 = vmatprep.subr.mxu0 0.0
        %689 = vmatpush1.msra.mxu0 %v556
        %690 = vmatprep.subr.mxu0 0.0
        %691 = vmatpush1.msra.mxu0 %v553
        %692 = vmatprep.subr.mxu0 0.0
        %693 = vmatpush1.msra.mxu0 %v550
        %694 = vmatprep.subr.mxu0 0.0
        %695 = vmatpush1.msra.mxu0 %v547
        %696 = vmatprep.subr.mxu0 0.0
        %697 = vmatpush1.msra.mxu0 %v544
        %698 = vmatprep.subr.mxu0 0.0
        %699 = vmatpush1.msra.mxu0 %v541
        %700 = vmatprep.subr.mxu0 0.0
        %701 = vmatpush1.msra.mxu0 %v538
        %702 = vmatprep.subr.mxu0 0.0
        %703 = vmatpush1.msra.mxu0 %v535
        %704 = vmatprep.subr.mxu0 0.0
        %705 = vmatpush1.msra.mxu0 %v532
        %706 = vmatprep.subr.mxu0 0.0
        %707 = vmatpush1.msra.mxu0 %v529
        %708 = vmatprep.subr.mxu0 0.0
        %709 = vmatpush1.msra.mxu0 %v526
        %710 = vmatprep.subr.mxu0 0.0
        %711 = vmatpush2.msra.mxu0 0.0
        %712 = vmatprep.subr.mxu0 0.0
        %713 = vmatpush2.msra.mxu0 0.0
        %714 = vmatprep.subr.mxu0 0.0
        %715 = vmatpush2.msra.mxu0 0.0
        %716 = vmatprep.subr.mxu0 0.0
        %717 = vmatpush2.msra.mxu0 0.0
        %718 = vmatprep.subr.mxu0 0.0
        %719 = vmatpush2.msra.mxu0 0.0
        %720 = vmatprep.subr.mxu0 0.0
        %721 = vmatpush2.msra.mxu0 0.0
        %722 = vmatprep.subr.mxu0 0.0
        %723 = vmatpush2.msra.mxu0 0.0
        %724 = vmatprep.subr.mxu0 0.0
        %725 = vmatpush2.msra.mxu0 0.0
        %726 = vmatprep.subr.mxu0 0.0
        %727 = vmatpush2.msra.mxu0 0.0
        %728 = vmatprep.subr.mxu0 0.0
        %729 = vmatpush2.msra.mxu0 0.0
        %730 = vmatprep.subr.mxu0 0.0
        %731 = vmatpush2.msra.mxu0 0.0
        %732 = vmatprep.subr.mxu0 0.0
        %733 = vmatpush2.msra.mxu0 0.0
        %734 = vmatprep.subr.mxu0 0.0
        %735 = vmatpush2.msra.mxu0 0.0
        %736 = vmatprep.subr.mxu0 0.0
        %737 = vmatpush2.msra.mxu0 0.0
        %738 = vmatprep.subr.mxu0 0.0
        %739 = vmatpush2.msra.mxu0 0.0
        %740 = vmatprep.subr.mxu0 0.0
        %741 = vmatpush2.msra.mxu0 0.0
        %742 = vmatprep.mubr.f32.mxu0 0.0
        %743 = vmatmul.mubr.f32.gmra.mxu0 %v520
        %v744 = vpop.f32.mrf.mxu0
        %v745 = vadd.f32 %v585, %v744
        %v746 = vpop.f32.mrf.mxu0
        %747 = vmatprep.mubr.f32.mxu0 0.0
        %748 = vmatmul.mubr.f32.gmra.mxu0 %v521
        %v749 = vpop.f32.mrf.mxu0
        %v750 = vadd.f32 %v585, %v749
        %v751 = vpop.f32.mrf.mxu0
        %752 = vmatprep.mubr.f32.mxu0 0.0
        %753 = vmatmul.mubr.f32.gmra.mxu0 %v522
        %v754 = vpop.f32.mrf.mxu0
        %v755 = vadd.f32 %v585, %v754
        %v756 = vpop.f32.mrf.mxu0
        %757 = vmatprep.mubr.f32.mxu0 0.0
        %758 = vmatmul.mubr.f32.gmra.mxu0 %v523
        %v759 = vpop.f32.mrf.mxu0
        %v760 = vadd.f32 %v585, %v759
        %v761 = vpop.f32.mrf.mxu0
        %762 = vdwg.mxu0
        %vm763 = vcmask 261120
        %v765 = vsel %vm763, %v656, 0
        %v768 = vsel %vm763, %v662, 0
        %v771 = vsel %vm763, %v658, 0
        %v774 = vsel %vm763, %v664, 0
        %776 = vmatprep.subr.mxu0 0.0
        %777 = vmatpush1.xpose.msra.mxu0 0.0
        %778 = vmatprep.subr.mxu0 0.0
        %779 = vmatpush1.xpose.msra.mxu0 0.0
        %780 = vmatprep.subr.mxu0 0.0
        %781 = vmatpush1.xpose.msra.mxu0 0.0
        %782 = vmatprep.subr.mxu0 0.0
        %783 = vmatpush1.xpose.msra.mxu0 0.0
        %784 = vmatprep.subr.mxu0 0.0
        %785 = vmatpush1.xpose.msra.mxu0 0.0
        %786 = vmatprep.subr.mxu0 0.0
        %787 = vmatpush1.xpose.msra.mxu0 0.0
        %788 = vmatprep.subr.mxu0 0.0
        %789 = vmatpush1.xpose.msra.mxu0 0.0
        %790 = vmatprep.subr.mxu0 0.0
        %791 = vmatpush1.xpose.msra.mxu0 0.0
        %792 = vmatprep.subr.mxu0 0.0
        %793 = vmatpush1.xpose.msra.mxu0 0.0
        %794 = vmatprep.subr.mxu0 0.0
        %795 = vmatpush1.xpose.msra.mxu0 0.0
        %796 = vmatprep.subr.mxu0 0.0
        %797 = vmatpush1.xpose.msra.mxu0 0.0
        %798 = vmatprep.subr.mxu0 0.0
        %799 = vmatpush1.xpose.msra.mxu0 0.0
        %800 = vmatprep.subr.mxu0 0.0
        %801 = vmatpush1.xpose.msra.mxu0 0.0
        %802 = vmatprep.subr.mxu0 0.0
        %803 = vmatpush1.xpose.msra.mxu0 0.0
        %804 = vmatprep.subr.mxu0 0.0
        %805 = vmatpush1.xpose.msra.mxu0 %v774
        %806 = vmatprep.subr.mxu0 0.0
        %807 = vmatpush1.xpose.msra.mxu0 %v771
        %808 = vmatprep.subr.mxu0 0.0
        %809 = vmatpush2.xpose.msra.mxu0 0.0
        %810 = vmatprep.subr.mxu0 0.0
        %811 = vmatpush2.xpose.msra.mxu0 0.0
        %812 = vmatprep.subr.mxu0 0.0
        %813 = vmatpush2.xpose.msra.mxu0 0.0
        %814 = vmatprep.subr.mxu0 0.0
        %815 = vmatpush2.xpose.msra.mxu0 0.0
        %816 = vmatprep.subr.mxu0 0.0
        %817 = vmatpush2.xpose.msra.mxu0 0.0
        %818 = vmatprep.subr.mxu0 0.0
        %819 = vmatpush2.xpose.msra.mxu0 0.0
        %820 = vmatprep.subr.mxu0 0.0
        %821 = vmatpush2.xpose.msra.mxu0 0.0
        %822 = vmatprep.subr.mxu0 0.0
        %823 = vmatpush2.xpose.msra.mxu0 0.0
        %824 = vmatprep.subr.mxu0 0.0
        %825 = vmatpush2.xpose.msra.mxu0 0.0
        %826 = vmatprep.subr.mxu0 0.0
        %827 = vmatpush2.xpose.msra.mxu0 0.0
        %828 = vmatprep.subr.mxu0 0.0
        %829 = vmatpush2.xpose.msra.mxu0 0.0
        %830 = vmatprep.subr.mxu0 0.0
        %831 = vmatpush2.xpose.msra.mxu0 0.0
        %832 = vmatprep.subr.mxu0 0.0
        %833 = vmatpush2.xpose.msra.mxu0 0.0
        %834 = vmatprep.subr.mxu0 0.0
        %835 = vmatpush2.xpose.msra.mxu0 0.0
        %836 = vmatprep.subr.mxu0 0.0
        %837 = vmatpush2.xpose.msra.mxu0 0.0
        %838 = vmatprep.subr.mxu0 0.0
        %839 = vmatpush2.xpose.msra.mxu0 0.0
        %840 = vmatprep.mubr.f32.mxu0 0.0
        %841 = vmatmul.mubr.f32.gmra.mxu0 %v765
        %v842 = vpop.f32.mrf.mxu0
        %v843 = vadd.f32 0.0, %v842
        %v844 = vpop.f32.mrf.mxu0
        %845 = vmatprep.mubr.f32.mxu0 0.0
        %846 = vmatmul.mubr.f32.gmra.mxu0 %v768
        %v847 = vpop.f32.mrf.mxu0
        %v848 = vadd.f32 0.0, %v847
        %v849 = vpop.f32.mrf.mxu0
        %850 = vdwg.mxu0
        %v851 = vmul.f32 %v843, 0.17677669
        %v852 = vmul.f32 %v848, 0.17677669
        %vm853 = vcmask 130048
        %v854 = vsel %vm853, %v851, -inf
        %855 = vmax.xlane.f32.xlu0 %v854
        %v856 = vpop.xlane.xlu0 %855
        %v857 = vsel %vm853, %v852, -inf
        %858 = vmax.xlane.f32.xlu0 %v857
        %v859 = vpop.xlane.xlu0 %858
        %v860 = vsub.f32 %v851, %v856
        %v861 = vsub.f32 %v852, %v859
        %v862 = vmul.f32 %v860, 1.442695
        %v863 = vpow.pop %v862
        %v864 = vmul.f32 %v861, 1.442695
        %v865 = vpow.pop %v864
        %v866 = vsel %vm853, %v863, 0.0
        %867 = vadd.xlane.f32.xlu0 %v866
        %v868 = vpop.xlane.xlu0 %867
        %v869 = vsel %vm853, %v865, 0.0
        %870 = vadd.xlane.f32.xlu0 %v869
        %v871 = vpop.xlane.xlu0 %870
        %v872 = vrcp.pop %v868
        %v873 = vrcp.pop %v871
        %v874 = vmul.f32 %v863, %v872
        %v875 = vmul.f32 %v865, %v873
        %v877 = vsel %vm853, %v874, 0
        %v880 = vsel %vm853, %v875, 0
        %882 = vmatprep.subr.mxu0 0.0
        %883 = vmatpush1.msra.mxu0 0.0
        %884 = vmatprep.subr.mxu0 0.0
        %885 = vmatpush1.msra.mxu0 0.0
        %886 = vmatprep.subr.mxu0 0.0
        %887 = vmatpush1.msra.mxu0 0.0
        %888 = vmatprep.subr.mxu0 0.0
        %889 = vmatpush1.msra.mxu0 0.0
        %890 = vmatprep.subr.mxu0 0.0
        %891 = vmatpush1.msra.mxu0 0.0
        %892 = vmatprep.subr.mxu0 0.0
        %893 = vmatpush1.msra.mxu0 0.0
        %894 = vmatprep.subr.mxu0 0.0
        %895 = vmatpush1.msra.mxu0 0.0
        %896 = vmatprep.subr.mxu0 0.0
        %897 = vmatpush1.msra.mxu0 0.0
        %898 = vmatprep.subr.mxu0 0.0
        %899 = vmatpush1.msra.mxu0 0.0
        %900 = vmatprep.subr.mxu0 0.0
        %901 = vmatpush1.msra.mxu0 0.0
        %902 = vmatprep.subr.mxu0 0.0
        %903 = vmatpush1.msra.mxu0 0.0
        %904 = vmatprep.subr.mxu0 0.0
        %905 = vmatpush1.msra.mxu0 0.0
        %906 = vmatprep.subr.mxu0 0.0
        %907 = vmatpush1.msra.mxu0 0.0
        %908 = vmatprep.subr.mxu0 0.0
        %909 = vmatpush1.msra.mxu0 0.0
        %910 = vmatprep.subr.mxu0 0.0
        %911 = vmatpush1.msra.mxu0 %v750
        %912 = vmatprep.subr.mxu0 0.0
        %913 = vmatpush1.msra.mxu0 %v745
        %914 = vmatprep.subr.mxu0 0.0
        %915 = vmatpush2.msra.mxu0 0.0
        %916 = vmatprep.subr.mxu0 0.0
        %917 = vmatpush2.msra.mxu0 0.0
        %918 = vmatprep.subr.mxu0 0.0
        %919 = vmatpush2.msra.mxu0 0.0
        %920 = vmatprep.subr.mxu0 0.0
        %921 = vmatpush2.msra.mxu0 0.0
        %922 = vmatprep.subr.mxu0 0.0
        %923 = vmatpush2.msra.mxu0 0.0
        %924 = vmatprep.subr.mxu0 0.0
        %925 = vmatpush2.msra.mxu0 0.0
        %926 = vmatprep.subr.mxu0 0.0
        %927 = vmatpush2.msra.mxu0 0.0
        %928 = vmatprep.subr.mxu0 0.0
        %929 = vmatpush2.msra.mxu0 0.0
        %930 = vmatprep.subr.mxu0 0.0
        %931 = vmatpush2.msra.mxu0 0.0
        %932 = vmatprep.subr.mxu0 0.0
        %933 = vmatpush2.msra.mxu0 0.0
        %934 = vmatprep.subr.mxu0 0.0
        %935 = vmatpush2.msra.mxu0 0.0
        %936 = vmatprep.subr.mxu0 0.0
        %937 = vmatpush2.msra.mxu0 0.0
        %938 = vmatprep.subr.mxu0 0.0
        %939 = vmatpush2.msra.mxu0 0.0
        %940 = vmatprep.subr.mxu0 0.0
        %941 = vmatpush2.msra.mxu0 0.0
        %942 = vmatprep.subr.mxu0 0.0
        %943 = vmatpush2.msra.mxu0 0.0
        %944 = vmatprep.subr.mxu0 0.0
        %945 = vmatpush2.msra.mxu0 0.0
        %946 = vmatprep.mubr.f32.mxu0 0.0
        %947 = vmatmul.mubr.f32.gmra.mxu0 %v877
        %v948 = vpop.f32.mrf.mxu0
        %v949 = vadd.f32 0.0, %v948
        %v950 = vpop.f32.mrf.mxu0
        %951 = vmatprep.mubr.f32.mxu0 0.0
        %952 = vmatmul.mubr.f32.gmra.mxu0 %v880
        %v953 = vpop.f32.mrf.mxu0
        %v954 = vadd.f32 0.0, %v953
        %v955 = vpop.f32.mrf.mxu0
        %956 = vdwg.mxu0
        %957 = vst.msk [vmem:[#allocation2] sm:$0xff] %vm763, %v949
        %958 = vst.msk [vmem:[#allocation2 + $0x8] sm:$0xff] %vm763, %v954
        %959 = vrot.lane.b32.xlu0 %v656, 96
        %v960 = vpop.permute.xlu0 %959
        %961 = vrot.lane.b32.xlu0 %v662, 96
        %v962 = vpop.permute.xlu0 %961
        %963 = vrot.lane.b32.xlu0 %v658, 96
        %v964 = vpop.permute.xlu0 %963
        %965 = vrot.lane.b32.xlu0 %v664, 96
        %v966 = vpop.permute.xlu0 %965
        %v967 = vsel %vm763, %v960, 0
        %v969 = vsel %vm763, %v962, 0
        %v971 = vsel %vm763, %v964, 0
        %v973 = vsel %vm763, %v966, 0
        %975 = vmatprep.subr.mxu0 0.0
        %976 = vmatpush1.xpose.msra.mxu0 0.0
        %977 = vmatprep.subr.mxu0 0.0
        %978 = vmatpush1.xpose.msra.mxu0 0.0
        %979 = vmatprep.subr.mxu0 0.0
        %980 = vmatpush1.xpose.msra.mxu0 0.0
        %981 = vmatprep.subr.mxu0 0.0
        %982 = vmatpush1.xpose.msra.mxu0 0.0
        %983 = vmatprep.subr.mxu0 0.0
        %984 = vmatpush1.xpose.msra.mxu0 0.0
        %985 = vmatprep.subr.mxu0 0.0
        %986 = vmatpush1.xpose.msra.mxu0 0.0
        %987 = vmatprep.subr.mxu0 0.0
        %988 = vmatpush1.xpose.msra.mxu0 0.0
        %989 = vmatprep.subr.mxu0 0.0
        %990 = vmatpush1.xpose.msra.mxu0 0.0
        %991 = vmatprep.subr.mxu0 0.0
        %992 = vmatpush1.xpose.msra.mxu0 0.0
        %993 = vmatprep.subr.mxu0 0.0
        %994 = vmatpush1.xpose.msra.mxu0 0.0
        %995 = vmatprep.subr.mxu0 0.0
        %996 = vmatpush1.xpose.msra.mxu0 0.0
        %997 = vmatprep.subr.mxu0 0.0
        %998 = vmatpush1.xpose.msra.mxu0 0.0
        %999 = vmatprep.subr.mxu0 0.0
        %1000 = vmatpush1.xpose.msra.mxu0 0.0
        %1001 = vmatprep.subr.mxu0 0.0
        %1002 = vmatpush1.xpose.msra.mxu0 0.0
        %1003 = vmatprep.subr.mxu0 0.0
        %1004 = vmatpush1.xpose.msra.mxu0 %v973
        %1005 = vmatprep.subr.mxu0 0.0
        %1006 = vmatpush1.xpose.msra.mxu0 %v971
        %1007 = vmatprep.subr.mxu0 0.0
        %1008 = vmatpush2.xpose.msra.mxu0 0.0
        %1009 = vmatprep.subr.mxu0 0.0
        %1010 = vmatpush2.xpose.msra.mxu0 0.0
        %1011 = vmatprep.subr.mxu0 0.0
        %1012 = vmatpush2.xpose.msra.mxu0 0.0
        %1013 = vmatprep.subr.mxu0 0.0
        %1014 = vmatpush2.xpose.msra.mxu0 0.0
        %1015 = vmatprep.subr.mxu0 0.0
        %1016 = vmatpush2.xpose.msra.mxu0 0.0
        %1017 = vmatprep.subr.mxu0 0.0
        %1018 = vmatpush2.xpose.msra.mxu0 0.0
        %1019 = vmatprep.subr.mxu0 0.0
        %1020 = vmatpush2.xpose.msra.mxu0 0.0
        %1021 = vmatprep.subr.mxu0 0.0
        %1022 = vmatpush2.xpose.msra.mxu0 0.0
        %1023 = vmatprep.subr.mxu0 0.0
        %1024 = vmatpush2.xpose.msra.mxu0 0.0
        %1025 = vmatprep.subr.mxu0 0.0
        %1026 = vmatpush2.xpose.msra.mxu0 0.0
        %1027 = vmatprep.subr.mxu0 0.0
        %1028 = vmatpush2.xpose.msra.mxu0 0.0
        %1029 = vmatprep.subr.mxu0 0.0
        %1030 = vmatpush2.xpose.msra.mxu0 0.0
        %1031 = vmatprep.subr.mxu0 0.0
        %1032 = vmatpush2.xpose.msra.mxu0 0.0
        %1033 = vmatprep.subr.mxu0 0.0
        %1034 = vmatpush2.xpose.msra.mxu0 0.0
        %1035 = vmatprep.subr.mxu0 0.0
        %1036 = vmatpush2.xpose.msra.mxu0 0.0
        %1037 = vmatprep.subr.mxu0 0.0
        %1038 = vmatpush2.xpose.msra.mxu0 0.0
        %1039 = vmatprep.mubr.f32.mxu0 0.0
        %1040 = vmatmul.mubr.f32.gmra.mxu0 %v967
        %v1041 = vpop.f32.mrf.mxu0
        %v1042 = vadd.f32 0.0, %v1041
        %v1043 = vpop.f32.mrf.mxu0
        %1044 = vmatprep.mubr.f32.mxu0 0.0
        %1045 = vmatmul.mubr.f32.gmra.mxu0 %v969
        %v1046 = vpop.f32.mrf.mxu0
        %v1047 = vadd.f32 0.0, %v1046
        %v1048 = vpop.f32.mrf.mxu0
        %1049 = vdwg.mxu0
        %v1050 = vmul.f32 %v1042, 0.17677669
        %v1051 = vmul.f32 %v1047, 0.17677669
        %v1052 = vsel %vm853, %v1050, -inf
        %1053 = vmax.xlane.f32.xlu0 %v1052
        %v1054 = vpop.xlane.xlu0 %1053
        %v1055 = vsel %vm853, %v1051, -inf
        %1056 = vmax.xlane.f32.xlu0 %v1055
        %v1057 = vpop.xlane.xlu0 %1056
        %v1058 = vsub.f32 %v1050, %v1054
        %v1059 = vsub.f32 %v1051, %v1057
        %v1060 = vmul.f32 %v1058, 1.442695
        %v1061 = vpow.pop %v1060
        %v1062 = vmul.f32 %v1059, 1.442695
        %v1063 = vpow.pop %v1062
        %v1064 = vsel %vm853, %v1061, 0.0
        %1065 = vadd.xlane.f32.xlu0 %v1064
        %v1066 = vpop.xlane.xlu0 %1065
        %v1067 = vsel %vm853, %v1063, 0.0
        %1068 = vadd.xlane.f32.xlu0 %v1067
        %v1069 = vpop.xlane.xlu0 %1068
        %v1070 = vrcp.pop %v1066
        %v1071 = vrcp.pop %v1069
        %v1072 = vmul.f32 %v1061, %v1070
        %v1073 = vmul.f32 %v1063, %v1071
        %1076 = vrot.lane.b32.xlu0 %v745, 96
        %v1077 = vpop.permute.xlu0 %1076
        %1078 = vrot.lane.b32.xlu0 %v750, 96
        %v1079 = vpop.permute.xlu0 %1078
        %v1083 = vsel %vm853, %v1072, 0
        %v1086 = vsel %vm853, %v1073, 0
        %1088 = vmatprep.subr.mxu0 0.0
        %1089 = vmatpush1.msra.mxu0 0.0
        %1090 = vmatprep.subr.mxu0 0.0
        %1091 = vmatpush1.msra.mxu0 0.0
        %1092 = vmatprep.subr.mxu0 0.0
        %1093 = vmatpush1.msra.mxu0 0.0
        %1094 = vmatprep.subr.mxu0 0.0
        %1095 = vmatpush1.msra.mxu0 0.0
        %1096 = vmatprep.subr.mxu0 0.0
        %1097 = vmatpush1.msra.mxu0 0.0
        %1098 = vmatprep.subr.mxu0 0.0
        %1099 = vmatpush1.msra.mxu0 0.0
        %1100 = vmatprep.subr.mxu0 0.0
        %1101 = vmatpush1.msra.mxu0 0.0
        %1102 = vmatprep.subr.mxu0 0.0
        %1103 = vmatpush1.msra.mxu0 0.0
        %1104 = vmatprep.subr.mxu0 0.0
        %1105 = vmatpush1.msra.mxu0 0.0
        %1106 = vmatprep.subr.mxu0 0.0
        %1107 = vmatpush1.msra.mxu0 0.0
        %1108 = vmatprep.subr.mxu0 0.0
        %1109 = vmatpush1.msra.mxu0 0.0
        %1110 = vmatprep.subr.mxu0 0.0
        %1111 = vmatpush1.msra.mxu0 0.0
        %1112 = vmatprep.subr.mxu0 0.0
        %1113 = vmatpush1.msra.mxu0 0.0
        %1114 = vmatprep.subr.mxu0 0.0
        %1115 = vmatpush1.msra.mxu0 0.0
        %1116 = vmatprep.subr.mxu0 0.0
        %1117 = vmatpush1.msra.mxu0 %v1079
        %1118 = vmatprep.subr.mxu0 0.0
        %1119 = vmatpush1.msra.mxu0 %v1077
        %1120 = vmatprep.subr.mxu0 0.0
        %1121 = vmatpush2.msra.mxu0 0.0
        %1122 = vmatprep.subr.mxu0 0.0
        %1123 = vmatpush2.msra.mxu0 0.0
        %1124 = vmatprep.subr.mxu0 0.0
        %1125 = vmatpush2.msra.mxu0 0.0
        %1126 = vmatprep.subr.mxu0 0.0
        %1127 = vmatpush2.msra.mxu0 0.0
        %1128 = vmatprep.subr.mxu0 0.0
        %1129 = vmatpush2.msra.mxu0 0.0
        %1130 = vmatprep.subr.mxu0 0.0
        %1131 = vmatpush2.msra.mxu0 0.0
        %1132 = vmatprep.subr.mxu0 0.0
        %1133 = vmatpush2.msra.mxu0 0.0
        %1134 = vmatprep.subr.mxu0 0.0
        %1135 = vmatpush2.msra.mxu0 0.0
        %1136 = vmatprep.subr.mxu0 0.0
        %1137 = vmatpush2.msra.mxu0 0.0
        %1138 = vmatprep.subr.mxu0 0.0
        %1139 = vmatpush2.msra.mxu0 0.0
        %1140 = vmatprep.subr.mxu0 0.0
        %1141 = vmatpush2.msra.mxu0 0.0
        %1142 = vmatprep.subr.mxu0 0.0
        %1143 = vmatpush2.msra.mxu0 0.0
        %1144 = vmatprep.subr.mxu0 0.0
        %1145 = vmatpush2.msra.mxu0 0.0
        %1146 = vmatprep.subr.mxu0 0.0
        %1147 = vmatpush2.msra.mxu0 0.0
        %1148 = vmatprep.subr.mxu0 0.0
        %1149 = vmatpush2.msra.mxu0 0.0
        %1150 = vmatprep.subr.mxu0 0.0
        %1151 = vmatpush2.msra.mxu0 0.0
        %1152 = vmatprep.mubr.f32.mxu0 0.0
        %1153 = vmatmul.mubr.f32.gmra.mxu0 %v1083
        %v1154 = vpop.f32.mrf.mxu0
        %v1155 = vadd.f32 0.0, %v1154
        %v1156 = vpop.f32.mrf.mxu0
        %1157 = vmatprep.mubr.f32.mxu0 0.0
        %1158 = vmatmul.mubr.f32.gmra.mxu0 %v1086
        %v1159 = vpop.f32.mrf.mxu0
        %v1160 = vadd.f32 0.0, %v1159
        %v1161 = vpop.f32.mrf.mxu0
        %1162 = vdwg.mxu0
        %1165 = vrot.lane.b32.xlu0 %v1155, 32
        %v1166 = vpop.permute.xlu0 %1165
        %1167 = vrot.lane.b32.xlu0 %v1160, 32
        %v1168 = vpop.permute.xlu0 %1167
        %vm1171 = vcmask 523520
        %1172 = vst.msk [vmem:[#allocation2] sm:$0xff] %vm1171, %v1166
        %1173 = vst.msk [vmem:[#allocation2 + $0x8] sm:$0xff] %vm1171, %v1168
        %1174 = vrot.lane.b32.xlu0 %v656, 64
        %v1175 = vpop.permute.xlu0 %1174
        %1176 = vrot.lane.b32.xlu0 %v662, 64
        %v1177 = vpop.permute.xlu0 %1176
        %1178 = vrot.lane.b32.xlu0 %v658, 64
        %v1179 = vpop.permute.xlu0 %1178
        %1180 = vrot.lane.b32.xlu0 %v664, 64
        %v1181 = vpop.permute.xlu0 %1180
        %v1182 = vsel %vm763, %v1175, 0
        %v1184 = vsel %vm763, %v1177, 0
        %v1186 = vsel %vm763, %v1179, 0
        %v1188 = vsel %vm763, %v1181, 0
        %1190 = vmatprep.subr.mxu0 0.0
        %1191 = vmatpush1.xpose.msra.mxu0 0.0
        %1192 = vmatprep.subr.mxu0 0.0
        %1193 = vmatpush1.xpose.msra.mxu0 0.0
        %1194 = vmatprep.subr.mxu0 0.0
        %1195 = vmatpush1.xpose.msra.mxu0 0.0
        %1196 = vmatprep.subr.mxu0 0.0
        %1197 = vmatpush1.xpose.msra.mxu0 0.0
        %1198 = vmatprep.subr.mxu0 0.0
        %1199 = vmatpush1.xpose.msra.mxu0 0.0
        %1200 = vmatprep.subr.mxu0 0.0
        %1201 = vmatpush1.xpose.msra.mxu0 0.0
        %1202 = vmatprep.subr.mxu0 0.0
        %1203 = vmatpush1.xpose.msra.mxu0 0.0
        %1204 = vmatprep.subr.mxu0 0.0
        %1205 = vmatpush1.xpose.msra.mxu0 0.0
        %1206 = vmatprep.subr.mxu0 0.0
        %1207 = vmatpush1.xpose.msra.mxu0 0.0
        %1208 = vmatprep.subr.mxu0 0.0
        %1209 = vmatpush1.xpose.msra.mxu0 0.0
        %1210 = vmatprep.subr.mxu0 0.0
        %1211 = vmatpush1.xpose.msra.mxu0 0.0
        %1212 = vmatprep.subr.mxu0 0.0
        %1213 = vmatpush1.xpose.msra.mxu0 0.0
        %1214 = vmatprep.subr.mxu0 0.0
        %1215 = vmatpush1.xpose.msra.mxu0 0.0
        %1216 = vmatprep.subr.mxu0 0.0
        %1217 = vmatpush1.xpose.msra.mxu0 0.0
        %1218 = vmatprep.subr.mxu0 0.0
        %1219 = vmatpush1.xpose.msra.mxu0 %v1188
        %1220 = vmatprep.subr.mxu0 0.0
        %1221 = vmatpush1.xpose.msra.mxu0 %v1186
        %1222 = vmatprep.subr.mxu0 0.0
        %1223 = vmatpush2.xpose.msra.mxu0 0.0
        %1224 = vmatprep.subr.mxu0 0.0
        %1225 = vmatpush2.xpose.msra.mxu0 0.0
        %1226 = vmatprep.subr.mxu0 0.0
        %1227 = vmatpush2.xpose.msra.mxu0 0.0
        %1228 = vmatprep.subr.mxu0 0.0
        %1229 = vmatpush2.xpose.msra.mxu0 0.0
        %1230 = vmatprep.subr.mxu0 0.0
        %1231 = vmatpush2.xpose.msra.mxu0 0.0
        %1232 = vmatprep.subr.mxu0 0.0
        %1233 = vmatpush2.xpose.msra.mxu0 0.0
        %1234 = vmatprep.subr.mxu0 0.0
        %1235 = vmatpush2.xpose.msra.mxu0 0.0
        %1236 = vmatprep.subr.mxu0 0.0
        %1237 = vmatpush2.xpose.msra.mxu0 0.0
        %1238 = vmatprep.subr.mxu0 0.0
        %1239 = vmatpush2.xpose.msra.mxu0 0.0
        %1240 = vmatprep.subr.mxu0 0.0
        %1241 = vmatpush2.xpose.msra.mxu0 0.0
        %1242 = vmatprep.subr.mxu0 0.0
        %1243 = vmatpush2.xpose.msra.mxu0 0.0
        %1244 = vmatprep.subr.mxu0 0.0
        %1245 = vmatpush2.xpose.msra.mxu0 0.0
        %1246 = vmatprep.subr.mxu0 0.0
        %1247 = vmatpush2.xpose.msra.mxu0 0.0
        %1248 = vmatprep.subr.mxu0 0.0
        %1249 = vmatpush2.xpose.msra.mxu0 0.0
        %1250 = vmatprep.subr.mxu0 0.0
        %1251 = vmatpush2.xpose.msra.mxu0 0.0
        %1252 = vmatprep.subr.mxu0 0.0
        %1253 = vmatpush2.xpose.msra.mxu0 0.0
        %1254 = vmatprep.mubr.f32.mxu0 0.0
        %1255 = vmatmul.mubr.f32.gmra.mxu0 %v1182
        %v1256 = vpop.f32.mrf.mxu0
        %v1257 = vadd.f32 0.0, %v1256
        %v1258 = vpop.f32.mrf.mxu0
        %1259 = vmatprep.mubr.f32.mxu0 0.0
        %1260 = vmatmul.mubr.f32.gmra.mxu0 %v1184
        %v1261 = vpop.f32.mrf.mxu0
        %v1262 = vadd.f32 0.0, %v1261
        %v1263 = vpop.f32.mrf.mxu0
        %1264 = vdwg.mxu0
        %v1265 = vmul.f32 %v1257, 0.17677669
        %v1266 = vmul.f32 %v1262, 0.17677669
        %v1267 = vsel %vm853, %v1265, -inf
        %1268 = vmax.xlane.f32.xlu0 %v1267
        %v1269 = vpop.xlane.xlu0 %1268
        %v1270 = vsel %vm853, %v1266, -inf
        %1271 = vmax.xlane.f32.xlu0 %v1270
        %v1272 = vpop.xlane.xlu0 %1271
        %v1273 = vsub.f32 %v1265, %v1269
        %v1274 = vsub.f32 %v1266, %v1272
        %v1275 = vmul.f32 %v1273, 1.442695
        %v1276 = vpow.pop %v1275
        %v1277 = vmul.f32 %v1274, 1.442695
        %v1278 = vpow.pop %v1277
        %v1279 = vsel %vm853, %v1276, 0.0
        %1280 = vadd.xlane.f32.xlu0 %v1279
        %v1281 = vpop.xlane.xlu0 %1280
        %v1282 = vsel %vm853, %v1278, 0.0
        %1283 = vadd.xlane.f32.xlu0 %v1282
        %v1284 = vpop.xlane.xlu0 %1283
        %v1285 = vrcp.pop %v1281
        %v1286 = vrcp.pop %v1284
        %v1287 = vmul.f32 %v1276, %v1285
        %v1288 = vmul.f32 %v1278, %v1286
        %1289 = vrot.lane.b32.xlu0 %v745, 64
        %v1290 = vpop.permute.xlu0 %1289
        %1291 = vrot.lane.b32.xlu0 %v750, 64
        %v1292 = vpop.permute.xlu0 %1291
        %v1296 = vsel %vm853, %v1287, 0
        %v1299 = vsel %vm853, %v1288, 0
        %1301 = vmatprep.subr.mxu0 0.0
        %1302 = vmatpush1.msra.mxu0 0.0
        %1303 = vmatprep.subr.mxu0 0.0
        %1304 = vmatpush1.msra.mxu0 0.0
        %1305 = vmatprep.subr.mxu0 0.0
        %1306 = vmatpush1.msra.mxu0 0.0
        %1307 = vmatprep.subr.mxu0 0.0
        %1308 = vmatpush1.msra.mxu0 0.0
        %1309 = vmatprep.subr.mxu0 0.0
        %1310 = vmatpush1.msra.mxu0 0.0
        %1311 = vmatprep.subr.mxu0 0.0
        %1312 = vmatpush1.msra.mxu0 0.0
        %1313 = vmatprep.subr.mxu0 0.0
        %1314 = vmatpush1.msra.mxu0 0.0
        %1315 = vmatprep.subr.mxu0 0.0
        %1316 = vmatpush1.msra.mxu0 0.0
        %1317 = vmatprep.subr.mxu0 0.0
        %1318 = vmatpush1.msra.mxu0 0.0
        %1319 = vmatprep.subr.mxu0 0.0
        %1320 = vmatpush1.msra.mxu0 0.0
        %1321 = vmatprep.subr.mxu0 0.0
        %1322 = vmatpush1.msra.mxu0 0.0
        %1323 = vmatprep.subr.mxu0 0.0
        %1324 = vmatpush1.msra.mxu0 0.0
        %1325 = vmatprep.subr.mxu0 0.0
        %1326 = vmatpush1.msra.mxu0 0.0
        %1327 = vmatprep.subr.mxu0 0.0
        %1328 = vmatpush1.msra.mxu0 0.0
        %1329 = vmatprep.subr.mxu0 0.0
        %1330 = vmatpush1.msra.mxu0 %v1292
        %1331 = vmatprep.subr.mxu0 0.0
        %1332 = vmatpush1.msra.mxu0 %v1290
        %1333 = vmatprep.subr.mxu0 0.0
        %1334 = vmatpush2.msra.mxu0 0.0
        %1335 = vmatprep.subr.mxu0 0.0
        %1336 = vmatpush2.msra.mxu0 0.0
        %1337 = vmatprep.subr.mxu0 0.0
        %1338 = vmatpush2.msra.mxu0 0.0
        %1339 = vmatprep.subr.mxu0 0.0
        %1340 = vmatpush2.msra.mxu0 0.0
        %1341 = vmatprep.subr.mxu0 0.0
        %1342 = vmatpush2.msra.mxu0 0.0
        %1343 = vmatprep.subr.mxu0 0.0
        %1344 = vmatpush2.msra.mxu0 0.0
        %1345 = vmatprep.subr.mxu0 0.0
        %1346 = vmatpush2.msra.mxu0 0.0
        %1347 = vmatprep.subr.mxu0 0.0
        %1348 = vmatpush2.msra.mxu0 0.0
        %1349 = vmatprep.subr.mxu0 0.0
        %1350 = vmatpush2.msra.mxu0 0.0
        %1351 = vmatprep.subr.mxu0 0.0
        %1352 = vmatpush2.msra.mxu0 0.0
        %1353 = vmatprep.subr.mxu0 0.0
        %1354 = vmatpush2.msra.mxu0 0.0
        %1355 = vmatprep.subr.mxu0 0.0
        %1356 = vmatpush2.msra.mxu0 0.0
        %1357 = vmatprep.subr.mxu0 0.0
        %1358 = vmatpush2.msra.mxu0 0.0
        %1359 = vmatprep.subr.mxu0 0.0
        %1360 = vmatpush2.msra.mxu0 0.0
        %1361 = vmatprep.subr.mxu0 0.0
        %1362 = vmatpush2.msra.mxu0 0.0
        %1363 = vmatprep.subr.mxu0 0.0
        %1364 = vmatpush2.msra.mxu0 0.0
        %1365 = vmatprep.mubr.f32.mxu0 0.0
        %1366 = vmatmul.mubr.f32.gmra.mxu0 %v1296
        %v1367 = vpop.f32.mrf.mxu0
        %v1368 = vadd.f32 0.0, %v1367
        %v1369 = vpop.f32.mrf.mxu0
        %1370 = vmatprep.mubr.f32.mxu0 0.0
        %1371 = vmatmul.mubr.f32.gmra.mxu0 %v1299
        %v1372 = vpop.f32.mrf.mxu0
        %v1373 = vadd.f32 0.0, %v1372
        %v1374 = vpop.f32.mrf.mxu0
        %1375 = vdwg.mxu0
        %1378 = vrot.lane.b32.xlu0 %v1368, 64
        %v1379 = vpop.permute.xlu0 %1378
        %1380 = vrot.lane.b32.xlu0 %v1373, 64
        %v1381 = vpop.permute.xlu0 %1380
        %vm1384 = vcmask 785920
        %1385 = vst.msk [vmem:[#allocation2] sm:$0xff] %vm1384, %v1379
        %1386 = vst.msk [vmem:[#allocation2 + $0x8] sm:$0xff] %vm1384, %v1381
        %1387 = vrot.lane.b32.xlu0 %v656, 32
        %v1388 = vpop.permute.xlu0 %1387
        %1389 = vrot.lane.b32.xlu0 %v662, 32
        %v1390 = vpop.permute.xlu0 %1389
        %1391 = vrot.lane.b32.xlu0 %v658, 32
        %v1392 = vpop.permute.xlu0 %1391
        %1393 = vrot.lane.b32.xlu0 %v664, 32
        %v1394 = vpop.permute.xlu0 %1393
        %v1395 = vsel %vm763, %v1388, 0
        %v1397 = vsel %vm763, %v1390, 0
        %v1399 = vsel %vm763, %v1392, 0
        %v1401 = vsel %vm763, %v1394, 0
        %1403 = vmatprep.subr.mxu0 0.0
        %1404 = vmatpush1.xpose.msra.mxu0 0.0
        %1405 = vmatprep.subr.mxu0 0.0
        %1406 = vmatpush1.xpose.msra.mxu0 0.0
        %1407 = vmatprep.subr.mxu0 0.0
        %1408 = vmatpush1.xpose.msra.mxu0 0.0
        %1409 = vmatprep.subr.mxu0 0.0
        %1410 = vmatpush1.xpose.msra.mxu0 0.0
        %1411 = vmatprep.subr.mxu0 0.0
        %1412 = vmatpush1.xpose.msra.mxu0 0.0
        %1413 = vmatprep.subr.mxu0 0.0
        %1414 = vmatpush1.xpose.msra.mxu0 0.0
        %1415 = vmatprep.subr.mxu0 0.0
        %1416 = vmatpush1.xpose.msra.mxu0 0.0
        %1417 = vmatprep.subr.mxu0 0.0
        %1418 = vmatpush1.xpose.msra.mxu0 0.0
        %1419 = vmatprep.subr.mxu0 0.0
        %1420 = vmatpush1.xpose.msra.mxu0 0.0
        %1421 = vmatprep.subr.mxu0 0.0
        %1422 = vmatpush1.xpose.msra.mxu0 0.0
        %1423 = vmatprep.subr.mxu0 0.0
        %1424 = vmatpush1.xpose.msra.mxu0 0.0
        %1425 = vmatprep.subr.mxu0 0.0
        %1426 = vmatpush1.xpose.msra.mxu0 0.0
        %1427 = vmatprep.subr.mxu0 0.0
        %1428 = vmatpush1.xpose.msra.mxu0 0.0
        %1429 = vmatprep.subr.mxu0 0.0
        %1430 = vmatpush1.xpose.msra.mxu0 0.0
        %1431 = vmatprep.subr.mxu0 0.0
        %1432 = vmatpush1.xpose.msra.mxu0 %v1401
        %1433 = vmatprep.subr.mxu0 0.0
        %1434 = vmatpush1.xpose.msra.mxu0 %v1399
        %1435 = vmatprep.subr.mxu0 0.0
        %1436 = vmatpush2.xpose.msra.mxu0 0.0
        %1437 = vmatprep.subr.mxu0 0.0
        %1438 = vmatpush2.xpose.msra.mxu0 0.0
        %1439 = vmatprep.subr.mxu0 0.0
        %1440 = vmatpush2.xpose.msra.mxu0 0.0
        %1441 = vmatprep.subr.mxu0 0.0
        %1442 = vmatpush2.xpose.msra.mxu0 0.0
        %1443 = vmatprep.subr.mxu0 0.0
        %1444 = vmatpush2.xpose.msra.mxu0 0.0
        %1445 = vmatprep.subr.mxu0 0.0
        %1446 = vmatpush2.xpose.msra.mxu0 0.0
        %1447 = vmatprep.subr.mxu0 0.0
        %1448 = vmatpush2.xpose.msra.mxu0 0.0
        %1449 = vmatprep.subr.mxu0 0.0
        %1450 = vmatpush2.xpose.msra.mxu0 0.0
        %1451 = vmatprep.subr.mxu0 0.0
        %1452 = vmatpush2.xpose.msra.mxu0 0.0
        %1453 = vmatprep.subr.mxu0 0.0
        %1454 = vmatpush2.xpose.msra.mxu0 0.0
        %1455 = vmatprep.subr.mxu0 0.0
        %1456 = vmatpush2.xpose.msra.mxu0 0.0
        %1457 = vmatprep.subr.mxu0 0.0
        %1458 = vmatpush2.xpose.msra.mxu0 0.0
        %1459 = vmatprep.subr.mxu0 0.0
        %1460 = vmatpush2.xpose.msra.mxu0 0.0
        %1461 = vmatprep.subr.mxu0 0.0
        %1462 = vmatpush2.xpose.msra.mxu0 0.0
        %1463 = vmatprep.subr.mxu0 0.0
        %1464 = vmatpush2.xpose.msra.mxu0 0.0
        %1465 = vmatprep.subr.mxu0 0.0
        %1466 = vmatpush2.xpose.msra.mxu0 0.0
        %1467 = vmatprep.mubr.f32.mxu0 0.0
        %1468 = vmatmul.mubr.f32.gmra.mxu0 %v1395
        %v1469 = vpop.f32.mrf.mxu0
        %v1470 = vadd.f32 0.0, %v1469
        %v1471 = vpop.f32.mrf.mxu0
        %1472 = vmatprep.mubr.f32.mxu0 0.0
        %1473 = vmatmul.mubr.f32.gmra.mxu0 %v1397
        %v1474 = vpop.f32.mrf.mxu0
        %v1475 = vadd.f32 0.0, %v1474
        %v1476 = vpop.f32.mrf.mxu0
        %1477 = vdwg.mxu0
        %v1478 = vmul.f32 %v1470, 0.17677669
        %v1479 = vmul.f32 %v1475, 0.17677669
        %v1480 = vsel %vm853, %v1478, -inf
        %1481 = vmax.xlane.f32.xlu0 %v1480
        %v1482 = vpop.xlane.xlu0 %1481
        %v1483 = vsel %vm853, %v1479, -inf
        %1484 = vmax.xlane.f32.xlu0 %v1483
        %v1485 = vpop.xlane.xlu0 %1484
        %v1486 = vsub.f32 %v1478, %v1482
        %v1487 = vsub.f32 %v1479, %v1485
        %v1488 = vmul.f32 %v1486, 1.442695
        %v1489 = vpow.pop %v1488
        %v1490 = vmul.f32 %v1487, 1.442695
        %v1491 = vpow.pop %v1490
        %v1492 = vsel %vm853, %v1489, 0.0
        %1493 = vadd.xlane.f32.xlu0 %v1492
        %v1494 = vpop.xlane.xlu0 %1493
        %v1495 = vsel %vm853, %v1491, 0.0
        %1496 = vadd.xlane.f32.xlu0 %v1495
        %v1497 = vpop.xlane.xlu0 %1496
        %v1498 = vrcp.pop %v1494
        %v1499 = vrcp.pop %v1497
        %v1500 = vmul.f32 %v1489, %v1498
        %v1501 = vmul.f32 %v1491, %v1499
        %1502 = vrot.lane.b32.xlu0 %v745, 32
        %v1503 = vpop.permute.xlu0 %1502
        %1504 = vrot.lane.b32.xlu0 %v750, 32
        %v1505 = vpop.permute.xlu0 %1504
        %v1509 = vsel %vm853, %v1500, 0
        %v1512 = vsel %vm853, %v1501, 0
        %1514 = vmatprep.subr.mxu0 0.0
        %1515 = vmatpush1.msra.mxu0 0.0
        %1516 = vmatprep.subr.mxu0 0.0
        %1517 = vmatpush1.msra.mxu0 0.0
        %1518 = vmatprep.subr.mxu0 0.0
        %1519 = vmatpush1.msra.mxu0 0.0
        %1520 = vmatprep.subr.mxu0 0.0
        %1521 = vmatpush1.msra.mxu0 0.0
        %1522 = vmatprep.subr.mxu0 0.0
        %1523 = vmatpush1.msra.mxu0 0.0
        %1524 = vmatprep.subr.mxu0 0.0
        %1525 = vmatpush1.msra.mxu0 0.0
        %1526 = vmatprep.subr.mxu0 0.0
        %1527 = vmatpush1.msra.mxu0 0.0
        %1528 = vmatprep.subr.mxu0 0.0
        %1529 = vmatpush1.msra.mxu0 0.0
        %1530 = vmatprep.subr.mxu0 0.0
        %1531 = vmatpush1.msra.mxu0 0.0
        %1532 = vmatprep.subr.mxu0 0.0
        %1533 = vmatpush1.msra.mxu0 0.0
        %1534 = vmatprep.subr.mxu0 0.0
        %1535 = vmatpush1.msra.mxu0 0.0
        %1536 = vmatprep.subr.mxu0 0.0
        %1537 = vmatpush1.msra.mxu0 0.0
        %1538 = vmatprep.subr.mxu0 0.0
        %1539 = vmatpush1.msra.mxu0 0.0
        %1540 = vmatprep.subr.mxu0 0.0
        %1541 = vmatpush1.msra.mxu0 0.0
        %1542 = vmatprep.subr.mxu0 0.0
        %1543 = vmatpush1.msra.mxu0 %v1505
        %1544 = vmatprep.subr.mxu0 0.0
        %1545 = vmatpush1.msra.mxu0 %v1503
        %1546 = vmatprep.subr.mxu0 0.0
        %1547 = vmatpush2.msra.mxu0 0.0
        %1548 = vmatprep.subr.mxu0 0.0
        %1549 = vmatpush2.msra.mxu0 0.0
        %1550 = vmatprep.subr.mxu0 0.0
        %1551 = vmatpush2.msra.mxu0 0.0
        %1552 = vmatprep.subr.mxu0 0.0
        %1553 = vmatpush2.msra.mxu0 0.0
        %1554 = vmatprep.subr.mxu0 0.0
        %1555 = vmatpush2.msra.mxu0 0.0
        %1556 = vmatprep.subr.mxu0 0.0
        %1557 = vmatpush2.msra.mxu0 0.0
        %1558 = vmatprep.subr.mxu0 0.0
        %1559 = vmatpush2.msra.mxu0 0.0
        %1560 = vmatprep.subr.mxu0 0.0
        %1561 = vmatpush2.msra.mxu0 0.0
        %1562 = vmatprep.subr.mxu0 0.0
        %1563 = vmatpush2.msra.mxu0 0.0
        %1564 = vmatprep.subr.mxu0 0.0
        %1565 = vmatpush2.msra.mxu0 0.0
        %1566 = vmatprep.subr.mxu0 0.0
        %1567 = vmatpush2.msra.mxu0 0.0
        %1568 = vmatprep.subr.mxu0 0.0
        %1569 = vmatpush2.msra.mxu0 0.0
        %1570 = vmatprep.subr.mxu0 0.0
        %1571 = vmatpush2.msra.mxu0 0.0
        %1572 = vmatprep.subr.mxu0 0.0
        %1573 = vmatpush2.msra.mxu0 0.0
        %1574 = vmatprep.subr.mxu0 0.0
        %1575 = vmatpush2.msra.mxu0 0.0
        %1576 = vmatprep.subr.mxu0 0.0
        %1577 = vmatpush2.msra.mxu0 0.0
        %1578 = vmatprep.mubr.f32.mxu0 0.0
        %1579 = vmatmul.mubr.f32.gmra.mxu0 %v1509
        %v1580 = vpop.f32.mrf.mxu0
        %v1581 = vadd.f32 0.0, %v1580
        %v1582 = vpop.f32.mrf.mxu0
        %1583 = vmatprep.mubr.f32.mxu0 0.0
        %1584 = vmatmul.mubr.f32.gmra.mxu0 %v1512
        %v1585 = vpop.f32.mrf.mxu0
        %v1586 = vadd.f32 0.0, %v1585
        %v1587 = vpop.f32.mrf.mxu0
        %1588 = vdwg.mxu0
        %1591 = vrot.lane.b32.xlu0 %v1581, 96
        %v1592 = vpop.permute.xlu0 %1591
        %1593 = vrot.lane.b32.xlu0 %v1586, 96
        %v1594 = vpop.permute.xlu0 %1593
        %vm1597 = vcmask 1048320
        %1598 = vst.msk [vmem:[#allocation2] sm:$0xff] %vm1597, %v1592
        %1599 = vst.msk [vmem:[#allocation2 + $0x8] sm:$0xff] %vm1597, %v1594
        %v1601 = vsel %vm763, %v668, 0
        %v1604 = vsel %vm763, %v674, 0
        %v1607 = vsel %vm763, %v670, 0
        %v1610 = vsel %vm763, %v676, 0
        %1612 = vmatprep.subr.mxu0 0.0
        %1613 = vmatpush1.xpose.msra.mxu0 0.0
        %1614 = vmatprep.subr.mxu0 0.0
        %1615 = vmatpush1.xpose.msra.mxu0 0.0
        %1616 = vmatprep.subr.mxu0 0.0
        %1617 = vmatpush1.xpose.msra.mxu0 0.0
        %1618 = vmatprep.subr.mxu0 0.0
        %1619 = vmatpush1.xpose.msra.mxu0 0.0
        %1620 = vmatprep.subr.mxu0 0.0
        %1621 = vmatpush1.xpose.msra.mxu0 0.0
        %1622 = vmatprep.subr.mxu0 0.0
        %1623 = vmatpush1.xpose.msra.mxu0 0.0
        %1624 = vmatprep.subr.mxu0 0.0
        %1625 = vmatpush1.xpose.msra.mxu0 0.0
        %1626 = vmatprep.subr.mxu0 0.0
        %1627 = vmatpush1.xpose.msra.mxu0 0.0
        %1628 = vmatprep.subr.mxu0 0.0
        %1629 = vmatpush1.xpose.msra.mxu0 0.0
        %1630 = vmatprep.subr.mxu0 0.0
        %1631 = vmatpush1.xpose.msra.mxu0 0.0
        %1632 = vmatprep.subr.mxu0 0.0
        %1633 = vmatpush1.xpose.msra.mxu0 0.0
        %1634 = vmatprep.subr.mxu0 0.0
        %1635 = vmatpush1.xpose.msra.mxu0 0.0
        %1636 = vmatprep.subr.mxu0 0.0
        %1637 = vmatpush1.xpose.msra.mxu0 0.0
        %1638 = vmatprep.subr.mxu0 0.0
        %1639 = vmatpush1.xpose.msra.mxu0 0.0
        %1640 = vmatprep.subr.mxu0 0.0
        %1641 = vmatpush1.xpose.msra.mxu0 %v1610
        %1642 = vmatprep.subr.mxu0 0.0
        %1643 = vmatpush1.xpose.msra.mxu0 %v1607
        %1644 = vmatprep.subr.mxu0 0.0
        %1645 = vmatpush2.xpose.msra.mxu0 0.0
        %1646 = vmatprep.subr.mxu0 0.0
        %1647 = vmatpush2.xpose.msra.mxu0 0.0
        %1648 = vmatprep.subr.mxu0 0.0
        %1649 = vmatpush2.xpose.msra.mxu0 0.0
        %1650 = vmatprep.subr.mxu0 0.0
        %1651 = vmatpush2.xpose.msra.mxu0 0.0
        %1652 = vmatprep.subr.mxu0 0.0
        %1653 = vmatpush2.xpose.msra.mxu0 0.0
        %1654 = vmatprep.subr.mxu0 0.0
        %1655 = vmatpush2.xpose.msra.mxu0 0.0
        %1656 = vmatprep.subr.mxu0 0.0
        %1657 = vmatpush2.xpose.msra.mxu0 0.0
        %1658 = vmatprep.subr.mxu0 0.0
        %1659 = vmatpush2.xpose.msra.mxu0 0.0
        %1660 = vmatprep.subr.mxu0 0.0
        %1661 = vmatpush2.xpose.msra.mxu0 0.0
        %1662 = vmatprep.subr.mxu0 0.0
        %1663 = vmatpush2.xpose.msra.mxu0 0.0
        %1664 = vmatprep.subr.mxu0 0.0
        %1665 = vmatpush2.xpose.msra.mxu0 0.0
        %1666 = vmatprep.subr.mxu0 0.0
        %1667 = vmatpush2.xpose.msra.mxu0 0.0
        %1668 = vmatprep.subr.mxu0 0.0
        %1669 = vmatpush2.xpose.msra.mxu0 0.0
        %1670 = vmatprep.subr.mxu0 0.0
        %1671 = vmatpush2.xpose.msra.mxu0 0.0
        %1672 = vmatprep.subr.mxu0 0.0
        %1673 = vmatpush2.xpose.msra.mxu0 0.0
        %1674 = vmatprep.subr.mxu0 0.0
        %1675 = vmatpush2.xpose.msra.mxu0 0.0
        %1676 = vmatprep.mubr.f32.mxu0 0.0
        %1677 = vmatmul.mubr.f32.gmra.mxu0 %v1601
        %v1678 = vpop.f32.mrf.mxu0
        %v1679 = vadd.f32 0.0, %v1678
        %v1680 = vpop.f32.mrf.mxu0
        %1681 = vmatprep.mubr.f32.mxu0 0.0
        %1682 = vmatmul.mubr.f32.gmra.mxu0 %v1604
        %v1683 = vpop.f32.mrf.mxu0
        %v1684 = vadd.f32 0.0, %v1683
        %v1685 = vpop.f32.mrf.mxu0
        %1686 = vdwg.mxu0
        %v1687 = vmul.f32 %v1679, 0.17677669
        %v1688 = vmul.f32 %v1684, 0.17677669
        %v1689 = vsel %vm853, %v1687, -inf
        %1690 = vmax.xlane.f32.xlu0 %v1689
        %v1691 = vpop.xlane.xlu0 %1690
        %v1692 = vsel %vm853, %v1688, -inf
        %1693 = vmax.xlane.f32.xlu0 %v1692
        %v1694 = vpop.xlane.xlu0 %1693
        %v1695 = vsub.f32 %v1687, %v1691
        %v1696 = vsub.f32 %v1688, %v1694
        %v1697 = vmul.f32 %v1695, 1.442695
        %v1698 = vpow.pop %v1697
        %v1699 = vmul.f32 %v1696, 1.442695
        %v1700 = vpow.pop %v1699
        %v1701 = vsel %vm853, %v1698, 0.0
        %1702 = vadd.xlane.f32.xlu0 %v1701
        %v1703 = vpop.xlane.xlu0 %1702
        %v1704 = vsel %vm853, %v1700, 0.0
        %1705 = vadd.xlane.f32.xlu0 %v1704
        %v1706 = vpop.xlane.xlu0 %1705
        %v1707 = vrcp.pop %v1703
        %v1708 = vrcp.pop %v1706
        %v1709 = vmul.f32 %v1698, %v1707
        %v1710 = vmul.f32 %v1700, %v1708
        %v1712 = vsel %vm853, %v1709, 0
        %v1715 = vsel %vm853, %v1710, 0
        %1717 = vmatprep.subr.mxu0 0.0
        %1718 = vmatpush1.msra.mxu0 0.0
        %1719 = vmatprep.subr.mxu0 0.0
        %1720 = vmatpush1.msra.mxu0 0.0
        %1721 = vmatprep.subr.mxu0 0.0
        %1722 = vmatpush1.msra.mxu0 0.0
        %1723 = vmatprep.subr.mxu0 0.0
        %1724 = vmatpush1.msra.mxu0 0.0
        %1725 = vmatprep.subr.mxu0 0.0
        %1726 = vmatpush1.msra.mxu0 0.0
        %1727 = vmatprep.subr.mxu0 0.0
        %1728 = vmatpush1.msra.mxu0 0.0
        %1729 = vmatprep.subr.mxu0 0.0
        %1730 = vmatpush1.msra.mxu0 0.0
        %1731 = vmatprep.subr.mxu0 0.0
        %1732 = vmatpush1.msra.mxu0 0.0
        %1733 = vmatprep.subr.mxu0 0.0
        %1734 = vmatpush1.msra.mxu0 0.0
        %1735 = vmatprep.subr.mxu0 0.0
        %1736 = vmatpush1.msra.mxu0 0.0
        %1737 = vmatprep.subr.mxu0 0.0
        %1738 = vmatpush1.msra.mxu0 0.0
        %1739 = vmatprep.subr.mxu0 0.0
        %1740 = vmatpush1.msra.mxu0 0.0
        %1741 = vmatprep.subr.mxu0 0.0
        %1742 = vmatpush1.msra.mxu0 0.0
        %1743 = vmatprep.subr.mxu0 0.0
        %1744 = vmatpush1.msra.mxu0 0.0
        %1745 = vmatprep.subr.mxu0 0.0
        %1746 = vmatpush1.msra.mxu0 %v760
        %1747 = vmatprep.subr.mxu0 0.0
        %1748 = vmatpush1.msra.mxu0 %v755
        %1749 = vmatprep.subr.mxu0 0.0
        %1750 = vmatpush2.msra.mxu0 0.0
        %1751 = vmatprep.subr.mxu0 0.0
        %1752 = vmatpush2.msra.mxu0 0.0
        %1753 = vmatprep.subr.mxu0 0.0
        %1754 = vmatpush2.msra.mxu0 0.0
        %1755 = vmatprep.subr.mxu0 0.0
        %1756 = vmatpush2.msra.mxu0 0.0
        %1757 = vmatprep.subr.mxu0 0.0
        %1758 = vmatpush2.msra.mxu0 0.0
        %1759 = vmatprep.subr.mxu0 0.0
        %1760 = vmatpush2.msra.mxu0 0.0
        %1761 = vmatprep.subr.mxu0 0.0
        %1762 = vmatpush2.msra.mxu0 0.0
        %1763 = vmatprep.subr.mxu0 0.0
        %1764 = vmatpush2.msra.mxu0 0.0
        %1765 = vmatprep.subr.mxu0 0.0
        %1766 = vmatpush2.msra.mxu0 0.0
        %1767 = vmatprep.subr.mxu0 0.0
        %1768 = vmatpush2.msra.mxu0 0.0
        %1769 = vmatprep.subr.mxu0 0.0
        %1770 = vmatpush2.msra.mxu0 0.0
        %1771 = vmatprep.subr.mxu0 0.0
        %1772 = vmatpush2.msra.mxu0 0.0
        %1773 = vmatprep.subr.mxu0 0.0
        %1774 = vmatpush2.msra.mxu0 0.0
        %1775 = vmatprep.subr.mxu0 0.0
        %1776 = vmatpush2.msra.mxu0 0.0
        %1777 = vmatprep.subr.mxu0 0.0
        %1778 = vmatpush2.msra.mxu0 0.0
        %1779 = vmatprep.subr.mxu0 0.0
        %1780 = vmatpush2.msra.mxu0 0.0
        %1781 = vmatprep.mubr.f32.mxu0 0.0
        %1782 = vmatmul.mubr.f32.gmra.mxu0 %v1712
        %v1783 = vpop.f32.mrf.mxu0
        %v1784 = vadd.f32 0.0, %v1783
        %v1785 = vpop.f32.mrf.mxu0
        %1786 = vmatprep.mubr.f32.mxu0 0.0
        %1787 = vmatmul.mubr.f32.gmra.mxu0 %v1715
        %v1788 = vpop.f32.mrf.mxu0
        %v1789 = vadd.f32 0.0, %v1788
        %v1790 = vpop.f32.mrf.mxu0
        %1791 = vdwg.mxu0
        %1792 = vst.msk [vmem:[#allocation2 + $0x10] sm:$0xff] %vm763, %v1784
        %1793 = vst.msk [vmem:[#allocation2 + $0x18] sm:$0xff] %vm763, %v1789
        %1794 = vrot.lane.b32.xlu0 %v668, 96
        %v1795 = vpop.permute.xlu0 %1794
        %1796 = vrot.lane.b32.xlu0 %v674, 96
        %v1797 = vpop.permute.xlu0 %1796
        %1798 = vrot.lane.b32.xlu0 %v670, 96
        %v1799 = vpop.permute.xlu0 %1798
        %1800 = vrot.lane.b32.xlu0 %v676, 96
        %v1801 = vpop.permute.xlu0 %1800
        %v1802 = vsel %vm763, %v1795, 0
        %v1804 = vsel %vm763, %v1797, 0
        %v1806 = vsel %vm763, %v1799, 0
        %v1808 = vsel %vm763, %v1801, 0
        %1810 = vmatprep.subr.mxu0 0.0
        %1811 = vmatpush1.xpose.msra.mxu0 0.0
        %1812 = vmatprep.subr.mxu0 0.0
        %1813 = vmatpush1.xpose.msra.mxu0 0.0
        %1814 = vmatprep.subr.mxu0 0.0
        %1815 = vmatpush1.xpose.msra.mxu0 0.0
        %1816 = vmatprep.subr.mxu0 0.0
        %1817 = vmatpush1.xpose.msra.mxu0 0.0
        %1818 = vmatprep.subr.mxu0 0.0
        %1819 = vmatpush1.xpose.msra.mxu0 0.0
        %1820 = vmatprep.subr.mxu0 0.0
        %1821 = vmatpush1.xpose.msra.mxu0 0.0
        %1822 = vmatprep.subr.mxu0 0.0
        %1823 = vmatpush1.xpose.msra.mxu0 0.0
        %1824 = vmatprep.subr.mxu0 0.0
        %1825 = vmatpush1.xpose.msra.mxu0 0.0
        %1826 = vmatprep.subr.mxu0 0.0
        %1827 = vmatpush1.xpose.msra.mxu0 0.0
        %1828 = vmatprep.subr.mxu0 0.0
        %1829 = vmatpush1.xpose.msra.mxu0 0.0
        %1830 = vmatprep.subr.mxu0 0.0
        %1831 = vmatpush1.xpose.msra.mxu0 0.0
        %1832 = vmatprep.subr.mxu0 0.0
        %1833 = vmatpush1.xpose.msra.mxu0 0.0
        %1834 = vmatprep.subr.mxu0 0.0
        %1835 = vmatpush1.xpose.msra.mxu0 0.0
        %1836 = vmatprep.subr.mxu0 0.0
        %1837 = vmatpush1.xpose.msra.mxu0 0.0
        %1838 = vmatprep.subr.mxu0 0.0
        %1839 = vmatpush1.xpose.msra.mxu0 %v1808
        %1840 = vmatprep.subr.mxu0 0.0
        %1841 = vmatpush1.xpose.msra.mxu0 %v1806
        %1842 = vmatprep.subr.mxu0 0.0
        %1843 = vmatpush2.xpose.msra.mxu0 0.0
        %1844 = vmatprep.subr.mxu0 0.0
        %1845 = vmatpush2.xpose.msra.mxu0 0.0
        %1846 = vmatprep.subr.mxu0 0.0
        %1847 = vmatpush2.xpose.msra.mxu0 0.0
        %1848 = vmatprep.subr.mxu0 0.0
        %1849 = vmatpush2.xpose.msra.mxu0 0.0
        %1850 = vmatprep.subr.mxu0 0.0
        %1851 = vmatpush2.xpose.msra.mxu0 0.0
        %1852 = vmatprep.subr.mxu0 0.0
        %1853 = vmatpush2.xpose.msra.mxu0 0.0
        %1854 = vmatprep.subr.mxu0 0.0
        %1855 = vmatpush2.xpose.msra.mxu0 0.0
        %1856 = vmatprep.subr.mxu0 0.0
        %1857 = vmatpush2.xpose.msra.mxu0 0.0
        %1858 = vmatprep.subr.mxu0 0.0
        %1859 = vmatpush2.xpose.msra.mxu0 0.0
        %1860 = vmatprep.subr.mxu0 0.0
        %1861 = vmatpush2.xpose.msra.mxu0 0.0
        %1862 = vmatprep.subr.mxu0 0.0
        %1863 = vmatpush2.xpose.msra.mxu0 0.0
        %1864 = vmatprep.subr.mxu0 0.0
        %1865 = vmatpush2.xpose.msra.mxu0 0.0
        %1866 = vmatprep.subr.mxu0 0.0
        %1867 = vmatpush2.xpose.msra.mxu0 0.0
        %1868 = vmatprep.subr.mxu0 0.0
        %1869 = vmatpush2.xpose.msra.mxu0 0.0
        %1870 = vmatprep.subr.mxu0 0.0
        %1871 = vmatpush2.xpose.msra.mxu0 0.0
        %1872 = vmatprep.subr.mxu0 0.0
        %1873 = vmatpush2.xpose.msra.mxu0 0.0
        %1874 = vmatprep.mubr.f32.mxu0 0.0
        %1875 = vmatmul.mubr.f32.gmra.mxu0 %v1802
        %v1876 = vpop.f32.mrf.mxu0
        %v1877 = vadd.f32 0.0, %v1876
        %v1878 = vpop.f32.mrf.mxu0
        %1879 = vmatprep.mubr.f32.mxu0 0.0
        %1880 = vmatmul.mubr.f32.gmra.mxu0 %v1804
        %v1881 = vpop.f32.mrf.mxu0
        %v1882 = vadd.f32 0.0, %v1881
        %v1883 = vpop.f32.mrf.mxu0
        %1884 = vdwg.mxu0
        %v1885 = vmul.f32 %v1877, 0.17677669
        %v1886 = vmul.f32 %v1882, 0.17677669
        %v1887 = vsel %vm853, %v1885, -inf
        %1888 = vmax.xlane.f32.xlu0 %v1887
        %v1889 = vpop.xlane.xlu0 %1888
        %v1890 = vsel %vm853, %v1886, -inf
        %1891 = vmax.xlane.f32.xlu0 %v1890
        %v1892 = vpop.xlane.xlu0 %1891
        %v1893 = vsub.f32 %v1885, %v1889
        %v1894 = vsub.f32 %v1886, %v1892
        %v1895 = vmul.f32 %v1893, 1.442695
        %v1896 = vpow.pop %v1895
        %v1897 = vmul.f32 %v1894, 1.442695
        %v1898 = vpow.pop %v1897
        %v1899 = vsel %vm853, %v1896, 0.0
        %1900 = vadd.xlane.f32.xlu0 %v1899
        %v1901 = vpop.xlane.xlu0 %1900
        %v1902 = vsel %vm853, %v1898, 0.0
        %1903 = vadd.xlane.f32.xlu0 %v1902
        %v1904 = vpop.xlane.xlu0 %1903
        %v1905 = vrcp.pop %v1901
        %v1906 = vrcp.pop %v1904
        %v1907 = vmul.f32 %v1896, %v1905
        %v1908 = vmul.f32 %v1898, %v1906
        %1911 = vrot.lane.b32.xlu0 %v755, 96
        %v1912 = vpop.permute.xlu0 %1911
        %1913 = vrot.lane.b32.xlu0 %v760, 96
        %v1914 = vpop.permute.xlu0 %1913
        %v1918 = vsel %vm853, %v1907, 0
        %v1921 = vsel %vm853, %v1908, 0
        %1923 = vmatprep.subr.mxu0 0.0
        %1924 = vmatpush1.msra.mxu0 0.0
        %1925 = vmatprep.subr.mxu0 0.0
        %1926 = vmatpush1.msra.mxu0 0.0
        %1927 = vmatprep.subr.mxu0 0.0
        %1928 = vmatpush1.msra.mxu0 0.0
        %1929 = vmatprep.subr.mxu0 0.0
        %1930 = vmatpush1.msra.mxu0 0.0
        %1931 = vmatprep.subr.mxu0 0.0
        %1932 = vmatpush1.msra.mxu0 0.0
        %1933 = vmatprep.subr.mxu0 0.0
        %1934 = vmatpush1.msra.mxu0 0.0
        %1935 = vmatprep.subr.mxu0 0.0
        %1936 = vmatpush1.msra.mxu0 0.0
        %1937 = vmatprep.subr.mxu0 0.0
        %1938 = vmatpush1.msra.mxu0 0.0
        %1939 = vmatprep.subr.mxu0 0.0
        %1940 = vmatpush1.msra.mxu0 0.0
        %1941 = vmatprep.subr.mxu0 0.0
        %1942 = vmatpush1.msra.mxu0 0.0
        %1943 = vmatprep.subr.mxu0 0.0
        %1944 = vmatpush1.msra.mxu0 0.0
        %1945 = vmatprep.subr.mxu0 0.0
        %1946 = vmatpush1.msra.mxu0 0.0
        %1947 = vmatprep.subr.mxu0 0.0
        %1948 = vmatpush1.msra.mxu0 0.0
        %1949 = vmatprep.subr.mxu0 0.0
        %1950 = vmatpush1.msra.mxu0 0.0
        %1951 = vmatprep.subr.mxu0 0.0
        %1952 = vmatpush1.msra.mxu0 %v1914
        %1953 = vmatprep.subr.mxu0 0.0
        %1954 = vmatpush1.msra.mxu0 %v1912
        %1955 = vmatprep.subr.mxu0 0.0
        %1956 = vmatpush2.msra.mxu0 0.0
        %1957 = vmatprep.subr.mxu0 0.0
        %1958 = vmatpush2.msra.mxu0 0.0
        %1959 = vmatprep.subr.mxu0 0.0
        %1960 = vmatpush2.msra.mxu0 0.0
        %1961 = vmatprep.subr.mxu0 0.0
        %1962 = vmatpush2.msra.mxu0 0.0
        %1963 = vmatprep.subr.mxu0 0.0
        %1964 = vmatpush2.msra.mxu0 0.0
        %1965 = vmatprep.subr.mxu0 0.0
        %1966 = vmatpush2.msra.mxu0 0.0
        %1967 = vmatprep.subr.mxu0 0.0
        %1968 = vmatpush2.msra.mxu0 0.0
        %1969 = vmatprep.subr.mxu0 0.0
        %1970 = vmatpush2.msra.mxu0 0.0
        %1971 = vmatprep.subr.mxu0 0.0
        %1972 = vmatpush2.msra.mxu0 0.0
        %1973 = vmatprep.subr.mxu0 0.0
        %1974 = vmatpush2.msra.mxu0 0.0
        %1975 = vmatprep.subr.mxu0 0.0
        %1976 = vmatpush2.msra.mxu0 0.0
        %1977 = vmatprep.subr.mxu0 0.0
        %1978 = vmatpush2.msra.mxu0 0.0
        %1979 = vmatprep.subr.mxu0 0.0
        %1980 = vmatpush2.msra.mxu0 0.0
        %1981 = vmatprep.subr.mxu0 0.0
        %1982 = vmatpush2.msra.mxu0 0.0
        %1983 = vmatprep.subr.mxu0 0.0
        %1984 = vmatpush2.msra.mxu0 0.0
        %1985 = vmatprep.subr.mxu0 0.0
        %1986 = vmatpush2.msra.mxu0 0.0
        %1987 = vmatprep.mubr.f32.mxu0 0.0
        %1988 = vmatmul.mubr.f32.gmra.mxu0 %v1918
        %v1989 = vpop.f32.mrf.mxu0
        %v1990 = vadd.f32 0.0, %v1989
        %v1991 = vpop.f32.mrf.mxu0
        %1992 = vmatprep.mubr.f32.mxu0 0.0
        %1993 = vmatmul.mubr.f32.gmra.mxu0 %v1921
        %v1994 = vpop.f32.mrf.mxu0
        %v1995 = vadd.f32 0.0, %v1994
        %v1996 = vpop.f32.mrf.mxu0
        %1997 = vdwg.mxu0
        %2000 = vrot.lane.b32.xlu0 %v1990, 32
        %v2001 = vpop.permute.xlu0 %2000
        %2002 = vrot.lane.b32.xlu0 %v1995, 32
        %v2003 = vpop.permute.xlu0 %2002
        %2006 = vst.msk [vmem:[#allocation2 + $0x10] sm:$0xff] %vm1171, %v2001
        %2007 = vst.msk [vmem:[#allocation2 + $0x18] sm:$0xff] %vm1171, %v2003
        %2008 = vrot.lane.b32.xlu0 %v668, 64
        %v2009 = vpop.permute.xlu0 %2008
        %2010 = vrot.lane.b32.xlu0 %v674, 64
        %v2011 = vpop.permute.xlu0 %2010
        %2012 = vrot.lane.b32.xlu0 %v670, 64
        %v2013 = vpop.permute.xlu0 %2012
        %2014 = vrot.lane.b32.xlu0 %v676, 64
        %v2015 = vpop.permute.xlu0 %2014
        %v2016 = vsel %vm763, %v2009, 0
        %v2018 = vsel %vm763, %v2011, 0
        %v2020 = vsel %vm763, %v2013, 0
        %v2022 = vsel %vm763, %v2015, 0
        %2024 = vmatprep.subr.mxu0 0.0
        %2025 = vmatpush1.xpose.msra.mxu0 0.0
        %2026 = vmatprep.subr.mxu0 0.0
        %2027 = vmatpush1.xpose.msra.mxu0 0.0
        %2028 = vmatprep.subr.mxu0 0.0
        %2029 = vmatpush1.xpose.msra.mxu0 0.0
        %2030 = vmatprep.subr.mxu0 0.0
        %2031 = vmatpush1.xpose.msra.mxu0 0.0
        %2032 = vmatprep.subr.mxu0 0.0
        %2033 = vmatpush1.xpose.msra.mxu0 0.0
        %2034 = vmatprep.subr.mxu0 0.0
        %2035 = vmatpush1.xpose.msra.mxu0 0.0
        %2036 = vmatprep.subr.mxu0 0.0
        %2037 = vmatpush1.xpose.msra.mxu0 0.0
        %2038 = vmatprep.subr.mxu0 0.0
        %2039 = vmatpush1.xpose.msra.mxu0 0.0
        %2040 = vmatprep.subr.mxu0 0.0
        %2041 = vmatpush1.xpose.msra.mxu0 0.0
        %2042 = vmatprep.subr.mxu0 0.0
        %2043 = vmatpush1.xpose.msra.mxu0 0.0
        %2044 = vmatprep.subr.mxu0 0.0
        %2045 = vmatpush1.xpose.msra.mxu0 0.0
        %2046 = vmatprep.subr.mxu0 0.0
        %2047 = vmatpush1.xpose.msra.mxu0 0.0
        %2048 = vmatprep.subr.mxu0 0.0
        %2049 = vmatpush1.xpose.msra.mxu0 0.0
        %2050 = vmatprep.subr.mxu0 0.0
        %2051 = vmatpush1.xpose.msra.mxu0 0.0
        %2052 = vmatprep.subr.mxu0 0.0
        %2053 = vmatpush1.xpose.msra.mxu0 %v2022
        %2054 = vmatprep.subr.mxu0 0.0
        %2055 = vmatpush1.xpose.msra.mxu0 %v2020
        %2056 = vmatprep.subr.mxu0 0.0
        %2057 = vmatpush2.xpose.msra.mxu0 0.0
        %2058 = vmatprep.subr.mxu0 0.0
        %2059 = vmatpush2.xpose.msra.mxu0 0.0
        %2060 = vmatprep.subr.mxu0 0.0
        %2061 = vmatpush2.xpose.msra.mxu0 0.0
        %2062 = vmatprep.subr.mxu0 0.0
        %2063 = vmatpush2.xpose.msra.mxu0 0.0
        %2064 = vmatprep.subr.mxu0 0.0
        %2065 = vmatpush2.xpose.msra.mxu0 0.0
        %2066 = vmatprep.subr.mxu0 0.0
        %2067 = vmatpush2.xpose.msra.mxu0 0.0
        %2068 = vmatprep.subr.mxu0 0.0
        %2069 = vmatpush2.xpose.msra.mxu0 0.0
        %2070 = vmatprep.subr.mxu0 0.0
        %2071 = vmatpush2.xpose.msra.mxu0 0.0
        %2072 = vmatprep.subr.mxu0 0.0
        %2073 = vmatpush2.xpose.msra.mxu0 0.0
        %2074 = vmatprep.subr.mxu0 0.0
        %2075 = vmatpush2.xpose.msra.mxu0 0.0
        %2076 = vmatprep.subr.mxu0 0.0
        %2077 = vmatpush2.xpose.msra.mxu0 0.0
        %2078 = vmatprep.subr.mxu0 0.0
        %2079 = vmatpush2.xpose.msra.mxu0 0.0
        %2080 = vmatprep.subr.mxu0 0.0
        %2081 = vmatpush2.xpose.msra.mxu0 0.0
        %2082 = vmatprep.subr.mxu0 0.0
        %2083 = vmatpush2.xpose.msra.mxu0 0.0
        %2084 = vmatprep.subr.mxu0 0.0
        %2085 = vmatpush2.xpose.msra.mxu0 0.0
        %2086 = vmatprep.subr.mxu0 0.0
        %2087 = vmatpush2.xpose.msra.mxu0 0.0
        %2088 = vmatprep.mubr.f32.mxu0 0.0
        %2089 = vmatmul.mubr.f32.gmra.mxu0 %v2016
        %v2090 = vpop.f32.mrf.mxu0
        %v2091 = vadd.f32 0.0, %v2090
        %v2092 = vpop.f32.mrf.mxu0
        %2093 = vmatprep.mubr.f32.mxu0 0.0
        %2094 = vmatmul.mubr.f32.gmra.mxu0 %v2018
        %v2095 = vpop.f32.mrf.mxu0
        %v2096 = vadd.f32 0.0, %v2095
        %v2097 = vpop.f32.mrf.mxu0
        %2098 = vdwg.mxu0
        %v2099 = vmul.f32 %v2091, 0.17677669
        %v2100 = vmul.f32 %v2096, 0.17677669
        %v2101 = vsel %vm853, %v2099, -inf
        %2102 = vmax.xlane.f32.xlu0 %v2101
        %v2103 = vpop.xlane.xlu0 %2102
        %v2104 = vsel %vm853, %v2100, -inf
        %2105 = vmax.xlane.f32.xlu0 %v2104
        %v2106 = vpop.xlane.xlu0 %2105
        %v2107 = vsub.f32 %v2099, %v2103
        %v2108 = vsub.f32 %v2100, %v2106
        %v2109 = vmul.f32 %v2107, 1.442695
        %v2110 = vpow.pop %v2109
        %v2111 = vmul.f32 %v2108, 1.442695
        %v2112 = vpow.pop %v2111
        %v2113 = vsel %vm853, %v2110, 0.0
        %2114 = vadd.xlane.f32.xlu0 %v2113
        %v2115 = vpop.xlane.xlu0 %2114
        %v2116 = vsel %vm853, %v2112, 0.0
        %2117 = vadd.xlane.f32.xlu0 %v2116
        %v2118 = vpop.xlane.xlu0 %2117
        %v2119 = vrcp.pop %v2115
        %v2120 = vrcp.pop %v2118
        %v2121 = vmul.f32 %v2110, %v2119
        %v2122 = vmul.f32 %v2112, %v2120
        %2123 = vrot.lane.b32.xlu0 %v755, 64
        %v2124 = vpop.permute.xlu0 %2123
        %2125 = vrot.lane.b32.xlu0 %v760, 64
        %v2126 = vpop.permute.xlu0 %2125
        %v2130 = vsel %vm853, %v2121, 0
        %v2133 = vsel %vm853, %v2122, 0
        %2135 = vmatprep.subr.mxu0 0.0
        %2136 = vmatpush1.msra.mxu0 0.0
        %2137 = vmatprep.subr.mxu0 0.0
        %2138 = vmatpush1.msra.mxu0 0.0
        %2139 = vmatprep.subr.mxu0 0.0
        %2140 = vmatpush1.msra.mxu0 0.0
        %2141 = vmatprep.subr.mxu0 0.0
        %2142 = vmatpush1.msra.mxu0 0.0
        %2143 = vmatprep.subr.mxu0 0.0
        %2144 = vmatpush1.msra.mxu0 0.0
        %2145 = vmatprep.subr.mxu0 0.0
        %2146 = vmatpush1.msra.mxu0 0.0
        %2147 = vmatprep.subr.mxu0 0.0
        %2148 = vmatpush1.msra.mxu0 0.0
        %2149 = vmatprep.subr.mxu0 0.0
        %2150 = vmatpush1.msra.mxu0 0.0
        %2151 = vmatprep.subr.mxu0 0.0
        %2152 = vmatpush1.msra.mxu0 0.0
        %2153 = vmatprep.subr.mxu0 0.0
        %2154 = vmatpush1.msra.mxu0 0.0
        %2155 = vmatprep.subr.mxu0 0.0
        %2156 = vmatpush1.msra.mxu0 0.0
        %2157 = vmatprep.subr.mxu0 0.0
        %2158 = vmatpush1.msra.mxu0 0.0
        %2159 = vmatprep.subr.mxu0 0.0
        %2160 = vmatpush1.msra.mxu0 0.0
        %2161 = vmatprep.subr.mxu0 0.0
        %2162 = vmatpush1.msra.mxu0 0.0
        %2163 = vmatprep.subr.mxu0 0.0
        %2164 = vmatpush1.msra.mxu0 %v2126
        %2165 = vmatprep.subr.mxu0 0.0
        %2166 = vmatpush1.msra.mxu0 %v2124
        %2167 = vmatprep.subr.mxu0 0.0
        %2168 = vmatpush2.msra.mxu0 0.0
        %2169 = vmatprep.subr.mxu0 0.0
        %2170 = vmatpush2.msra.mxu0 0.0
        %2171 = vmatprep.subr.mxu0 0.0
        %2172 = vmatpush2.msra.mxu0 0.0
        %2173 = vmatprep.subr.mxu0 0.0
        %2174 = vmatpush2.msra.mxu0 0.0
        %2175 = vmatprep.subr.mxu0 0.0
        %2176 = vmatpush2.msra.mxu0 0.0
        %2177 = vmatprep.subr.mxu0 0.0
        %2178 = vmatpush2.msra.mxu0 0.0
        %2179 = vmatprep.subr.mxu0 0.0
        %2180 = vmatpush2.msra.mxu0 0.0
        %2181 = vmatprep.subr.mxu0 0.0
        %2182 = vmatpush2.msra.mxu0 0.0
        %2183 = vmatprep.subr.mxu0 0.0
        %2184 = vmatpush2.msra.mxu0 0.0
        %2185 = vmatprep.subr.mxu0 0.0
        %2186 = vmatpush2.msra.mxu0 0.0
        %2187 = vmatprep.subr.mxu0 0.0
        %2188 = vmatpush2.msra.mxu0 0.0
        %2189 = vmatprep.subr.mxu0 0.0
        %2190 = vmatpush2.msra.mxu0 0.0
        %2191 = vmatprep.subr.mxu0 0.0
        %2192 = vmatpush2.msra.mxu0 0.0
        %2193 = vmatprep.subr.mxu0 0.0
        %2194 = vmatpush2.msra.mxu0 0.0
        %2195 = vmatprep.subr.mxu0 0.0
        %2196 = vmatpush2.msra.mxu0 0.0
        %2197 = vmatprep.subr.mxu0 0.0
        %2198 = vmatpush2.msra.mxu0 0.0
        %2199 = vmatprep.mubr.f32.mxu0 0.0
        %2200 = vmatmul.mubr.f32.gmra.mxu0 %v2130
        %v2201 = vpop.f32.mrf.mxu0
        %v2202 = vadd.f32 0.0, %v2201
        %v2203 = vpop.f32.mrf.mxu0
        %2204 = vmatprep.mubr.f32.mxu0 0.0
        %2205 = vmatmul.mubr.f32.gmra.mxu0 %v2133
        %v2206 = vpop.f32.mrf.mxu0
        %v2207 = vadd.f32 0.0, %v2206
        %v2208 = vpop.f32.mrf.mxu0
        %2209 = vdwg.mxu0
        %2212 = vrot.lane.b32.xlu0 %v2202, 64
        %v2213 = vpop.permute.xlu0 %2212
        %2214 = vrot.lane.b32.xlu0 %v2207, 64
        %v2215 = vpop.permute.xlu0 %2214
        %2218 = vst.msk [vmem:[#allocation2 + $0x10] sm:$0xff] %vm1384, %v2213
        %2219 = vst.msk [vmem:[#allocation2 + $0x18] sm:$0xff] %vm1384, %v2215
        %2220 = vrot.lane.b32.xlu0 %v668, 32
        %v2221 = vpop.permute.xlu0 %2220
        %2222 = vrot.lane.b32.xlu0 %v674, 32
        %v2223 = vpop.permute.xlu0 %2222
        %2224 = vrot.lane.b32.xlu0 %v670, 32
        %v2225 = vpop.permute.xlu0 %2224
        %2226 = vrot.lane.b32.xlu0 %v676, 32
        %v2227 = vpop.permute.xlu0 %2226
        %v2228 = vsel %vm763, %v2221, 0
        %v2230 = vsel %vm763, %v2223, 0
        %v2232 = vsel %vm763, %v2225, 0
        %v2234 = vsel %vm763, %v2227, 0
        %2236 = vmatprep.subr.mxu0 0.0
        %2237 = vmatpush1.xpose.msra.mxu0 0.0
        %2238 = vmatprep.subr.mxu0 0.0
        %2239 = vmatpush1.xpose.msra.mxu0 0.0
        %2240 = vmatprep.subr.mxu0 0.0
        %2241 = vmatpush1.xpose.msra.mxu0 0.0
        %2242 = vmatprep.subr.mxu0 0.0
        %2243 = vmatpush1.xpose.msra.mxu0 0.0
        %2244 = vmatprep.subr.mxu0 0.0
        %2245 = vmatpush1.xpose.msra.mxu0 0.0
        %2246 = vmatprep.subr.mxu0 0.0
        %2247 = vmatpush1.xpose.msra.mxu0 0.0
        %2248 = vmatprep.subr.mxu0 0.0
        %2249 = vmatpush1.xpose.msra.mxu0 0.0
        %2250 = vmatprep.subr.mxu0 0.0
        %2251 = vmatpush1.xpose.msra.mxu0 0.0
        %2252 = vmatprep.subr.mxu0 0.0
        %2253 = vmatpush1.xpose.msra.mxu0 0.0
        %2254 = vmatprep.subr.mxu0 0.0
        %2255 = vmatpush1.xpose.msra.mxu0 0.0
        %2256 = vmatprep.subr.mxu0 0.0
        %2257 = vmatpush1.xpose.msra.mxu0 0.0
        %2258 = vmatprep.subr.mxu0 0.0
        %2259 = vmatpush1.xpose.msra.mxu0 0.0
        %2260 = vmatprep.subr.mxu0 0.0
        %2261 = vmatpush1.xpose.msra.mxu0 0.0
        %2262 = vmatprep.subr.mxu0 0.0
        %2263 = vmatpush1.xpose.msra.mxu0 0.0
        %2264 = vmatprep.subr.mxu0 0.0
        %2265 = vmatpush1.xpose.msra.mxu0 %v2234
        %2266 = vmatprep.subr.mxu0 0.0
        %2267 = vmatpush1.xpose.msra.mxu0 %v2232
        %2268 = vmatprep.subr.mxu0 0.0
        %2269 = vmatpush2.xpose.msra.mxu0 0.0
        %2270 = vmatprep.subr.mxu0 0.0
        %2271 = vmatpush2.xpose.msra.mxu0 0.0
        %2272 = vmatprep.subr.mxu0 0.0
        %2273 = vmatpush2.xpose.msra.mxu0 0.0
        %2274 = vmatprep.subr.mxu0 0.0
        %2275 = vmatpush2.xpose.msra.mxu0 0.0
        %2276 = vmatprep.subr.mxu0 0.0
        %2277 = vmatpush2.xpose.msra.mxu0 0.0
        %2278 = vmatprep.subr.mxu0 0.0
        %2279 = vmatpush2.xpose.msra.mxu0 0.0
        %2280 = vmatprep.subr.mxu0 0.0
        %2281 = vmatpush2.xpose.msra.mxu0 0.0
        %2282 = vmatprep.subr.mxu0 0.0
        %2283 = vmatpush2.xpose.msra.mxu0 0.0
        %2284 = vmatprep.subr.mxu0 0.0
        %2285 = vmatpush2.xpose.msra.mxu0 0.0
        %2286 = vmatprep.subr.mxu0 0.0
        %2287 = vmatpush2.xpose.msra.mxu0 0.0
        %2288 = vmatprep.subr.mxu0 0.0
        %2289 = vmatpush2.xpose.msra.mxu0 0.0
        %2290 = vmatprep.subr.mxu0 0.0
        %2291 = vmatpush2.xpose.msra.mxu0 0.0
        %2292 = vmatprep.subr.mxu0 0.0
        %2293 = vmatpush2.xpose.msra.mxu0 0.0
        %2294 = vmatprep.subr.mxu0 0.0
        %2295 = vmatpush2.xpose.msra.mxu0 0.0
        %2296 = vmatprep.subr.mxu0 0.0
        %2297 = vmatpush2.xpose.msra.mxu0 0.0
        %2298 = vmatprep.subr.mxu0 0.0
        %2299 = vmatpush2.xpose.msra.mxu0 0.0
        %2300 = vmatprep.mubr.f32.mxu0 0.0
        %2301 = vmatmul.mubr.f32.gmra.mxu0 %v2228
        %v2302 = vpop.f32.mrf.mxu0
        %v2303 = vadd.f32 0.0, %v2302
        %v2304 = vpop.f32.mrf.mxu0
        %2305 = vmatprep.mubr.f32.mxu0 0.0
        %2306 = vmatmul.mubr.f32.gmra.mxu0 %v2230
        %v2307 = vpop.f32.mrf.mxu0
        %v2308 = vadd.f32 0.0, %v2307
        %v2309 = vpop.f32.mrf.mxu0
        %2310 = vdwg.mxu0
        %v2311 = vmul.f32 %v2303, 0.17677669
        %v2312 = vmul.f32 %v2308, 0.17677669
        %v2313 = vsel %vm853, %v2311, -inf
        %2314 = vmax.xlane.f32.xlu0 %v2313
        %v2315 = vpop.xlane.xlu0 %2314
        %v2316 = vsel %vm853, %v2312, -inf
        %2317 = vmax.xlane.f32.xlu0 %v2316
        %v2318 = vpop.xlane.xlu0 %2317
        %v2319 = vsub.f32 %v2311, %v2315
        %v2320 = vsub.f32 %v2312, %v2318
        %v2321 = vmul.f32 %v2319, 1.442695
        %v2322 = vpow.pop %v2321
        %v2323 = vmul.f32 %v2320, 1.442695
        %v2324 = vpow.pop %v2323
        %v2325 = vsel %vm853, %v2322, 0.0
        %2326 = vadd.xlane.f32.xlu0 %v2325
        %v2327 = vpop.xlane.xlu0 %2326
        %v2328 = vsel %vm853, %v2324, 0.0
        %2329 = vadd.xlane.f32.xlu0 %v2328
        %v2330 = vpop.xlane.xlu0 %2329
        %v2331 = vrcp.pop %v2327
        %v2332 = vrcp.pop %v2330
        %v2333 = vmul.f32 %v2322, %v2331
        %v2334 = vmul.f32 %v2324, %v2332
        %2335 = vrot.lane.b32.xlu0 %v755, 32
        %v2336 = vpop.permute.xlu0 %2335
        %2337 = vrot.lane.b32.xlu0 %v760, 32
        %v2338 = vpop.permute.xlu0 %2337
        %v2342 = vsel %vm853, %v2333, 0
        %v2345 = vsel %vm853, %v2334, 0
        %2347 = vmatprep.subr.mxu0 0.0
        %2348 = vmatpush1.msra.mxu0 0.0
        %2349 = vmatprep.subr.mxu0 0.0
        %2350 = vmatpush1.msra.mxu0 0.0
        %2351 = vmatprep.subr.mxu0 0.0
        %2352 = vmatpush1.msra.mxu0 0.0
        %2353 = vmatprep.subr.mxu0 0.0
        %2354 = vmatpush1.msra.mxu0 0.0
        %2355 = vmatprep.subr.mxu0 0.0
        %2356 = vmatpush1.msra.mxu0 0.0
        %2357 = vmatprep.subr.mxu0 0.0
        %2358 = vmatpush1.msra.mxu0 0.0
        %2359 = vmatprep.subr.mxu0 0.0
        %2360 = vmatpush1.msra.mxu0 0.0
        %2361 = vmatprep.subr.mxu0 0.0
        %2362 = vmatpush1.msra.mxu0 0.0
        %2363 = vmatprep.subr.mxu0 0.0
        %2364 = vmatpush1.msra.mxu0 0.0
        %2365 = vmatprep.subr.mxu0 0.0
        %2366 = vmatpush1.msra.mxu0 0.0
        %2367 = vmatprep.subr.mxu0 0.0
        %2368 = vmatpush1.msra.mxu0 0.0
        %2369 = vmatprep.subr.mxu0 0.0
        %2370 = vmatpush1.msra.mxu0 0.0
        %2371 = vmatprep.subr.mxu0 0.0
        %2372 = vmatpush1.msra.mxu0 0.0
        %2373 = vmatprep.subr.mxu0 0.0
        %2374 = vmatpush1.msra.mxu0 0.0
        %2375 = vmatprep.subr.mxu0 0.0
        %2376 = vmatpush1.msra.mxu0 %v2338
        %2377 = vmatprep.subr.mxu0 0.0
        %2378 = vmatpush1.msra.mxu0 %v2336
        %2379 = vmatprep.subr.mxu0 0.0
        %2380 = vmatpush2.msra.mxu0 0.0
        %2381 = vmatprep.subr.mxu0 0.0
        %2382 = vmatpush2.msra.mxu0 0.0
        %2383 = vmatprep.subr.mxu0 0.0
        %2384 = vmatpush2.msra.mxu0 0.0
        %2385 = vmatprep.subr.mxu0 0.0
        %2386 = vmatpush2.msra.mxu0 0.0
        %2387 = vmatprep.subr.mxu0 0.0
        %2388 = vmatpush2.msra.mxu0 0.0
        %2389 = vmatprep.subr.mxu0 0.0
        %2390 = vmatpush2.msra.mxu0 0.0
        %2391 = vmatprep.subr.mxu0 0.0
        %2392 = vmatpush2.msra.mxu0 0.0
        %2393 = vmatprep.subr.mxu0 0.0
        %2394 = vmatpush2.msra.mxu0 0.0
        %2395 = vmatprep.subr.mxu0 0.0
        %2396 = vmatpush2.msra.mxu0 0.0
        %2397 = vmatprep.subr.mxu0 0.0
        %2398 = vmatpush2.msra.mxu0 0.0
        %2399 = vmatprep.subr.mxu0 0.0
        %2400 = vmatpush2.msra.mxu0 0.0
        %2401 = vmatprep.subr.mxu0 0.0
        %2402 = vmatpush2.msra.mxu0 0.0
        %2403 = vmatprep.subr.mxu0 0.0
        %2404 = vmatpush2.msra.mxu0 0.0
        %2405 = vmatprep.subr.mxu0 0.0
        %2406 = vmatpush2.msra.mxu0 0.0
        %2407 = vmatprep.subr.mxu0 0.0
        %2408 = vmatpush2.msra.mxu0 0.0
        %2409 = vmatprep.subr.mxu0 0.0
        %2410 = vmatpush2.msra.mxu0 0.0
        %2411 = vmatprep.mubr.f32.mxu0 0.0
        %2412 = vmatmul.mubr.f32.gmra.mxu0 %v2342
        %v2413 = vpop.f32.mrf.mxu0
        %v2414 = vadd.f32 0.0, %v2413
        %v2415 = vpop.f32.mrf.mxu0
        %2416 = vmatprep.mubr.f32.mxu0 0.0
        %2417 = vmatmul.mubr.f32.gmra.mxu0 %v2345
        %v2418 = vpop.f32.mrf.mxu0
        %v2419 = vadd.f32 0.0, %v2418
        %v2420 = vpop.f32.mrf.mxu0
        %2421 = vdwg.mxu0
        %2424 = vrot.lane.b32.xlu0 %v2414, 96
        %v2425 = vpop.permute.xlu0 %2424
        %2426 = vrot.lane.b32.xlu0 %v2419, 96
        %v2427 = vpop.permute.xlu0 %2426
        %2430 = vst.msk [vmem:[#allocation2 + $0x10] sm:$0xff] %vm1597, %v2425
        %2431 = vst.msk [vmem:[#allocation2 + $0x18] sm:$0xff] %vm1597, %v2427
        %v2432 = vld [vmem:[#allocation2] sm:$0xff]
        %v2433 = vld [vmem:[#allocation2 + $0x8] sm:$0xff]
        %v2434 = vld [vmem:[#allocation2 + $0x10] sm:$0xff]
        %v2435 = vld [vmem:[#allocation2 + $0x18] sm:$0xff]
        %v2436 = vld [vmem:[#allocation8] sm:$0xff]
        %v2437 = vld [vmem:[#allocation8 + $0x8] sm:$0xff]
        %v2438 = vld [vmem:[#allocation8 + $0x10] sm:$0xff]
        %v2439 = vld [vmem:[#allocation8 + $0x18] sm:$0xff]
        %v2440 = vld [vmem:[#allocation8 + $0x20] sm:$0xff]
        %v2441 = vld [vmem:[#allocation8 + $0x28] sm:$0xff]
        %v2442 = vld [vmem:[#allocation8 + $0x30] sm:$0xff]
        %v2443 = vld [vmem:[#allocation8 + $0x38] sm:$0xff]
        %v2444 = vld [vmem:[#allocation8 + $0x40] sm:$0xff]
        %v2445 = vld [vmem:[#allocation8 + $0x48] sm:$0xff]
        %v2446 = vld [vmem:[#allocation8 + $0x50] sm:$0xff]
        %v2447 = vld [vmem:[#allocation8 + $0x58] sm:$0xff]
        %v2448 = vld [vmem:[#allocation8 + $0x60] sm:$0xff]
        %v2449 = vld [vmem:[#allocation8 + $0x68] sm:$0xff]
        %v2450 = vld [vmem:[#allocation8 + $0x70] sm:$0xff]
        %v2451 = vld [vmem:[#allocation8 + $0x78] sm:$0xff]
        %v2452 = vld [vmem:[%s4] sm:$0x1]
        %v2454 = vlaneseq
        %v2455 = vshrl.u32 %v2454, 7
        %v2456 = vsub.s32 0, %v2455
        %v2457 = vrot.slane %v2452, %v2456
        %2459 = vmatprep.subr.mxu0 0.0
        %2460 = vmatpush1.msra.mxu0 %v2451
        %2461 = vmatprep.subr.mxu0 0.0
        %2462 = vmatpush1.msra.mxu0 %v2450
        %2463 = vmatprep.subr.mxu0 0.0
        %2464 = vmatpush1.msra.mxu0 %v2449
        %2465 = vmatprep.subr.mxu0 0.0
        %2466 = vmatpush1.msra.mxu0 %v2448
        %2467 = vmatprep.subr.mxu0 0.0
        %2468 = vmatpush1.msra.mxu0 %v2447
        %2469 = vmatprep.subr.mxu0 0.0
        %2470 = vmatpush1.msra.mxu0 %v2446
        %2471 = vmatprep.subr.mxu0 0.0
        %2472 = vmatpush1.msra.mxu0 %v2445
        %2473 = vmatprep.subr.mxu0 0.0
        %2474 = vmatpush1.msra.mxu0 %v2444
        %2475 = vmatprep.subr.mxu0 0.0
        %2476 = vmatpush1.msra.mxu0 %v2443
        %2477 = vmatprep.subr.mxu0 0.0
        %2478 = vmatpush1.msra.mxu0 %v2442
        %2479 = vmatprep.subr.mxu0 0.0
        %2480 = vmatpush1.msra.mxu0 %v2441
        %2481 = vmatprep.subr.mxu0 0.0
        %2482 = vmatpush1.msra.mxu0 %v2440
        %2483 = vmatprep.subr.mxu0 0.0
        %2484 = vmatpush1.msra.mxu0 %v2439
        %2485 = vmatprep.subr.mxu0 0.0
        %2486 = vmatpush1.msra.mxu0 %v2438
        %2487 = vmatprep.subr.mxu0 0.0
        %2488 = vmatpush1.msra.mxu0 %v2437
        %2489 = vmatprep.subr.mxu0 0.0
        %2490 = vmatpush1.msra.mxu0 %v2436
        %2491 = vmatprep.subr.mxu0 0.0
        %2492 = vmatpush2.msra.mxu0 0.0
        %2493 = vmatprep.subr.mxu0 0.0
        %2494 = vmatpush2.msra.mxu0 0.0
        %2495 = vmatprep.subr.mxu0 0.0
        %2496 = vmatpush2.msra.mxu0 0.0
        %2497 = vmatprep.subr.mxu0 0.0
        %2498 = vmatpush2.msra.mxu0 0.0
        %2499 = vmatprep.subr.mxu0 0.0
        %2500 = vmatpush2.msra.mxu0 0.0
        %2501 = vmatprep.subr.mxu0 0.0
        %2502 = vmatpush2.msra.mxu0 0.0
        %2503 = vmatprep.subr.mxu0 0.0
        %2504 = vmatpush2.msra.mxu0 0.0
        %2505 = vmatprep.subr.mxu0 0.0
        %2506 = vmatpush2.msra.mxu0 0.0
        %2507 = vmatprep.subr.mxu0 0.0
        %2508 = vmatpush2.msra.mxu0 0.0
        %2509 = vmatprep.subr.mxu0 0.0
        %2510 = vmatpush2.msra.mxu0 0.0
        %2511 = vmatprep.subr.mxu0 0.0
        %2512 = vmatpush2.msra.mxu0 0.0
        %2513 = vmatprep.subr.mxu0 0.0
        %2514 = vmatpush2.msra.mxu0 0.0
        %2515 = vmatprep.subr.mxu0 0.0
        %2516 = vmatpush2.msra.mxu0 0.0
        %2517 = vmatprep.subr.mxu0 0.0
        %2518 = vmatpush2.msra.mxu0 0.0
        %2519 = vmatprep.subr.mxu0 0.0
        %2520 = vmatpush2.msra.mxu0 0.0
        %2521 = vmatprep.subr.mxu0 0.0
        %2522 = vmatpush2.msra.mxu0 0.0
        %2523 = vmatprep.mubr.f32.mxu0 0.0
        %2524 = vmatmul.mubr.f32.gmra.mxu0 %v2432
        %v2525 = vpop.f32.mrf.mxu0
        %v2526 = vadd.f32 %v2457, %v2525
        %v2527 = vpop.f32.mrf.mxu0
        %2528 = vmatprep.mubr.f32.mxu0 0.0
        %2529 = vmatmul.mubr.f32.gmra.mxu0 %v2433
        %v2530 = vpop.f32.mrf.mxu0
        %v2531 = vadd.f32 %v2457, %v2530
        %v2532 = vpop.f32.mrf.mxu0
        %2533 = vmatprep.mubr.f32.mxu0 0.0
        %2534 = vmatmul.mubr.f32.gmra.mxu0 %v2434
        %v2535 = vpop.f32.mrf.mxu0
        %v2536 = vadd.f32 %v2457, %v2535
        %v2537 = vpop.f32.mrf.mxu0
        %2538 = vmatprep.mubr.f32.mxu0 0.0
        %2539 = vmatmul.mubr.f32.gmra.mxu0 %v2435
        %v2540 = vpop.f32.mrf.mxu0
        %v2541 = vadd.f32 %v2457, %v2540
        %v2542 = vpop.f32.mrf.mxu0
        %2543 = vdwg.mxu0
        %v2544 = vadd.f32 %v520, %v2526
        %v2545 = vadd.f32 %v521, %v2531
        %v2546 = vadd.f32 %v522, %v2536
        %v2547 = vadd.f32 %v523, %v2541
        %v2548 = vld [vmem:[%s5] sm:$0x1]
        %v2549 = vld [vmem:[%s6] sm:$0x1]
        %2550 = vadd.xlane.f32.xlu0 %v2544
        %v2551 = vpop.xlane.xlu0 %2550
        %2552 = vadd.xlane.f32.xlu0 %v2545
        %v2553 = vpop.xlane.xlu0 %2552
        %2554 = vadd.xlane.f32.xlu0 %v2546
        %v2555 = vpop.xlane.xlu0 %2554
        %2556 = vadd.xlane.f32.xlu0 %v2547
        %v2557 = vpop.xlane.xlu0 %2556
        %v2558 = vrcp.pop 128.0
        %v2559 = vmul.f32 %v2551, %v2558
        %v2560 = vmul.f32 %v2553, %v2558
        %v2561 = vmul.f32 %v2555, %v2558
        %v2562 = vmul.f32 %v2557, %v2558
        %v2563 = vsub.f32 %v2544, %v2559
        %v2564 = vsub.f32 %v2545, %v2560
        %v2565 = vsub.f32 %v2546, %v2561
        %v2566 = vsub.f32 %v2547, %v2562
        %v2567 = vmul.f32 %v2563, %v2563
        %v2568 = vmul.f32 %v2564, %v2564
        %v2569 = vmul.f32 %v2565, %v2565
        %v2570 = vmul.f32 %v2566, %v2566
        %2571 = vadd.xlane.f32.xlu0 %v2567
        %v2572 = vpop.xlane.xlu0 %2571
        %2573 = vadd.xlane.f32.xlu0 %v2568
        %v2574 = vpop.xlane.xlu0 %2573
        %2575 = vadd.xlane.f32.xlu0 %v2569
        %v2576 = vpop.xlane.xlu0 %2575
        %2577 = vadd.xlane.f32.xlu0 %v2570
        %v2578 = vpop.xlane.xlu0 %2577
        %v2579 = vmul.f32 %v2572, %v2558
        %v2580 = vmul.f32 %v2574, %v2558
        %v2581 = vmul.f32 %v2576, %v2558
        %v2582 = vmul.f32 %v2578, %v2558
        %v2583 = vadd.f32 %v2579, 1e-05
        %v2584 = vadd.f32 %v2580, 1e-05
        %v2585 = vadd.f32 %v2581, 1e-05
        %v2586 = vadd.f32 %v2582, 1e-05
        %v2587 = vrsqrt.pop %v2583
        %v2588 = vrsqrt.pop %v2584
        %v2589 = vrsqrt.pop %v2585
        %v2590 = vrsqrt.pop %v2586
        %v2591 = vmul.f32 %v2563, %v2587
        %v2592 = vmul.f32 %v2564, %v2588
        %v2593 = vmul.f32 %v2565, %v2589
        %v2594 = vmul.f32 %v2566, %v2590
        %v2596 = vlaneseq
        %v2597 = vshrl.u32 %v2596, 7
        %v2598 = vsub.s32 0, %v2597
        %v2599 = vrot.slane %v2548, %v2598
        %v2601 = vmul.f32 %v2591, %v2599
        %v2602 = vmul.f32 %v2592, %v2599
        %v2603 = vmul.f32 %v2593, %v2599
        %v2604 = vmul.f32 %v2594, %v2599
        %v2606 = vlaneseq
        %v2607 = vshrl.u32 %v2606, 7
        %v2608 = vsub.s32 0, %v2607
        %v2609 = vrot.slane %v2549, %v2608
        %v2611 = vadd.f32 %v2601, %v2609
        %v2612 = vadd.f32 %v2602, %v2609
        %v2613 = vadd.f32 %v2603, %v2609
        %v2614 = vadd.f32 %v2604, %v2609
        %v2615 = vld [vmem:[#allocation9] sm:$0xff]
        %v2616 = vld [vmem:[#allocation9 + $0x8] sm:$0xff]
        %v2617 = vld [vmem:[#allocation9 + $0x10] sm:$0xff]
        %v2618 = vld [vmem:[#allocation9 + $0x18] sm:$0xff]
        %v2619 = vld [vmem:[#allocation9 + $0x20] sm:$0xff]
        %v2620 = vld [vmem:[#allocation9 + $0x28] sm:$0xff]
        %v2621 = vld [vmem:[#allocation9 + $0x30] sm:$0xff]
        %v2622 = vld [vmem:[#allocation9 + $0x38] sm:$0xff]
        %v2623 = vld [vmem:[#allocation9 + $0x40] sm:$0xff]
        %v2624 = vld [vmem:[#allocation9 + $0x48] sm:$0xff]
        %v2625 = vld [vmem:[#allocation9 + $0x50] sm:$0xff]
        %v2626 = vld [vmem:[#allocation9 + $0x58] sm:$0xff]
        %v2627 = vld [vmem:[#allocation9 + $0x60] sm:$0xff]
        %v2628 = vld [vmem:[#allocation9 + $0x68] sm:$0xff]
        %v2629 = vld [vmem:[#allocation9 + $0x70] sm:$0xff]
        %v2630 = vld [vmem:[#allocation9 + $0x78] sm:$0xff]
        %v2631 = vld [vmem:[#allocation9 + $0x80] sm:$0xff]
        %v2632 = vld [vmem:[#allocation9 + $0x88] sm:$0xff]
        %v2633 = vld [vmem:[#allocation9 + $0x90] sm:$0xff]
        %v2634 = vld [vmem:[#allocation9 + $0x98] sm:$0xff]
        %v2635 = vld [vmem:[#allocation9 + $0xa0] sm:$0xff]
        %v2636 = vld [vmem:[#allocation9 + $0xa8] sm:$0xff]
        %v2637 = vld [vmem:[#allocation9 + $0xb0] sm:$0xff]
        %v2638 = vld [vmem:[#allocation9 + $0xb8] sm:$0xff]
        %v2639 = vld [vmem:[#allocation9 + $0xc0] sm:$0xff]
        %v2640 = vld [vmem:[#allocation9 + $0xc8] sm:$0xff]
        %v2641 = vld [vmem:[#allocation9 + $0xd0] sm:$0xff]
        %v2642 = vld [vmem:[#allocation9 + $0xd8] sm:$0xff]
        %v2643 = vld [vmem:[#allocation9 + $0xe0] sm:$0xff]
        %v2644 = vld [vmem:[#allocation9 + $0xe8] sm:$0xff]
        %v2645 = vld [vmem:[#allocation9 + $0xf0] sm:$0xff]
        %v2646 = vld [vmem:[#allocation9 + $0xf8] sm:$0xff]
        %v2647 = vld [vmem:[%s8] sm:$0x3]
        %v2649 = vlaneseq
        %v2650 = vshrl.u32 %v2649, 7
        %v2651 = vsub.s32 0, %v2650
        %v2652 = vrot.slane %v2647, %v2651
        %v2653 = vlaneseq
        %v2654 = vshrl.u32 %v2653, 7
        %v2655 = vsub.s32 1, %v2654
        %v2656 = vrot.slane %v2647, %v2655
        %2659 = vmatprep.subr.mxu0 %v2646
        %2660 = vmatpush1.msra.mxu0 %v2645
        %2661 = vmatprep.subr.mxu0 %v2644
        %2662 = vmatpush1.msra.mxu0 %v2643
        %2663 = vmatprep.subr.mxu0 %v2642
        %2664 = vmatpush1.msra.mxu0 %v2641
        %2665 = vmatprep.subr.mxu0 %v2640
        %2666 = vmatpush1.msra.mxu0 %v2639
        %2667 = vmatprep.subr.mxu0 %v2638
        %2668 = vmatpush1.msra.mxu0 %v2637
        %2669 = vmatprep.subr.mxu0 %v2636
        %2670 = vmatpush1.msra.mxu0 %v2635
        %2671 = vmatprep.subr.mxu0 %v2634
        %2672 = vmatpush1.msra.mxu0 %v2633
        %2673 = vmatprep.subr.mxu0 %v2632
        %2674 = vmatpush1.msra.mxu0 %v2631
        %2675 = vmatprep.subr.mxu0 %v2630
        %2676 = vmatpush1.msra.mxu0 %v2629
        %2677 = vmatprep.subr.mxu0 %v2628
        %2678 = vmatpush1.msra.mxu0 %v2627
        %2679 = vmatprep.subr.mxu0 %v2626
        %2680 = vmatpush1.msra.mxu0 %v2625
        %2681 = vmatprep.subr.mxu0 %v2624
        %2682 = vmatpush1.msra.mxu0 %v2623
        %2683 = vmatprep.subr.mxu0 %v2622
        %2684 = vmatpush1.msra.mxu0 %v2621
        %2685 = vmatprep.subr.mxu0 %v2620
        %2686 = vmatpush1.msra.mxu0 %v2619
        %2687 = vmatprep.subr.mxu0 %v2618
        %2688 = vmatpush1.msra.mxu0 %v2617
        %2689 = vmatprep.subr.mxu0 %v2616
        %2690 = vmatpush1.msra.mxu0 %v2615
        %2691 = vmatprep.subr.mxu0 0.0
        %2692 = vmatpush2.msra.mxu0 0.0
        %2693 = vmatprep.subr.mxu0 0.0
        %2694 = vmatpush2.msra.mxu0 0.0
        %2695 = vmatprep.subr.mxu0 0.0
        %2696 = vmatpush2.msra.mxu0 0.0
        %2697 = vmatprep.subr.mxu0 0.0
        %2698 = vmatpush2.msra.mxu0 0.0
        %2699 = vmatprep.subr.mxu0 0.0
        %2700 = vmatpush2.msra.mxu0 0.0
        %2701 = vmatprep.subr.mxu0 0.0
        %2702 = vmatpush2.msra.mxu0 0.0
        %2703 = vmatprep.subr.mxu0 0.0
        %2704 = vmatpush2.msra.mxu0 0.0
        %2705 = vmatprep.subr.mxu0 0.0
        %2706 = vmatpush2.msra.mxu0 0.0
        %2707 = vmatprep.subr.mxu0 0.0
        %2708 = vmatpush2.msra.mxu0 0.0
        %2709 = vmatprep.subr.mxu0 0.0
        %2710 = vmatpush2.msra.mxu0 0.0
        %2711 = vmatprep.subr.mxu0 0.0
        %2712 = vmatpush2.msra.mxu0 0.0
        %2713 = vmatprep.subr.mxu0 0.0
        %2714 = vmatpush2.msra.mxu0 0.0
        %2715 = vmatprep.subr.mxu0 0.0
        %2716 = vmatpush2.msra.mxu0 0.0
        %2717 = vmatprep.subr.mxu0 0.0
        %2718 = vmatpush2.msra.mxu0 0.0
        %2719 = vmatprep.subr.mxu0 0.0
        %2720 = vmatpush2.msra.mxu0 0.0
        %2721 = vmatprep.subr.mxu0 0.0
        %2722 = vmatpush2.msra.mxu0 0.0
        %2723 = vmatprep.mubr.f32.mxu0 0.0
        %2724 = vmatmul.mubr.f32.gmra.mxu0 %v2611
        %v2725 = vpop.f32.mrf.mxu0
        %v2726 = vadd.f32 %v2652, %v2725
        %v2727 = vpop.f32.mrf.mxu0
        %v2728 = vadd.f32 %v2656, %v2727
        %2729 = vmatprep.mubr.f32.mxu0 0.0
        %2730 = vmatmul.mubr.f32.gmra.mxu0 %v2612
        %v2731 = vpop.f32.mrf.mxu0
        %v2732 = vadd.f32 %v2652, %v2731
        %v2733 = vpop.f32.mrf.mxu0
        %v2734 = vadd.f32 %v2656, %v2733
        %2735 = vmatprep.mubr.f32.mxu0 0.0
        %2736 = vmatmul.mubr.f32.gmra.mxu0 %v2613
        %v2737 = vpop.f32.mrf.mxu0
        %v2738 = vadd.f32 %v2652, %v2737
        %v2739 = vpop.f32.mrf.mxu0
        %v2740 = vadd.f32 %v2656, %v2739
        %2741 = vmatprep.mubr.f32.mxu0 0.0
        %2742 = vmatmul.mubr.f32.gmra.mxu0 %v2614
        %v2743 = vpop.f32.mrf.mxu0
        %v2744 = vadd.f32 %v2652, %v2743
        %v2745 = vpop.f32.mrf.mxu0
        %v2746 = vadd.f32 %v2656, %v2745
        %2747 = vdwg.mxu0
        %v2748 = vmax.f32 %v2726, 0.0
        %v2749 = vmax.f32 %v2728, 0.0
        %v2750 = vmax.f32 %v2732, 0.0
        %v2751 = vmax.f32 %v2734, 0.0
        %v2752 = vmax.f32 %v2738, 0.0
        %v2753 = vmax.f32 %v2740, 0.0
        %v2754 = vmax.f32 %v2744, 0.0
        %v2755 = vmax.f32 %v2746, 0.0
        %v2756 = vld [vmem:[#allocation11] sm:$0xff]
        %v2757 = vld [vmem:[#allocation11 + $0x8] sm:$0xff]
        %v2758 = vld [vmem:[#allocation11 + $0x10] sm:$0xff]
        %v2759 = vld [vmem:[#allocation11 + $0x18] sm:$0xff]
        %v2760 = vld [vmem:[#allocation11 + $0x20] sm:$0xff]
        %v2761 = vld [vmem:[#allocation11 + $0x28] sm:$0xff]
        %v2762 = vld [vmem:[#allocation11 + $0x30] sm:$0xff]
        %v2763 = vld [vmem:[#allocation11 + $0x38] sm:$0xff]
        %v2764 = vld [vmem:[#allocation11 + $0x40] sm:$0xff]
        %v2765 = vld [vmem:[#allocation11 + $0x48] sm:$0xff]
        %v2766 = vld [vmem:[#allocation11 + $0x50] sm:$0xff]
        %v2767 = vld [vmem:[#allocation11 + $0x58] sm:$0xff]
        %v2768 = vld [vmem:[#allocation11 + $0x60] sm:$0xff]
        %v2769 = vld [vmem:[#allocation11 + $0x68] sm:$0xff]
        %v2770 = vld [vmem:[#allocation11 + $0x70] sm:$0xff]
        %v2771 = vld [vmem:[#allocation11 + $0x78] sm:$0xff]
        %v2772 = vld [vmem:[#allocation11 + $0x80] sm:$0xff]
        %v2773 = vld [vmem:[#allocation11 + $0x88] sm:$0xff]
        %v2774 = vld [vmem:[#allocation11 + $0x90] sm:$0xff]
        %v2775 = vld [vmem:[#allocation11 + $0x98] sm:$0xff]
        %v2776 = vld [vmem:[#allocation11 + $0xa0] sm:$0xff]
        %v2777 = vld [vmem:[#allocation11 + $0xa8] sm:$0xff]
        %v2778 = vld [vmem:[#allocation11 + $0xb0] sm:$0xff]
        %v2779 = vld [vmem:[#allocation11 + $0xb8] sm:$0xff]
        %v2780 = vld [vmem:[#allocation11 + $0xc0] sm:$0xff]
        %v2781 = vld [vmem:[#allocation11 + $0xc8] sm:$0xff]
        %v2782 = vld [vmem:[#allocation11 + $0xd0] sm:$0xff]
        %v2783 = vld [vmem:[#allocation11 + $0xd8] sm:$0xff]
        %v2784 = vld [vmem:[#allocation11 + $0xe0] sm:$0xff]
        %v2785 = vld [vmem:[#allocation11 + $0xe8] sm:$0xff]
        %v2786 = vld [vmem:[#allocation11 + $0xf0] sm:$0xff]
        %v2787 = vld [vmem:[#allocation11 + $0xf8] sm:$0xff]
        %v2788 = vld [vmem:[%s10] sm:$0x1]
        %v2790 = vlaneseq
        %v2791 = vshrl.u32 %v2790, 7
        %v2792 = vsub.s32 0, %v2791
        %v2793 = vrot.slane %v2788, %v2792
        %2795 = vmatprep.subr.mxu0 0.0
        %2796 = vmatpush1.msra.mxu0 %v2771
        %2797 = vmatprep.subr.mxu0 0.0
        %2798 = vmatpush1.msra.mxu0 %v2770
        %2799 = vmatprep.subr.mxu0 0.0
        %2800 = vmatpush1.msra.mxu0 %v2769
        %2801 = vmatprep.subr.mxu0 0.0
        %2802 = vmatpush1.msra.mxu0 %v2768
        %2803 = vmatprep.subr.mxu0 0.0
        %2804 = vmatpush1.msra.mxu0 %v2767
        %2805 = vmatprep.subr.mxu0 0.0
        %2806 = vmatpush1.msra.mxu0 %v2766
        %2807 = vmatprep.subr.mxu0 0.0
        %2808 = vmatpush1.msra.mxu0 %v2765
        %2809 = vmatprep.subr.mxu0 0.0
        %2810 = vmatpush1.msra.mxu0 %v2764
        %2811 = vmatprep.subr.mxu0 0.0
        %2812 = vmatpush1.msra.mxu0 %v2763
        %2813 = vmatprep.subr.mxu0 0.0
        %2814 = vmatpush1.msra.mxu0 %v2762
        %2815 = vmatprep.subr.mxu0 0.0
        %2816 = vmatpush1.msra.mxu0 %v2761
        %2817 = vmatprep.subr.mxu0 0.0
        %2818 = vmatpush1.msra.mxu0 %v2760
        %2819 = vmatprep.subr.mxu0 0.0
        %2820 = vmatpush1.msra.mxu0 %v2759
        %2821 = vmatprep.subr.mxu0 0.0
        %2822 = vmatpush1.msra.mxu0 %v2758
        %2823 = vmatprep.subr.mxu0 0.0
        %2824 = vmatpush1.msra.mxu0 %v2757
        %2825 = vmatprep.subr.mxu0 0.0
        %2826 = vmatpush1.msra.mxu0 %v2756
        %2827 = vmatprep.subr.mxu0 0.0
        %2828 = vmatpush2.msra.mxu0 %v2787
        %2829 = vmatprep.subr.mxu0 0.0
        %2830 = vmatpush2.msra.mxu0 %v2786
        %2831 = vmatprep.subr.mxu0 0.0
        %2832 = vmatpush2.msra.mxu0 %v2785
        %2833 = vmatprep.subr.mxu0 0.0
        %2834 = vmatpush2.msra.mxu0 %v2784
        %2835 = vmatprep.subr.mxu0 0.0
        %2836 = vmatpush2.msra.mxu0 %v2783
        %2837 = vmatprep.subr.mxu0 0.0
        %2838 = vmatpush2.msra.mxu0 %v2782
        %2839 = vmatprep.subr.mxu0 0.0
        %2840 = vmatpush2.msra.mxu0 %v2781
        %2841 = vmatprep.subr.mxu0 0.0
        %2842 = vmatpush2.msra.mxu0 %v2780
        %2843 = vmatprep.subr.mxu0 0.0
        %2844 = vmatpush2.msra.mxu0 %v2779
        %2845 = vmatprep.subr.mxu0 0.0
        %2846 = vmatpush2.msra.mxu0 %v2778
        %2847 = vmatprep.subr.mxu0 0.0
        %2848 = vmatpush2.msra.mxu0 %v2777
        %2849 = vmatprep.subr.mxu0 0.0
        %2850 = vmatpush2.msra.mxu0 %v2776
        %2851 = vmatprep.subr.mxu0 0.0
        %2852 = vmatpush2.msra.mxu0 %v2775
        %2853 = vmatprep.subr.mxu0 0.0
        %2854 = vmatpush2.msra.mxu0 %v2774
        %2855 = vmatprep.subr.mxu0 0.0
        %2856 = vmatpush2.msra.mxu0 %v2773
        %2857 = vmatprep.subr.mxu0 0.0
        %2858 = vmatpush2.msra.mxu0 %v2772
        %2859 = vmatprep.mubr.f32.mxu0 %v2749
        %2860 = vmatmul.mubr.f32.gmra.mxu0 %v2748
        %v2861 = vpop.f32.mrf.mxu0
        %v2862 = vadd.f32 %v2793, %v2861
        %v2863 = vpop.f32.mrf.mxu0
        %2864 = vmatprep.mubr.f32.mxu0 %v2751
        %2865 = vmatmul.mubr.f32.gmra.mxu0 %v2750
        %v2866 = vpop.f32.mrf.mxu0
        %v2867 = vadd.f32 %v2793, %v2866
        %v2868 = vpop.f32.mrf.mxu0
        %2869 = vmatprep.mubr.f32.mxu0 %v2753
        %2870 = vmatmul.mubr.f32.gmra.mxu0 %v2752
        %v2871 = vpop.f32.mrf.mxu0
        %v2872 = vadd.f32 %v2793, %v2871
        %v2873 = vpop.f32.mrf.mxu0
        %2874 = vmatprep.mubr.f32.mxu0 %v2755
        %2875 = vmatmul.mubr.f32.gmra.mxu0 %v2754
        %v2876 = vpop.f32.mrf.mxu0
        %v2877 = vadd.f32 %v2793, %v2876
        %v2878 = vpop.f32.mrf.mxu0
        %2879 = vdwg.mxu0
        %v2880 = vadd.f32 %v2611, %v2862
        %v2881 = vadd.f32 %v2612, %v2867
        %v2882 = vadd.f32 %v2613, %v2872
        %v2883 = vadd.f32 %v2614, %v2877
        %v2884 = vld [vmem:[%s11] sm:$0x1]
        %v2885 = vld [vmem:[%s12] sm:$0x1]
        %2886 = vadd.xlane.f32.xlu0 %v2880
        %v2887 = vpop.xlane.xlu0 %2886
        %2888 = vadd.xlane.f32.xlu0 %v2881
        %v2889 = vpop.xlane.xlu0 %2888
        %2890 = vadd.xlane.f32.xlu0 %v2882
        %v2891 = vpop.xlane.xlu0 %2890
        %2892 = vadd.xlane.f32.xlu0 %v2883
        %v2893 = vpop.xlane.xlu0 %2892
        %v2894 = vmul.f32 %v2887, %v2558
        %v2895 = vmul.f32 %v2889, %v2558
        %v2896 = vmul.f32 %v2891, %v2558
        %v2897 = vmul.f32 %v2893, %v2558
        %v2898 = vsub.f32 %v2880, %v2894
        %v2899 = vsub.f32 %v2881, %v2895
        %v2900 = vsub.f32 %v2882, %v2896
        %v2901 = vsub.f32 %v2883, %v2897
        %v2902 = vmul.f32 %v2898, %v2898
        %v2903 = vmul.f32 %v2899, %v2899
        %v2904 = vmul.f32 %v2900, %v2900
        %v2905 = vmul.f32 %v2901, %v2901
        %2906 = vadd.xlane.f32.xlu0 %v2902
        %v2907 = vpop.xlane.xlu0 %2906
        %2908 = vadd.xlane.f32.xlu0 %v2903
        %v2909 = vpop.xlane.xlu0 %2908
        %2910 = vadd.xlane.f32.xlu0 %v2904
        %v2911 = vpop.xlane.xlu0 %2910
        %2912 = vadd.xlane.f32.xlu0 %v2905
        %v2913 = vpop.xlane.xlu0 %2912
        %v2914 = vmul.f32 %v2907, %v2558
        %v2915 = vmul.f32 %v2909, %v2558
        %v2916 = vmul.f32 %v2911, %v2558
        %v2917 = vmul.f32 %v2913, %v2558
        %v2918 = vadd.f32 %v2914, 1e-05
        %v2919 = vadd.f32 %v2915, 1e-05
        %v2920 = vadd.f32 %v2916, 1e-05
        %v2921 = vadd.f32 %v2917, 1e-05
        %v2922 = vrsqrt.pop %v2918
        %v2923 = vrsqrt.pop %v2919
        %v2924 = vrsqrt.pop %v2920
        %v2925 = vrsqrt.pop %v2921
        %v2926 = vmul.f32 %v2898, %v2922
        %v2927 = vmul.f32 %v2899, %v2923
        %v2928 = vmul.f32 %v2900, %v2924
        %v2929 = vmul.f32 %v2901, %v2925
        %v2931 = vlaneseq
        %v2932 = vshrl.u32 %v2931, 7
        %v2933 = vsub.s32 0, %v2932
        %v2934 = vrot.slane %v2884, %v2933
        %v2936 = vmul.f32 %v2926, %v2934
        %v2937 = vmul.f32 %v2927, %v2934
        %v2938 = vmul.f32 %v2928, %v2934
        %v2939 = vmul.f32 %v2929, %v2934
        %v2941 = vlaneseq
        %v2942 = vshrl.u32 %v2941, 7
        %v2943 = vsub.s32 0, %v2942
        %v2944 = vrot.slane %v2885, %v2943
        %v2946 = vadd.f32 %v2936, %v2944
        %v2947 = vadd.f32 %v2937, %v2944
        %v2948 = vadd.f32 %v2938, %v2944
        %v2949 = vadd.f32 %v2939, %v2944
        %2950 = vst [vmem:[%s517] sm:$0xff] %v2946
        %2951 = vst [vmem:[%s517 + $0x8] sm:$0xff] %v2947
        %2952 = vst [vmem:[%s517 + $0x10] sm:$0xff] %v2948
        %2953 = vst [vmem:[%s517 + $0x18] sm:$0xff] %v2949
        %s2954 = sand.u32 %s318, 1
        %s2955 = scalar_lea.sflag [#allocation5], %s2954
        %s2956 = sand.u32 %s318, 1
        %s2957 = smul.addr %s2956, 32
        %s2958 = scalar_lea.vmem [#allocation12], %s2957
        // Predicated region
        $region93: #{tpu_custom_call.1} parent=71 // pred_check
          %p2959 = pneg %p328
        $region94: #{tpu_custom_call.1} parent=71 // pred_check_branch
          %2961 = sbr.rel (%p2959) target = $region96
        $region95: #{tpu_custom_call.1} parent=71 // pred_region
          %s2962 = smul.u32 2, %s32
          %s2964 = ssub.s32 512, 512
          %2965 = vsyncadd %s2955, %s2964
          %s2966 = smul.addr %s2962, 2
          %s2967 = smul.addr %s2966, 128
          %s2968 = scalar_lea.hbm %s13, %s2967
          %s2969 = sshll.u32 %s2958, 4
          %s2970 = int_to_ptr.vmem [resolvable:$true] %s2969
          %2975 = dma.vmem_to_hbm [thread:$0]  %s2970, 512, %s2968, %s2955, 128, 128, 8
        $region96: #{tpu_custom_call.1} parent=71 // pred_fallthru
          _
      $region72: #{tpu_custom_call.1} parent=5 // pred_fallthru
        _
      %p2976 = scmp.le.s32.totalorder 2, %s27
      // Predicated region
      $region97: #{tpu_custom_call.1} parent=5 // pred_check
        %p2977 = pneg %p2976
      $region98: #{tpu_custom_call.1} parent=5 // pred_check_branch
        %2979 = sbr.rel (%p2977) target = $region100
      $region99: #{tpu_custom_call.1} parent=5 // pred_region
        %s2980 = ssub.s32 %s27, 2
        // Predicated region
        $region101: #{tpu_custom_call.1} parent=99 // pred_check
          %p2981 = pneg %p334
        $region102: #{tpu_custom_call.1} parent=99 // pred_check_branch
          %2983 = sbr.rel (%p2981) target = $region104
        $region103: #{tpu_custom_call.1} parent=99 // pred_region
          %s2984 = sand.u32 %s319, 1
          %s2985 = scalar_lea.sflag [#allocation5], %s2984
          %s2986 = sand.u32 %s319, 1
          %s2987 = smul.addr %s2986, 32
          %s2988 = scalar_lea.vmem [#allocation12], %s2987
          %2989 = dma.done %s2985, 512
        $region104: #{tpu_custom_call.1} parent=99 // pred_fallthru
          _
      $region100: #{tpu_custom_call.1} parent=5 // pred_fallthru
        _
    $region6: #{tpu_custom_call.1} parent=1 // loop_footer
      %s31 = sadd.s32 1, %s27
    $region7: #{tpu_custom_call.1} parent=1 // loop_footer_branch
      %26 = sbr.rel target = $region3
    $region8: #{tpu_custom_call.1} parent=1 // loop_exit
      _
    %2990 = vsyncpa [#allocation4], 1
    %s2991 = scalar_lea.sflag [#allocation4], 1
    %2992 = vsyncpa %s2991, 1
    %2993 = vsyncpa [#allocation7], 1
    %2994 = vsyncpa [#allocation10], 1
    %2995 = vsyncpa [#allocation5], 1
    %s2996 = scalar_lea.sflag [#allocation5], 1
    %2997 = vsyncpa %s2996, 1

</llo_original>
